<compile_context>
chip_gen: v5e
topology: v5e:2x2
jax: 0.10.0
libtpu: 0.0.40
codegen_flags: <defaults>
</compile_context>

<pallas_src>
import functools

import jax
import jax.numpy as jnp
from jax.experimental import pallas as pl
from jax.experimental.pallas import tpu as pltpu


def _layernorm(h, gamma, beta, eps=1e-5):
    mean = jnp.mean(h, axis=-1, keepdims=True)
    var = jnp.mean((h - mean) ** 2, axis=-1, keepdims=True)   # biased, like torch LayerNorm
    return (h - mean) * jax.lax.rsqrt(var + eps) * gamma + beta


# --------------------------------------------------------------------------------------------
# Capability probes (cached, tiny compiles). They replace the old try/except fallback so that
# feature rejection is detected up front (and numerically verified) instead of surfacing
# inside a caller's jit trace.
# --------------------------------------------------------------------------------------------
@functools.lru_cache(None)
def _single_buffer_ok():
    """Is pl.Buffered(1) (single-buffered pipeline operand) accepted and correct?"""
    if not hasattr(pl, "Buffered"):
        return False
    try:
        def k(x_ref, o_ref):
            o_ref[...] = x_ref[...] + 1.0

        f = pl.pallas_call(
            k,
            out_shape=jax.ShapeDtypeStruct((16, 128), jnp.float32),
            grid=(2,),
            in_specs=[pl.BlockSpec((8, 128), lambda i: (i, 0),
                                   pipeline_mode=pl.Buffered(1))],
            out_specs=pl.BlockSpec((8, 128), lambda i: (i, 0)),
        )
        x = jnp.arange(16 * 128, dtype=jnp.float32).reshape(16, 128)
        y = jax.block_until_ready(f(x))
        return bool(jnp.allclose(y, x + 1.0))
    except Exception:
        return False


@functools.lru_cache(None)
def _fused_head_relayout_ok():
    """Is the single-relayout head split/merge (reshape + leading transpose) supported?"""
    H, S, D = 4, 16, 32
    E = H * D
    try:
        def k(x_ref, split_ref, merged_ref):
            x3 = x_ref[...].reshape(S, H, D).transpose(1, 0, 2)            # split -> (H, S, D)
            split_ref[...] = x3
            m = jnp.mean(x3, axis=-1, keepdims=True)                       # head-major compute
            merged_ref[...] = (x3 - m).transpose(1, 0, 2).reshape(S, E)    # merge -> (S, E)

        f = pl.pallas_call(
            k,
            out_shape=(jax.ShapeDtypeStruct((H, S, D), jnp.float32),
                       jax.ShapeDtypeStruct((S, E), jnp.float32)),
        )
        x = jnp.arange(S * E, dtype=jnp.float32).reshape(S, E) / (S * E)
        split, merged = jax.block_until_ready(f(x))
        x3 = jnp.transpose(x.reshape(S, H, D), (1, 0, 2))
        want = jnp.transpose(x3 - jnp.mean(x3, axis=-1, keepdims=True), (1, 0, 2)).reshape(S, E)
        return bool(jnp.allclose(split, x3, atol=1e-6) and jnp.allclose(merged, want, atol=1e-6))
    except Exception:
        return False


def _vmem_limit_bytes():
    # Generation-aware VMEM budget: ~85% of physical (≈108 MiB on v5e/v6e, ≈54 MiB on v7x).
    cap = 128 * 1024 * 1024
    try:
        info = pltpu.get_tpu_info()
        cap = int(getattr(info, "vmem_capacity_bytes", cap)) or cap
    except Exception:
        pass
    return int(cap * 0.85)


def _pick_block_q(S, num_heads, vmem_limit):
    # Bigger query tiles amortize the ~0.35 us per-grid-step overhead (v5e/v6e have the VMEM
    # headroom); gate on the (H, block_q, S) f32 softmax temporaries so v7x's 64 MiB holds.
    budget = vmem_limit // 3

    def temps(c):                       # f32 scores + f32 exp + compute-dtype copy, roughly
        return 12 * num_heads * c * S

    block_q = S
    if temps(block_q) > budget:
        for c in (512, 256, 128, 64, 32, 16, 8):
            if c <= S and S % c == 0:
                block_q = c
                if temps(c) <= budget:
                    break
    return block_q


# --------------------------------------------------------------------------------------------
# Kernel
# --------------------------------------------------------------------------------------------
def transformer_block_kernel(
    x_ref,                                            # (1, S, E) full sequence, f32
    wq_ref, wkv_ref, wo_ref, bo_ref,                  # attention weights (pre-transposed)
    g1_ref, be1_ref,                                  # LayerNorm 1
    w1_ref, bf1_ref, w2_ref, bf2_ref,                 # FFN weights (pre-transposed)
    g2_ref, be2_ref,                                  # LayerNorm 2
    o_ref,                                            # (1, block_q, E) output block
    k_scr, v_scr,                                     # head-major K/V scratch (H, S, Dh)
    *, num_heads, block_q, compute_dtype, approx_recip, fused_head_layout,
):
    H = num_heads
    S, E = x_ref.shape[1], x_ref.shape[2]
    Dh = E // H
    Sq = block_q
    cdt = compute_dtype
    f32 = jnp.float32

    def split_heads(x2d, rows):                       # (rows, E) -> (H, rows, Dh)
        if fused_head_layout:
            return x2d.reshape(rows, H, Dh).transpose(1, 0, 2)      # one relayout
        return jnp.stack([x2d[:, h * Dh:(h + 1) * Dh] for h in range(H)], axis=0)

    def merge_heads(x3d, rows):                       # (H, rows, Dh) -> (rows, E)
        if fused_head_layout:
            return x3d.transpose(1, 0, 2).reshape(rows, E)          # one relayout
        return jnp.concatenate([x3d[h] for h in range(H)], axis=-1)

    # ---- K/V for the whole sequence of this batch element: computed once per batch ----------
    @pl.when(pl.program_id(1) == 0)
    def _():
        xf = x_ref[0].astype(cdt)                                               # (S, E)
        kv = jnp.dot(xf, wkv_ref[...], preferred_element_type=f32).astype(cdt)  # (S, 2E) K|V
        k_scr[...] = split_heads(kv[:, :E], S)                                  # (H, S, Dh)
        v_scr[...] = split_heads(kv[:, E:], S)

    # ---- query block sliced from the resident sequence slab (no duplicate x input) ----------
    q_start = pl.multiple_of(pl.program_id(1) * Sq, Sq)
    xq_f32 = x_ref[0, pl.ds(q_start, Sq), :]                                    # (Sq, E) f32
    xq = xq_f32.astype(cdt)

    # ---- Q projection for this block, head-major ---------------------------------------------
    q2 = jnp.dot(xq, wq_ref[...], preferred_element_type=f32).astype(cdt)       # (Sq, E)
    q3 = split_heads(q2, Sq)                                                    # (H, Sq, Dh)

    k3 = k_scr[...]
    v3 = v_scr[...]

    # ---- attention (NO 1/sqrt(Dh) scaling: matches the reference) ----------------------------
    scores = jnp.einsum("hqd,hkd->hqk", q3, k3, preferred_element_type=f32)     # (H, Sq, S)
    scores = scores - jnp.max(scores, axis=-1, keepdims=True)
    p = jnp.exp(scores)
    denom = jnp.sum(p, axis=-1, keepdims=True)                                  # (H, Sq, 1)
    # deferred softmax normalization: scale the (H, Sq, Dh) PV result instead of the
    # (H, Sq, S) probabilities -- mathematically identical, far less VALU / store traffic.
    attn3 = jnp.einsum("hqk,hkd->hqd", p.astype(cdt), v3,
                       preferred_element_type=f32)                              # (H, Sq, Dh)
    inv = pl.reciprocal(denom, approx=True) if approx_recip else 1.0 / denom
    attn3 = attn3 * inv

    # merge heads back onto the lane axis, then output projection
    attn = merge_heads(attn3, Sq)                                               # (Sq, E) f32
    attn_out = jnp.dot(attn.astype(cdt), wo_ref[...],
                       preferred_element_type=f32) + bo_ref[...]

    # ---- residual + LayerNorm 1 (f32) ---------------------------------------------------------
    n1 = _layernorm(attn_out + xq_f32, g1_ref[...], be1_ref[...])

    # ---- feed-forward: Linear -> ReLU -> Linear -----------------------------------------------
    # TODO(synk): v7x — tile w1/w2 over ff_dim with a P3 accumulator when E*F is large.
    h1 = jnp.dot(n1.astype(cdt), w1_ref[...], preferred_element_type=f32) + bf1_ref[...]
    h1 = jnp.maximum(h1, 0.0).astype(cdt)         # keep (Sq, F) live tensor in compute dtype
    h2 = jnp.dot(h1, w2_ref[...], preferred_element_type=f32) + bf2_ref[...]

    # ---- residual with ORIGINAL x (matches reference) + LayerNorm 2; dropout p=0 -> identity --
    o_ref[0] = _layernorm(h2 + xq_f32, g2_ref[...], be2_ref[...]).astype(o_ref.dtype)


# --------------------------------------------------------------------------------------------
# Wrapper
# --------------------------------------------------------------------------------------------
def transformer_block(x, params, num_heads, *, block_q=None, compute_dtype=jnp.bfloat16):
    B, S, E = x.shape
    assert E % num_heads == 0
    cdt = compute_dtype
    f32 = jnp.float32
    vmem_limit = _vmem_limit_bytes()

    if block_q is None:
        block_q = _pick_block_q(S, num_heads, vmem_limit)
    assert S % block_q == 0
    if block_q != S:
        assert block_q % 8 == 0, "query tile must be a multiple of 8 sublanes"
    num_q = S // block_q

    # Layout plumbing in the wrapper (NOT the kernel): pre-transpose torch (out,in) weights to
    # (in,out), fuse K/V into one (E, 2E) weight, cast matmul weights to the MXU compute dtype.
    wq_t = params["w_q"].T.astype(cdt)                                               # (E, E)
    wkv_t = jnp.concatenate([params["w_k"].T, params["w_v"].T], axis=1).astype(cdt)  # (E, 2E)
    wo_t = params["w_out"].T.astype(cdt)                                             # (E, E)
    w1_t = params["w_ff1"].T.astype(cdt)                                             # (E, F)
    w2_t = params["w_ff2"].T.astype(cdt)                                             # (F, E)
    b_out = params["b_out"].astype(f32)
    g1, be1 = params["g1"].astype(f32), params["be1"].astype(f32)
    b_ff1 = params["b_ff1"].astype(f32)
    b_ff2 = params["b_ff2"].astype(f32)
    g2, be2 = params["g2"].astype(f32), params["be2"].astype(f32)
    weights = (wq_t, wkv_t, wo_t, b_out, g1, be1, w1_t, b_ff1, w2_t, b_ff2, g2, be2)

    single_buffer = _single_buffer_ok()

    def const_spec(shape):
        nd = len(shape)
        idx = lambda b, q, _nd=nd: (0,) * _nd
        if single_buffer:  # weights never change across grid steps -> one pipeline buffer
            return pl.BlockSpec(shape, idx, pipeline_mode=pl.Buffered(1))
        return pl.BlockSpec(shape, idx)

    # Full-sequence slab: its block index only changes with the batch axis, so a single
    # pipeline buffer suffices (saves a second f32 (S, E) VMEM window).
    if single_buffer:
        x_spec = pl.BlockSpec((1, S, E), lambda b, q: (b, 0, 0), pipeline_mode=pl.Buffered(1))
    else:
        x_spec = pl.BlockSpec((1, S, E), lambda b, q: (b, 0, 0))

    kernel = functools.partial(
        transformer_block_kernel,
        num_heads=num_heads,
        block_q=block_q,
        compute_dtype=cdt,
        approx_recip=(jnp.dtype(cdt) != jnp.dtype(jnp.float32)),   # exact divide on f32 path
        fused_head_layout=_fused_head_relayout_ok(),
    )

    in_specs = [x_spec] + [const_spec(w.shape) for w in weights]

    return pl.pallas_call(
        kernel,
        out_shape=jax.ShapeDtypeStruct((B, S, E), jnp.float32),
        grid_spec=pltpu.PrefetchScalarGridSpec(
            num_scalar_prefetch=0,
            grid=(B, num_q),
            in_specs=in_specs,
            out_specs=pl.BlockSpec((1, block_q, E), lambda b, q: (b, q, 0)),
            scratch_shapes=[
                pltpu.VMEM((num_heads, S, E // num_heads), cdt),   # K, head-major
                pltpu.VMEM((num_heads, S, E // num_heads), cdt),   # V, head-major
            ],
        ),
        compiler_params=pltpu.CompilerParams(
            # batch axis may shard across TensorCores; the q axis must stay in-order within a
            # batch element because K/V are cached at q == 0 (pl.when).
            dimension_semantics=("parallel", "arbitrary"),
            vmem_limit_bytes=vmem_limit,
        ),
    )(x, *weights)


def init_params(key, emb_dim, ff_dim):
    ks = jax.random.split(key, 8)
    scale_e = 1.0 / jnp.sqrt(emb_dim)
    scale_f = 1.0 / jnp.sqrt(ff_dim)
    return {
        # torch Linear weight layout: (out_features, in_features)
        "w_q": jax.random.uniform(ks[0], (emb_dim, emb_dim), jnp.float32, -scale_e, scale_e),
        "w_k": jax.random.uniform(ks[1], (emb_dim, emb_dim), jnp.float32, -scale_e, scale_e),
        "w_v": jax.random.uniform(ks[2], (emb_dim, emb_dim), jnp.float32, -scale_e, scale_e),
        "w_out": jax.random.uniform(ks[3], (emb_dim, emb_dim), jnp.float32, -scale_e, scale_e),
        "b_out": jax.random.uniform(ks[4], (1, emb_dim), jnp.float32, -scale_e, scale_e),
        "g1": jnp.ones((1, emb_dim), jnp.float32),
        "be1": jnp.zeros((1, emb_dim), jnp.float32),
        "w_ff1": jax.random.uniform(ks[5], (ff_dim, emb_dim), jnp.float32, -scale_e, scale_e),
        "b_ff1": jax.random.uniform(ks[6], (1, ff_dim), jnp.float32, -scale_e, scale_e),
        "w_ff2": jax.random.uniform(ks[7], (emb_dim, ff_dim), jnp.float32, -scale_f, scale_f),
        "b_ff2": jnp.zeros((1, emb_dim), jnp.float32),
        "g2": jnp.ones((1, emb_dim), jnp.float32),
        "be2": jnp.zeros((1, emb_dim), jnp.float32),
    }


def _reference(x, p, num_heads):
    # Pure-JAX f32 reference for sanity checking the kernel.
    B, S, E = x.shape
    Dh = E // num_heads
    q = x @ p["w_q"].T
    k = x @ p["w_k"].T
    v = x @ p["w_v"].T
    q = q.reshape(B, S, num_heads, Dh).transpose(0, 2, 1, 3)
    k = k.reshape(B, S, num_heads, Dh).transpose(0, 2, 1, 3)
    v = v.reshape(B, S, num_heads, Dh).transpose(0, 2, 1, 3)
    dot = jnp.einsum("bhqd,bhkd->bhqk", q, k)
    dot = jax.nn.softmax(dot, axis=-1)
    attn = jnp.einsum("bhqk,bhkd->bhqd", dot, v)
    attn = attn.transpose(0, 2, 1, 3).reshape(B, S, E)
    attn = attn @ p["w_out"].T + p["b_out"][0]

    def ln(h, g, b):
        m = jnp.mean(h, axis=-1, keepdims=True)
        var = jnp.mean((h - m) ** 2, axis=-1, keepdims=True)
        return (h - m) / jnp.sqrt(var + 1e-5) * g[0] + b[0]

    n1 = ln(attn + x, p["g1"], p["be1"])
    ff = jax.nn.relu(n1 @ p["w_ff1"].T + p["b_ff1"][0]) @ p["w_ff2"].T + p["b_ff2"][0]
    return ln(ff + x, p["g2"], p["be2"])


if __name__ == "__main__":
    # Small but lane-dense shapes (E multiple of 128; block_q=64 exercises a multi-tile grid).
    B, S, E, H, FF = 2, 128, 128, 4, 256
    key = jax.random.PRNGKey(0)
    kx, kp = jax.random.split(key)
    x = jax.random.normal(kx, (B, S, E), jnp.float32)
    params = init_params(kp, E, FF)

    ref = _reference(x, params, H)

    # bf16 MXU path (default): check at bf16 noise level; two query tiles per batch element.
    out_bf16 = jax.block_until_ready(transformer_block(x, params, num_heads=H, block_q=64))
    assert out_bf16.shape == (B, S, E)
    assert jnp.allclose(out_bf16, ref, atol=5e-2, rtol=5e-2), \
        float(jnp.max(jnp.abs(out_bf16 - ref)))

    # f32 path with auto block_q (full-sequence tile) and exact softmax reciprocal.
    out_f32 = jax.block_until_ready(
        transformer_block(x, params, num_heads=H, block_q=None, compute_dtype=jnp.float32))
    assert jnp.allclose(out_f32, ref, atol=2e-3, rtol=2e-3), \
        float(jnp.max(jnp.abs(out_f32 - ref)))

    print("KERNEL_OK")
</pallas_src>

<mosaic_0001>
module attributes {stable_mosaic.version = 11 : i64} {
  func.func @k(%arg0: i32, %arg1: memref<8x128xf32, #tpu.memory_space<vmem>>, %arg2: memref<8x128xf32, #tpu.memory_space<vmem>>) attributes {dimension_semantics = [#tpu.dimension_semantics<arbitrary>], iteration_bounds = array<i64: 2>, scalar_prefetch = 0 : i64, scratch_operands = 0 : i64, tpu.core_type = #tpu.core_type<tc>, window_params = [{pipeline_mode = #tpu.pipeline_mode<synchronous>, transform_indices = @transform_0, window_bounds = array<i64: 8, 128>}, {transform_indices = @transform_1, window_bounds = array<i64: 8, 128>}]} {
    %c0 = arith.constant 0 : index
    %c0_0 = arith.constant 0 : index
    %0 = vector.load %arg1[%c0, %c0_0] : memref<8x128xf32, #tpu.memory_space<vmem>>, vector<8x128xf32>
    %cst = arith.constant 1.000000e+00 : f32
    %1 = vector.broadcast %cst : f32 to vector<8x128xf32>
    %2 = arith.addf %0, %1 : vector<8x128xf32>
    %c0_1 = arith.constant 0 : index
    %c0_2 = arith.constant 0 : index
    %3 = vector.load %arg2[%c0_1, %c0_2] : memref<8x128xf32, #tpu.memory_space<vmem>>, vector<8x128xf32>
    tpu.vector_store %arg2[%c0_1, %c0_2], %2 {strides = array<i32>} : memref<8x128xf32, #tpu.memory_space<vmem>>, vector<8x128xf32>,
    return
  }
  func.func @transform_0(%arg0: i32) -> (i32, i32) {
    %c0_i32 = arith.constant 0 : i32
    %c0_i32_0 = arith.constant 0 : i32
    return %arg0, %c0_i32 : i32, i32
  }
  func.func @transform_1(%arg0: i32) -> (i32, i32) {
    %c0_i32 = arith.constant 0 : i32
    %c0_i32_0 = arith.constant 0 : i32
    return %arg0, %c0_i32 : i32, i32
  }
}

module attributes {stable_mosaic.version = 11 : i64} {
  func.func @k(%arg0: memref<16x128xf32, #tpu.memory_space<vmem>>, %arg1: memref<4x16x32xf32, #tpu.memory_space<vmem>>, %arg2: memref<16x128xf32, #tpu.memory_space<vmem>>) attributes {dimension_semantics = [], scalar_prefetch = 0 : i64, scratch_operands = 0 : i64, tpu.core_type = #tpu.core_type<tc>} {
    %c0 = arith.constant 0 : index
    %c0_0 = arith.constant 0 : index
    %0 = vector.load %arg0[%c0, %c0_0] : memref<16x128xf32, #tpu.memory_space<vmem>>, vector<16x128xf32>
    %1 = vector.shape_cast %0 : vector<16x128xf32> to vector<16x4x32xf32>
    %2 = tpu.transpose %1, [1, 0, 2] : vector<16x4x32xf32> -> vector<4x16x32xf32>
    %c0_1 = arith.constant 0 : index
    %c0_2 = arith.constant 0 : index
    %c0_3 = arith.constant 0 : index
    %3 = vector.load %arg1[%c0_1, %c0_2, %c0_3] : memref<4x16x32xf32, #tpu.memory_space<vmem>>, vector<4x16x32xf32>
    tpu.vector_store %arg1[%c0_1, %c0_2, %c0_3], %2 {strides = array<i32>} : memref<4x16x32xf32, #tpu.memory_space<vmem>>, vector<4x16x32xf32>,
    %cst = arith.constant dense<0.000000e+00> : vector<4x16xf32>
    %4 = vector.multi_reduction <add>, %2, %cst [2] : vector<4x16x32xf32> to vector<4x16xf32>
    %5 = vector.shape_cast %4 : vector<4x16xf32> to vector<4x16x1xf32>
    %cst_4 = arith.constant 3.200000e+01 : f32
    %6 = vector.broadcast %cst_4 : f32 to vector<4x16x1xf32>
    %7 = arith.divf %5, %6 : vector<4x16x1xf32>
    %8 = vector.broadcast %7 : vector<4x16x1xf32> to vector<4x16x32xf32>
    %9 = arith.subf %2, %8 : vector<4x16x32xf32>
    %10 = tpu.transpose %9, [1, 0, 2] : vector<4x16x32xf32> -> vector<16x4x32xf32>
    %11 = vector.shape_cast %10 : vector<16x4x32xf32> to vector<16x128xf32>
    %c0_5 = arith.constant 0 : index
    %c0_6 = arith.constant 0 : index
    %12 = vector.load %arg2[%c0_5, %c0_6] : memref<16x128xf32, #tpu.memory_space<vmem>>, vector<16x128xf32>
    tpu.vector_store %arg2[%c0_5, %c0_6], %11 {strides = array<i32>} : memref<16x128xf32, #tpu.memory_space<vmem>>, vector<16x128xf32>,
    return
  }
}

module attributes {stable_mosaic.version = 11 : i64} {
  func.func @transformer_block_kernel(%arg0: i32, %arg1: i32, %arg2: memref<1x128x128xf32, #tpu.memory_space<vmem>>, %arg3: memref<128x128xbf16, #tpu.memory_space<vmem>>, %arg4: memref<128x256xbf16, #tpu.memory_space<vmem>>, %arg5: memref<128x128xbf16, #tpu.memory_space<vmem>>, %arg6: memref<1x128xf32, #tpu.memory_space<vmem>>, %arg7: memref<1x128xf32, #tpu.memory_space<vmem>>, %arg8: memref<1x128xf32, #tpu.memory_space<vmem>>, %arg9: memref<128x256xbf16, #tpu.memory_space<vmem>>, %arg10: memref<1x256xf32, #tpu.memory_space<vmem>>, %arg11: memref<256x128xbf16, #tpu.memory_space<vmem>>, %arg12: memref<1x128xf32, #tpu.memory_space<vmem>>, %arg13: memref<1x128xf32, #tpu.memory_space<vmem>>, %arg14: memref<1x128xf32, #tpu.memory_space<vmem>>, %arg15: memref<1x64x128xf32, #tpu.memory_space<vmem>>, %arg16: memref<4x128x32xbf16, #tpu.memory_space<vmem>>, %arg17: memref<4x128x32xbf16, #tpu.memory_space<vmem>>) attributes {dimension_semantics = [#tpu.dimension_semantics<parallel>, #tpu.dimension_semantics<arbitrary>], iteration_bounds = array<i64: 2, 2>, scalar_prefetch = 0 : i64, scratch_operands = 2 : i64, tpu.core_type = #tpu.core_type<tc>, window_params = [{transform_indices = @transform_0, window_bounds = array<i64: 1, 128, 128>}, {pipeline_mode = #tpu.pipeline_mode<synchronous>, transform_indices = @transform_1, window_bounds = array<i64: 128, 128>}, {pipeline_mode = #tpu.pipeline_mode<synchronous>, transform_indices = @transform_2, window_bounds = array<i64: 128, 256>}, {pipeline_mode = #tpu.pipeline_mode<synchronous>, transform_indices = @transform_3, window_bounds = array<i64: 128, 128>}, {pipeline_mode = #tpu.pipeline_mode<synchronous>, transform_indices = @transform_4, window_bounds = array<i64: 1, 128>}, {pipeline_mode = #tpu.pipeline_mode<synchronous>, transform_indices = @transform_5, window_bounds = array<i64: 1, 128>}, {pipeline_mode = #tpu.pipeline_mode<synchronous>, transform_indices = @transform_6, window_bounds = array<i64: 1, 128>}, {pipeline_mode = #tpu.pipeline_mode<synchronous>, transform_indices = @transform_7, window_bounds = array<i64: 128, 256>}, {pipeline_mode = #tpu.pipeline_mode<synchronous>, transform_indices = @transform_8, window_bounds = array<i64: 1, 256>}, {pipeline_mode = #tpu.pipeline_mode<synchronous>, transform_indices = @transform_9, window_bounds = array<i64: 256, 128>}, {pipeline_mode = #tpu.pipeline_mode<synchronous>, transform_indices = @transform_10, window_bounds = array<i64: 1, 128>}, {pipeline_mode = #tpu.pipeline_mode<synchronous>, transform_indices = @transform_11, window_bounds = array<i64: 1, 128>}, {pipeline_mode = #tpu.pipeline_mode<synchronous>, transform_indices = @transform_12, window_bounds = array<i64: 1, 128>}, {transform_indices = @transform_13, window_bounds = array<i64: 1, 64, 128>}]} {
    %c0_i32 = arith.constant 0 : i32
    %0 = arith.cmpi eq, %arg1, %c0_i32 : i32
    %1 = arith.extui %0 : i1 to i32
    %c0_i32_0 = arith.constant 0 : i32
    %2 = arith.cmpi ne, %1, %c0_i32_0 : i32
    scf.if %2 {
      %c0_51 = arith.constant 0 : index
      %c0_52 = arith.constant 0 : index
      %c0_53 = arith.constant 0 : index
      %118 = vector.load %arg2[%c0_51, %c0_52, %c0_53] : memref<1x128x128xf32, #tpu.memory_space<vmem>>, vector<1x128x128xf32>
      %119 = vector.shape_cast %118 : vector<1x128x128xf32> to vector<128x128xf32>
      %120 = arith.truncf %119 : vector<128x128xf32> to vector<128x128xbf16>
      %c0_54 = arith.constant 0 : index
      %c0_55 = arith.constant 0 : index
      %121 = vector.load %arg4[%c0_54, %c0_55] : memref<128x256xbf16, #tpu.memory_space<vmem>>, vector<128x256xbf16>
      %cst_56 = arith.constant dense<0.000000e+00> : vector<128x256xf32>
      %122 = tpu.matmul %120, %121, %cst_56 {dimension_numbers = #tpu.dot_dimension_numbers<[1], [0], [0], [1], [0, 0, 1, 1], [], []>} : vector<128x128xbf16>, vector<128x256xbf16>, vector<128x256xf32> -> vector<128x256xf32>
      %123 = arith.truncf %122 : vector<128x256xf32> to vector<128x256xbf16>
      %124 = vector.extract_strided_slice %123 {offsets = [0, 0], sizes = [128, 128], strides = [1, 1]} : vector<128x256xbf16> to vector<128x128xbf16>
      %125 = vector.extract_strided_slice %124 {offsets = [0, 0], sizes = [128, 32], strides = [1, 1]} : vector<128x128xbf16> to vector<128x32xbf16>
      %126 = vector.extract_strided_slice %124 {offsets = [0, 32], sizes = [128, 32], strides = [1, 1]} : vector<128x128xbf16> to vector<128x32xbf16>
      %127 = vector.extract_strided_slice %124 {offsets = [0, 64], sizes = [128, 32], strides = [1, 1]} : vector<128x128xbf16> to vector<128x32xbf16>
      %128 = vector.extract_strided_slice %124 {offsets = [0, 96], sizes = [128, 32], strides = [1, 1]} : vector<128x128xbf16> to vector<128x32xbf16>
      %129 = vector.shape_cast %125 : vector<128x32xbf16> to vector<1x128x32xbf16>
      %130 = vector.shape_cast %126 : vector<128x32xbf16> to vector<1x128x32xbf16>
      %131 = vector.shape_cast %127 : vector<128x32xbf16> to vector<1x128x32xbf16>
      %132 = vector.shape_cast %128 : vector<128x32xbf16> to vector<1x128x32xbf16>
      %133 = tpu.concatenate %129, %130, %131, %132 in 0 : vector<1x128x32xbf16>, vector<1x128x32xbf16>, vector<1x128x32xbf16>, vector<1x128x32xbf16> -> vector<4x128x32xbf16>
      %c0_57 = arith.constant 0 : index
      %c0_58 = arith.constant 0 : index
      %c0_59 = arith.constant 0 : index
      %134 = vector.load %arg16[%c0_57, %c0_58, %c0_59] : memref<4x128x32xbf16, #tpu.memory_space<vmem>>, vector<4x128x32xbf16>
      tpu.vector_store %arg16[%c0_57, %c0_58, %c0_59], %133 {strides = array<i32>} : memref<4x128x32xbf16, #tpu.memory_space<vmem>>, vector<4x128x32xbf16>,
      %135 = vector.extract_strided_slice %123 {offsets = [0, 128], sizes = [128, 128], strides = [1, 1]} : vector<128x256xbf16> to vector<128x128xbf16>
      %136 = vector.extract_strided_slice %135 {offsets = [0, 0], sizes = [128, 32], strides = [1, 1]} : vector<128x128xbf16> to vector<128x32xbf16>
      %137 = vector.extract_strided_slice %135 {offsets = [0, 32], sizes = [128, 32], strides = [1, 1]} : vector<128x128xbf16> to vector<128x32xbf16>
      %138 = vector.extract_strided_slice %135 {offsets = [0, 64], sizes = [128, 32], strides = [1, 1]} : vector<128x128xbf16> to vector<128x32xbf16>
      %139 = vector.extract_strided_slice %135 {offsets = [0, 96], sizes = [128, 32], strides = [1, 1]} : vector<128x128xbf16> to vector<128x32xbf16>
      %140 = vector.shape_cast %136 : vector<128x32xbf16> to vector<1x128x32xbf16>
      %141 = vector.shape_cast %137 : vector<128x32xbf16> to vector<1x128x32xbf16>
      %142 = vector.shape_cast %138 : vector<128x32xbf16> to vector<1x128x32xbf16>
      %143 = vector.shape_cast %139 : vector<128x32xbf16> to vector<1x128x32xbf16>
      %144 = tpu.concatenate %140, %141, %142, %143 in 0 : vector<1x128x32xbf16>, vector<1x128x32xbf16>, vector<1x128x32xbf16>, vector<1x128x32xbf16> -> vector<4x128x32xbf16>
      %c0_60 = arith.constant 0 : index
      %c0_61 = arith.constant 0 : index
      %c0_62 = arith.constant 0 : index
      %145 = vector.load %arg17[%c0_60, %c0_61, %c0_62] : memref<4x128x32xbf16, #tpu.memory_space<vmem>>, vector<4x128x32xbf16>
      tpu.vector_store %arg17[%c0_60, %c0_61, %c0_62], %144 {strides = array<i32>} : memref<4x128x32xbf16, #tpu.memory_space<vmem>>, vector<4x128x32xbf16>,
    } else {
    }
    %c64_i32 = arith.constant 64 : i32
    %3 = arith.muli %arg1, %c64_i32 : i32
    %4 = tpu.assume_multiple %3, 64 : i32
    %c0 = arith.constant 0 : index
    %5 = arith.index_cast %4 : i32 to index
    %c0_1 = arith.constant 0 : index
    %6 = vector.load %arg2[%c0, %5, %c0_1] : memref<1x128x128xf32, #tpu.memory_space<vmem>>, vector<1x64x128xf32>
    %7 = vector.shape_cast %6 : vector<1x64x128xf32> to vector<64x128xf32>
    %8 = arith.truncf %7 : vector<64x128xf32> to vector<64x128xbf16>
    %c0_2 = arith.constant 0 : index
    %c0_3 = arith.constant 0 : index
    %9 = vector.load %arg3[%c0_2, %c0_3] : memref<128x128xbf16, #tpu.memory_space<vmem>>, vector<128x128xbf16>
    %cst = arith.constant dense<0.000000e+00> : vector<64x128xf32>
    %10 = tpu.matmul %8, %9, %cst {dimension_numbers = #tpu.dot_dimension_numbers<[1], [0], [0], [1], [0, 0, 1, 1], [], []>} : vector<64x128xbf16>, vector<128x128xbf16>, vector<64x128xf32> -> vector<64x128xf32>
    %11 = arith.truncf %10 : vector<64x128xf32> to vector<64x128xbf16>
    %12 = vector.extract_strided_slice %11 {offsets = [0, 0], sizes = [64, 32], strides = [1, 1]} : vector<64x128xbf16> to vector<64x32xbf16>
    %13 = vector.extract_strided_slice %11 {offsets = [0, 32], sizes = [64, 32], strides = [1, 1]} : vector<64x128xbf16> to vector<64x32xbf16>
    %14 = vector.extract_strided_slice %11 {offsets = [0, 64], sizes = [64, 32], strides = [1, 1]} : vector<64x128xbf16> to vector<64x32xbf16>
    %15 = vector.extract_strided_slice %11 {offsets = [0, 96], sizes = [64, 32], strides = [1, 1]} : vector<64x128xbf16> to vector<64x32xbf16>
    %16 = vector.shape_cast %12 : vector<64x32xbf16> to vector<1x64x32xbf16>
    %17 = vector.shape_cast %13 : vector<64x32xbf16> to vector<1x64x32xbf16>
    %18 = vector.shape_cast %14 : vector<64x32xbf16> to vector<1x64x32xbf16>
    %19 = vector.shape_cast %15 : vector<64x32xbf16> to vector<1x64x32xbf16>
    %20 = tpu.concatenate %16, %17, %18, %19 in 0 : vector<1x64x32xbf16>, vector<1x64x32xbf16>, vector<1x64x32xbf16>, vector<1x64x32xbf16> -> vector<4x64x32xbf16>
    %c0_4 = arith.constant 0 : index
    %c0_5 = arith.constant 0 : index
    %c0_6 = arith.constant 0 : index
    %21 = vector.load %arg16[%c0_4, %c0_5, %c0_6] : memref<4x128x32xbf16, #tpu.memory_space<vmem>>, vector<4x128x32xbf16>
    %c0_7 = arith.constant 0 : index
    %c0_8 = arith.constant 0 : index
    %c0_9 = arith.constant 0 : index
    %22 = vector.load %arg17[%c0_7, %c0_8, %c0_9] : memref<4x128x32xbf16, #tpu.memory_space<vmem>>, vector<4x128x32xbf16>
    "tpu.trace_start"() <{level = 10 : i32, message = "hqd,hkd->hqk"}> : () -> ()
    %cst_10 = arith.constant dense<0.000000e+00> : vector<4x64x128xf32>
    %23 = tpu.matmul %20, %21, %cst_10 {dimension_numbers = #tpu.dot_dimension_numbers<[2], [2], [1], [1], [0, 0, 0, 1, 1, 1], [0], [0]>} : vector<4x64x32xbf16>, vector<4x128x32xbf16>, vector<4x64x128xf32> -> vector<4x64x128xf32>
    "tpu.trace_stop"() : () -> ()
    %cst_11 = arith.constant dense<0xFF800000> : vector<4x64xf32>
    %24 = vector.multi_reduction <maximumf>, %23, %cst_11 [2] : vector<4x64x128xf32> to vector<4x64xf32>
    %25 = vector.shape_cast %24 : vector<4x64xf32> to vector<4x64x1xf32>
    %26 = vector.broadcast %25 : vector<4x64x1xf32> to vector<4x64x128xf32>
    %27 = arith.subf %23, %26 : vector<4x64x128xf32>
    %28 = math.exp %27 : vector<4x64x128xf32>
    %cst_12 = arith.constant dense<0.000000e+00> : vector<4x64xf32>
    %29 = vector.multi_reduction <add>, %28, %cst_12 [2] : vector<4x64x128xf32> to vector<4x64xf32>
    %30 = vector.shape_cast %29 : vector<4x64xf32> to vector<4x64x1xf32>
    %31 = arith.truncf %28 : vector<4x64x128xf32> to vector<4x64x128xbf16>
    "tpu.trace_start"() <{level = 10 : i32, message = "hqk,hkd->hqd"}> : () -> ()
    %cst_13 = arith.constant dense<0.000000e+00> : vector<4x64x32xf32>
    %32 = tpu.matmul %31, %22, %cst_13 {dimension_numbers = #tpu.dot_dimension_numbers<[2], [1], [1], [2], [0, 0, 0, 1, 1, 2], [0], [0]>} : vector<4x64x128xbf16>, vector<4x128x32xbf16>, vector<4x64x32xf32> -> vector<4x64x32xf32>
    "tpu.trace_stop"() : () -> ()
    %33 = tpu.reciprocal %30 {approx = true} : vector<4x64x1xf32> -> vector<4x64x1xf32>
    %34 = vector.broadcast %33 : vector<4x64x1xf32> to vector<4x64x32xf32>
    %35 = arith.mulf %32, %34 : vector<4x64x32xf32>
    %36 = vector.extract_strided_slice %35 {offsets = [0, 0, 0], sizes = [1, 64, 32], strides = [1, 1, 1]} : vector<4x64x32xf32> to vector<1x64x32xf32>
    %37 = vector.shape_cast %36 : vector<1x64x32xf32> to vector<64x32xf32>
    %38 = vector.extract_strided_slice %35 {offsets = [1, 0, 0], sizes = [1, 64, 32], strides = [1, 1, 1]} : vector<4x64x32xf32> to vector<1x64x32xf32>
    %39 = vector.shape_cast %38 : vector<1x64x32xf32> to vector<64x32xf32>
    %40 = vector.extract_strided_slice %35 {offsets = [2, 0, 0], sizes = [1, 64, 32], strides = [1, 1, 1]} : vector<4x64x32xf32> to vector<1x64x32xf32>
    %41 = vector.shape_cast %40 : vector<1x64x32xf32> to vector<64x32xf32>
    %42 = vector.extract_strided_slice %35 {offsets = [3, 0, 0], sizes = [1, 64, 32], strides = [1, 1, 1]} : vector<4x64x32xf32> to vector<1x64x32xf32>
    %43 = vector.shape_cast %42 : vector<1x64x32xf32> to vector<64x32xf32>
    %44 = tpu.concatenate %37, %39, %41, %43 in 1 : vector<64x32xf32>, vector<64x32xf32>, vector<64x32xf32>, vector<64x32xf32> -> vector<64x128xf32>
    %45 = arith.truncf %44 : vector<64x128xf32> to vector<64x128xbf16>
    %c0_14 = arith.constant 0 : index
    %c0_15 = arith.constant 0 : index
    %46 = vector.load %arg5[%c0_14, %c0_15] : memref<128x128xbf16, #tpu.memory_space<vmem>>, vector<128x128xbf16>
    %cst_16 = arith.constant dense<0.000000e+00> : vector<64x128xf32>
    %47 = tpu.matmul %45, %46, %cst_16 {dimension_numbers = #tpu.dot_dimension_numbers<[1], [0], [0], [1], [0, 0, 1, 1], [], []>} : vector<64x128xbf16>, vector<128x128xbf16>, vector<64x128xf32> -> vector<64x128xf32>
    %c0_17 = arith.constant 0 : index
    %c0_18 = arith.constant 0 : index
    %48 = vector.load %arg6[%c0_17, %c0_18] : memref<1x128xf32, #tpu.memory_space<vmem>>, vector<1x128xf32>
    %49 = vector.broadcast %48 : vector<1x128xf32> to vector<64x128xf32>
    %50 = arith.addf %47, %49 : vector<64x128xf32>
    %51 = arith.addf %50, %7 : vector<64x128xf32>
    %c0_19 = arith.constant 0 : index
    %c0_20 = arith.constant 0 : index
    %52 = vector.load %arg7[%c0_19, %c0_20] : memref<1x128xf32, #tpu.memory_space<vmem>>, vector<1x128xf32>
    %c0_21 = arith.constant 0 : index
    %c0_22 = arith.constant 0 : index
    %53 = vector.load %arg8[%c0_21, %c0_22] : memref<1x128xf32, #tpu.memory_space<vmem>>, vector<1x128xf32>
    %cst_23 = arith.constant dense<0.000000e+00> : vector<64xf32>
    %54 = vector.multi_reduction <add>, %51, %cst_23 [1] : vector<64x128xf32> to vector<64xf32>
    %55 = vector.shape_cast %54 : vector<64xf32> to vector<64x1xf32>
    %cst_24 = arith.constant 1.280000e+02 : f32
    %56 = vector.broadcast %cst_24 : f32 to vector<64x1xf32>
    %57 = arith.divf %55, %56 : vector<64x1xf32>
    %58 = vector.broadcast %57 : vector<64x1xf32> to vector<64x128xf32>
    %59 = arith.subf %51, %58 : vector<64x128xf32>
    %60 = arith.mulf %59, %59 : vector<64x128xf32>
    %cst_25 = arith.constant dense<0.000000e+00> : vector<64xf32>
    %61 = vector.multi_reduction <add>, %60, %cst_25 [1] : vector<64x128xf32> to vector<64xf32>
    %62 = vector.shape_cast %61 : vector<64xf32> to vector<64x1xf32>
    %cst_26 = arith.constant 1.280000e+02 : f32
    %63 = vector.broadcast %cst_26 : f32 to vector<64x1xf32>
    %64 = arith.divf %62, %63 : vector<64x1xf32>
    %65 = vector.broadcast %57 : vector<64x1xf32> to vector<64x128xf32>
    %66 = arith.subf %51, %65 : vector<64x128xf32>
    %cst_27 = arith.constant 9.99999974E-6 : f32
    %67 = vector.broadcast %cst_27 : f32 to vector<64x1xf32>
    %68 = arith.addf %64, %67 : vector<64x1xf32>
    %69 = math.rsqrt %68 : vector<64x1xf32>
    %70 = vector.broadcast %69 : vector<64x1xf32> to vector<64x128xf32>
    %71 = arith.mulf %66, %70 : vector<64x128xf32>
    %72 = vector.broadcast %52 : vector<1x128xf32> to vector<64x128xf32>
    %73 = arith.mulf %71, %72 : vector<64x128xf32>
    %74 = vector.broadcast %53 : vector<1x128xf32> to vector<64x128xf32>
    %75 = arith.addf %73, %74 : vector<64x128xf32>
    %76 = arith.truncf %75 : vector<64x128xf32> to vector<64x128xbf16>
    %c0_28 = arith.constant 0 : index
    %c0_29 = arith.constant 0 : index
    %77 = vector.load %arg9[%c0_28, %c0_29] : memref<128x256xbf16, #tpu.memory_space<vmem>>, vector<128x256xbf16>
    %cst_30 = arith.constant dense<0.000000e+00> : vector<64x256xf32>
    %78 = tpu.matmul %76, %77, %cst_30 {dimension_numbers = #tpu.dot_dimension_numbers<[1], [0], [0], [1], [0, 0, 1, 1], [], []>} : vector<64x128xbf16>, vector<128x256xbf16>, vector<64x256xf32> -> vector<64x256xf32>
    %c0_31 = arith.constant 0 : index
    %c0_32 = arith.constant 0 : index
    %79 = vector.load %arg10[%c0_31, %c0_32] : memref<1x256xf32, #tpu.memory_space<vmem>>, vector<1x256xf32>
    %80 = vector.broadcast %79 : vector<1x256xf32> to vector<64x256xf32>
    %81 = arith.addf %78, %80 : vector<64x256xf32>
    %cst_33 = arith.constant 0.000000e+00 : f32
    %82 = vector.broadcast %cst_33 : f32 to vector<64x256xf32>
    %83 = arith.maximumf %81, %82 : vector<64x256xf32>
    %84 = arith.truncf %83 : vector<64x256xf32> to vector<64x256xbf16>
    %c0_34 = arith.constant 0 : index
    %c0_35 = arith.constant 0 : index
    %85 = vector.load %arg11[%c0_34, %c0_35] : memref<256x128xbf16, #tpu.memory_space<vmem>>, vector<256x128xbf16>
    %cst_36 = arith.constant dense<0.000000e+00> : vector<64x128xf32>
    %86 = tpu.matmul %84, %85, %cst_36 {dimension_numbers = #tpu.dot_dimension_numbers<[1], [0], [0], [1], [0, 0, 1, 1], [], []>} : vector<64x256xbf16>, vector<256x128xbf16>, vector<64x128xf32> -> vector<64x128xf32>
    %c0_37 = arith.constant 0 : index
    %c0_38 = arith.constant 0 : index
    %87 = vector.load %arg12[%c0_37, %c0_38] : memref<1x128xf32, #tpu.memory_space<vmem>>, vector<1x128xf32>
    %88 = vector.broadcast %87 : vector<1x128xf32> to vector<64x128xf32>
    %89 = arith.addf %86, %88 : vector<64x128xf32>
    %90 = arith.addf %89, %7 : vector<64x128xf32>
    %c0_39 = arith.constant 0 : index
    %c0_40 = arith.constant 0 : index
    %91 = vector.load %arg13[%c0_39, %c0_40] : memref<1x128xf32, #tpu.memory_space<vmem>>, vector<1x128xf32>
    %c0_41 = arith.constant 0 : index
    %c0_42 = arith.constant 0 : index
    %92 = vector.load %arg14[%c0_41, %c0_42] : memref<1x128xf32, #tpu.memory_space<vmem>>, vector<1x128xf32>
    %cst_43 = arith.constant dense<0.000000e+00> : vector<64xf32>
    %93 = vector.multi_reduction <add>, %90, %cst_43 [1] : vector<64x128xf32> to vector<64xf32>
    %94 = vector.shape_cast %93 : vector<64xf32> to vector<64x1xf32>
    %cst_44 = arith.constant 1.280000e+02 : f32
    %95 = vector.broadcast %cst_44 : f32 to vector<64x1xf32>
    %96 = arith.divf %94, %95 : vector<64x1xf32>
    %97 = vector.broadcast %96 : vector<64x1xf32> to vector<64x128xf32>
    %98 = arith.subf %90, %97 : vector<64x128xf32>
    %99 = arith.mulf %98, %98 : vector<64x128xf32>
    %cst_45 = arith.constant dense<0.000000e+00> : vector<64xf32>
    %100 = vector.multi_reduction <add>, %99, %cst_45 [1] : vector<64x128xf32> to vector<64xf32>
    %101 = vector.shape_cast %100 : vector<64xf32> to vector<64x1xf32>
    %cst_46 = arith.constant 1.280000e+02 : f32
    %102 = vector.broadcast %cst_46 : f32 to vector<64x1xf32>
    %103 = arith.divf %101, %102 : vector<64x1xf32>
    %104 = vector.broadcast %96 : vector<64x1xf32> to vector<64x128xf32>
    %105 = arith.subf %90, %104 : vector<64x128xf32>
    %cst_47 = arith.constant 9.99999974E-6 : f32
    %106 = vector.broadcast %cst_47 : f32 to vector<64x1xf32>
    %107 = arith.addf %103, %106 : vector<64x1xf32>
    %108 = math.rsqrt %107 : vector<64x1xf32>
    %109 = vector.broadcast %108 : vector<64x1xf32> to vector<64x128xf32>
    %110 = arith.mulf %105, %109 : vector<64x128xf32>
    %111 = vector.broadcast %91 : vector<1x128xf32> to vector<64x128xf32>
    %112 = arith.mulf %110, %111 : vector<64x128xf32>
    %113 = vector.broadcast %92 : vector<1x128xf32> to vector<64x128xf32>
    %114 = arith.addf %112, %113 : vector<64x128xf32>
    %c0_48 = arith.constant 0 : index
    %c0_49 = arith.constant 0 : index
    %c0_50 = arith.constant 0 : index
    %115 = vector.load %arg15[%c0_48, %c0_49, %c0_50] : memref<1x64x128xf32, #tpu.memory_space<vmem>>, vector<1x64x128xf32>
    %116 = vector.shape_cast %115 : vector<1x64x128xf32> to vector<64x128xf32>
    %117 = vector.shape_cast %114 : vector<64x128xf32> to vector<1x64x128xf32>
    tpu.vector_store %arg15[%c0_48, %c0_49, %c0_50], %117 {strides = array<i32>} : memref<1x64x128xf32, #tpu.memory_space<vmem>>, vector<1x64x128xf32>,
    return
  }
  func.func @transform_0(%arg0: i32, %arg1: i32) -> (i32, i32, i32) {
    %c0_i32 = arith.constant 0 : i32
    %c0_i32_0 = arith.constant 0 : i32
    %c0_i32_1 = arith.constant 0 : i32
    return %arg0, %c0_i32, %c0_i32_0 : i32, i32, i32
  }
  func.func @transform_1(%arg0: i32, %arg1: i32) -> (i32, i32) {
    %c0_i32 = arith.constant 0 : i32
    %c0_i32_0 = arith.constant 0 : i32
    %c0_i32_1 = arith.constant 0 : i32
    return %c0_i32, %c0_i32_0 : i32, i32
  }
  func.func @transform_2(%arg0: i32, %arg1: i32) -> (i32, i32) {
    %c0_i32 = arith.constant 0 : i32
    %c0_i32_0 = arith.constant 0 : i32
    %c0_i32_1 = arith.constant 0 : i32
    return %c0_i32, %c0_i32_0 : i32, i32
  }
  func.func @transform_3(%arg0: i32, %arg1: i32) -> (i32, i32) {
    %c0_i32 = arith.constant 0 : i32
    %c0_i32_0 = arith.constant 0 : i32
    %c0_i32_1 = arith.constant 0 : i32
    return %c0_i32, %c0_i32_0 : i32, i32
  }
  func.func @transform_4(%arg0: i32, %arg1: i32) -> (i32, i32) {
    %c0_i32 = arith.constant 0 : i32
    %c0_i32_0 = arith.constant 0 : i32
    %c0_i32_1 = arith.constant 0 : i32
    return %c0_i32, %c0_i32_0 : i32, i32
  }
  func.func @transform_5(%arg0: i32, %arg1: i32) -> (i32, i32) {
    %c0_i32 = arith.constant 0 : i32
    %c0_i32_0 = arith.constant 0 : i32
    %c0_i32_1 = arith.constant 0 : i32
    return %c0_i32, %c0_i32_0 : i32, i32
  }
  func.func @transform_6(%arg0: i32, %arg1: i32) -> (i32, i32) {
    %c0_i32 = arith.constant 0 : i32
    %c0_i32_0 = arith.constant 0 : i32
    %c0_i32_1 = arith.constant 0 : i32
    return %c0_i32, %c0_i32_0 : i32, i32
  }
  func.func @transform_7(%arg0: i32, %arg1: i32) -> (i32, i32) {
    %c0_i32 = arith.constant 0 : i32
    %c0_i32_0 = arith.constant 0 : i32
    %c0_i32_1 = arith.constant 0 : i32
    return %c0_i32, %c0_i32_0 : i32, i32
  }
  func.func @transform_8(%arg0: i32, %arg1: i32) -> (i32, i32) {
    %c0_i32 = arith.constant 0 : i32
    %c0_i32_0 = arith.constant 0 : i32
    %c0_i32_1 = arith.constant 0 : i32
    return %c0_i32, %c0_i32_0 : i32, i32
  }
  func.func @transform_9(%arg0: i32, %arg1: i32) -> (i32, i32) {
    %c0_i32 = arith.constant 0 : i32
    %c0_i32_0 = arith.constant 0 : i32
    %c0_i32_1 = arith.constant 0 : i32
    return %c0_i32, %c0_i32_0 : i32, i32
  }
  func.func @transform_10(%arg0: i32, %arg1: i32) -> (i32, i32) {
    %c0_i32 = arith.constant 0 : i32
    %c0_i32_0 = arith.constant 0 : i32
    %c0_i32_1 = arith.constant 0 : i32
    return %c0_i32, %c0_i32_0 : i32, i32
  }
  func.func @transform_11(%arg0: i32, %arg1: i32) -> (i32, i32) {
    %c0_i32 = arith.constant 0 : i32
    %c0_i32_0 = arith.constant 0 : i32
    %c0_i32_1 = arith.constant 0 : i32
    return %c0_i32, %c0_i32_0 : i32, i32
  }
  func.func @transform_12(%arg0: i32, %arg1: i32) -> (i32, i32) {
    %c0_i32 = arith.constant 0 : i32
    %c0_i32_0 = arith.constant 0 : i32
    %c0_i32_1 = arith.constant 0 : i32
    return %c0_i32, %c0_i32_0 : i32, i32
  }
  func.func @transform_13(%arg0: i32, %arg1: i32) -> (i32, i32, i32) {
    %c0_i32 = arith.constant 0 : i32
    %c0_i32_0 = arith.constant 0 : i32
    return %arg0, %arg1, %c0_i32 : i32, i32, i32
  }
}

</mosaic_0001>

<llo_original>
// kernel: tpu_custom_call.1
$region0: #{tpu_custom_call.1}
  #allocation0 [shape = 'u32[]', space=smem, size = 0x4, offset = 0x4, fixed_abs, tag = 'smem constant byte address 0x4 - core index']
  #allocation1 [shape = 'u32[72,128]{1,0:T(1,128)}', space=vmem, size = 0x9000, scoped, tag = 'internal scratch']
  %s0 = inlined_call_operand.hbm [shape: f32[16,128], index: 0, kind: input, shape index: {}]
  %s1 = inlined_call_operand.hbm [shape: f32[16,128], index: 1, kind: output, shape index: {}]
  %s2 = sld [smem:[#allocation0]]
  $region41: #{tpu_custom_call.1} parent=0
    _
  %s4 = ssub.s32 1, %s2
  %s5 = scalar_select 0, %s4, %s2
  $region1: #{tpu_custom_call.1} parent=0
    #allocation2 [shape = 'u8[4096]{0}', space=vmem, size = 0x1000, scoped, tag = 'input window, operand 0, single buffered']
    #allocation3 [shape = 's32[2]{0}', space=sflag, size = 0x8, scoped, tag = 'scoped memory for tpu_custom_call.1']
    #allocation4 [shape = 's32[2]{0}', space=sflag, size = 0x8, scoped, tag = 'scoped memory for tpu_custom_call.1']
    #allocation5 [shape = 'u8[8192]{0}', space=vmem, size = 0x2000, scoped, tag = 'output window, operand 0']
    %6 = vsyncpa [#allocation3], 0
    %7 = vsyncpa [#allocation4], 0
    %s8 = scalar_lea.sflag [#allocation4], 1
    %9 = vsyncpa %s8, 0
    loop: start=0, step=1, limit=4
    $region2: #{tpu_custom_call.1} parent=1 // loop_pre_header
      _
    $region3: #{tpu_custom_call.1} parent=1 // loop_header
      %s11 = sphi 0, %s15
      %p12 = scmp.ge.s32.totalorder %s11, 4
      %s21 = sphi 0, %s23
      %s24 = sphi 0, %s21
      %s25 = sphi 0, %s24
      %s41 = sphi 0, %s25
      %s47 = sphi 0, %s49
      %s50 = sphi 0, %s47
      %s51 = sphi 0, %s50
      %s67 = sphi 0, %s51
    $region4: #{tpu_custom_call.1} parent=1 // loop_header_branch
      %14 = sbr.rel (%p12) target = $region8
    $region5: #{tpu_custom_call.1} parent=1 // loop_body
      %s16 = ssub.s32 %s11, 1
      %s17 = ssub.s32 %s11, 2
      %s18 = sadd.s32 %s11, 1
      %s19 = ssub.s32 %s11, %s18
      %p20 = scmp.eq.s32.totalorder %s19, 0
      %s22 = sadd.s32 %s21, 1
      %s23 = scalar_select %p20, %s21, %s22
      %p26 = pneg %p20
      %p27 = scmp.eq.s32.totalorder %s11, 1
      %p28 = por %p26, %p27
      %p29 = scmp.ne.s32.totalorder %s21, %s24
      %p30 = scmp.eq.s32.totalorder %s11, 0
      %p31 = por %p29, %p30
      %p32 = scmp.ne.s32.totalorder %s21, %s24
      %p33 = scmp.eq.s32.totalorder %s16, 1
      %p34 = por %p32, %p33
      %p35 = scmp.ne.s32.totalorder %s24, %s25
      %p36 = scmp.eq.s32.totalorder %s16, 0
      %p37 = por %p35, %p36
      %p38 = scmp.ne.s32.totalorder %s24, %s25
      %p39 = scmp.eq.s32.totalorder %s17, 1
      %p40 = por %p38, %p39
      %p42 = scmp.ne.s32.totalorder %s25, %s41
      %p43 = scmp.eq.s32.totalorder %s17, 0
      %p44 = por %p42, %p43
      %s45 = ssub.s32 %s11, %s18
      %p46 = scmp.eq.s32.totalorder %s45, 0
      %s48 = sadd.s32 %s47, 1
      %s49 = scalar_select %p46, %s47, %s48
      %p52 = pneg %p46
      %p53 = scmp.eq.s32.totalorder %s11, 1
      %p54 = por %p52, %p53
      %p55 = scmp.ne.s32.totalorder %s47, %s50
      %p56 = scmp.eq.s32.totalorder %s11, 0
      %p57 = por %p55, %p56
      %p58 = scmp.ne.s32.totalorder %s47, %s50
      %p59 = scmp.eq.s32.totalorder %s16, 1
      %p60 = por %p58, %p59
      %p61 = scmp.ne.s32.totalorder %s50, %s51
      %p62 = scmp.eq.s32.totalorder %s16, 0
      %p63 = por %p61, %p62
      %p64 = scmp.ne.s32.totalorder %s50, %s51
      %p65 = scmp.eq.s32.totalorder %s17, 1
      %p66 = por %p64, %p65
      %p68 = scmp.ne.s32.totalorder %s51, %s67
      %p69 = scmp.eq.s32.totalorder %s17, 0
      %p70 = por %p68, %p69
      %p71 = scmp.le.s32.totalorder 1, %s11
      %p72 = scmp.lt.s32.totalorder %s11, 3
      %p73 = pnand %p71, %p72
      %p74 = pneg %p73
      // Predicated region
      $region9: #{tpu_custom_call.1} parent=5 // pred_check
        _
      $region10: #{tpu_custom_call.1} parent=5 // pred_check_branch
        %76 = sbr.rel (%p73) target = $region12
      $region11: #{tpu_custom_call.1} parent=5 // pred_region
        %s77 = ssub.s32 %s11, 1
        // Predicated region
        $region13: #{tpu_custom_call.1} parent=11 // pred_check
          %p78 = pneg %p37
        $region14: #{tpu_custom_call.1} parent=11 // pred_check_branch
          %80 = sbr.rel (%p78) target = $region16
        $region15: #{tpu_custom_call.1} parent=11 // pred_region
          %82 = vsyncadd [#allocation3], 0
          %s83 = smul.addr %s16, 8
          %s84 = scalar_lea.hbm %s0, %s83
          %s86 = sshll.u32 %s84, 4
          %s87 = int_to_ptr.hbm [resolvable:$true] %s86
          %s88 = sshll.u32 [#allocation2], 4
          %s89 = int_to_ptr.vmem [resolvable:$true] %s88
          %91 = dma.hbm_to_vmem [thread:$0]  %s87, 128, %s89, [#allocation3]
        $region16: #{tpu_custom_call.1} parent=11 // pred_fallthru
          _
      $region12: #{tpu_custom_call.1} parent=5 // pred_fallthru
        _
      %p92 = scmp.lt.s32.totalorder %s11, 2
      // Predicated region
      $region17: #{tpu_custom_call.1} parent=5 // pred_check
        %p93 = pneg %p92
      $region18: #{tpu_custom_call.1} parent=5 // pred_check_branch
        %95 = sbr.rel (%p93) target = $region20
      $region19: #{tpu_custom_call.1} parent=5 // pred_region
        _
      $region20: #{tpu_custom_call.1} parent=5 // pred_fallthru
        _
      %p96 = scmp.le.s32.totalorder 1, %s11
      %p97 = scmp.lt.s32.totalorder %s11, 3
      %p98 = pnand %p96, %p97
      %p99 = pneg %p98
      // Predicated region
      $region21: #{tpu_custom_call.1} parent=5 // pred_check
        _
      $region22: #{tpu_custom_call.1} parent=5 // pred_check_branch
        %101 = sbr.rel (%p98) target = $region24
      $region23: #{tpu_custom_call.1} parent=5 // pred_region
        %s102 = ssub.s32 %s11, 1
        // Predicated region
        $region25: #{tpu_custom_call.1} parent=23 // pred_check
          %p103 = pneg %p37
        $region26: #{tpu_custom_call.1} parent=23 // pred_check_branch
          %105 = sbr.rel (%p103) target = $region28
        $region27: #{tpu_custom_call.1} parent=23 // pred_region
          %107 = dma.done [#allocation3], 128
        $region28: #{tpu_custom_call.1} parent=23 // pred_fallthru
          _
        %p108 = pneg %p37
        %p109 = pneg %p34
        %p110 = pneg %p63
        %p111 = pneg %p60
        %s112 = sand.u32 %s50, 1
        %s113 = scalar_lea.sflag [#allocation4], %s112
        %s114 = sand.u32 %s50, 1
        %s115 = smul.addr %s114, 8
        %s116 = scalar_lea.vmem [#allocation5], %s115
        %v117 = vld [vmem:[#allocation2] sm:$0xff]
        %v118 = vadd.f32 %v117, 1.0
        %119 = vst [vmem:[%s116] sm:$0xff] %v118
        %s120 = sand.u32 %s50, 1
        %s121 = scalar_lea.sflag [#allocation4], %s120
        %s122 = sand.u32 %s50, 1
        %s123 = smul.addr %s122, 8
        %s124 = scalar_lea.vmem [#allocation5], %s123
        // Predicated region
        $region29: #{tpu_custom_call.1} parent=23 // pred_check
          %p125 = pneg %p60
        $region30: #{tpu_custom_call.1} parent=23 // pred_check_branch
          %127 = sbr.rel (%p125) target = $region32
        $region31: #{tpu_custom_call.1} parent=23 // pred_region
          %129 = vsyncadd %s121, 0
          %s130 = smul.addr %s16, 8
          %s131 = scalar_lea.hbm %s1, %s130
          %s133 = sshll.u32 %s124, 4
          %s134 = int_to_ptr.vmem [resolvable:$true] %s133
          %s135 = sshll.u32 %s131, 4
          %s136 = int_to_ptr.hbm [resolvable:$true] %s135
          %138 = dma.vmem_to_hbm [thread:$0]  %s134, 128, %s136, %s121
        $region32: #{tpu_custom_call.1} parent=23 // pred_fallthru
          _
      $region24: #{tpu_custom_call.1} parent=5 // pred_fallthru
        _
      %p139 = scmp.le.s32.totalorder 2, %s11
      // Predicated region
      $region33: #{tpu_custom_call.1} parent=5 // pred_check
        %p140 = pneg %p139
      $region34: #{tpu_custom_call.1} parent=5 // pred_check_branch
        %142 = sbr.rel (%p140) target = $region36
      $region35: #{tpu_custom_call.1} parent=5 // pred_region
        %s143 = ssub.s32 %s11, 2
        // Predicated region
        $region37: #{tpu_custom_call.1} parent=35 // pred_check
          %p144 = pneg %p66
        $region38: #{tpu_custom_call.1} parent=35 // pred_check_branch
          %146 = sbr.rel (%p144) target = $region40
        $region39: #{tpu_custom_call.1} parent=35 // pred_region
          %s147 = sand.u32 %s51, 1
          %s148 = scalar_lea.sflag [#allocation4], %s147
          %s149 = sand.u32 %s51, 1
          %s150 = smul.addr %s149, 8
          %s151 = scalar_lea.vmem [#allocation5], %s150
          %153 = dma.done %s148, 128
        $region40: #{tpu_custom_call.1} parent=35 // pred_fallthru
          _
      $region36: #{tpu_custom_call.1} parent=5 // pred_fallthru
        _
    $region6: #{tpu_custom_call.1} parent=1 // loop_footer
      %s15 = sadd.s32 1, %s11
    $region7: #{tpu_custom_call.1} parent=1 // loop_footer_branch
      %10 = sbr.rel target = $region3
    $region8: #{tpu_custom_call.1} parent=1 // loop_exit
      _
    %154 = vsyncpa [#allocation3], 1
    %s155 = scalar_lea.sflag [#allocation3], 1
    %156 = vsyncpa %s155, 1
    %157 = vsyncpa [#allocation4], 1
    %s158 = scalar_lea.sflag [#allocation4], 1
    %159 = vsyncpa %s158, 1

// kernel: tpu_custom_call.1
$region0: #{tpu_custom_call.1}
  #allocation0 [shape = 'u32[]', space=smem, size = 0x4, offset = 0x4, fixed_abs, tag = 'smem constant byte address 0x4 - core index']
  #allocation1 [shape = 'u32[72,128]{1,0:T(1,128)}', space=vmem, size = 0x9000, scoped, tag = 'internal scratch']
  %s0 = inlined_call_operand.hbm [shape: f32[16,128], index: 0, kind: input, shape index: {}]
  %s1 = inlined_call_operand.hbm [shape: f32[4,16,32], index: 1, kind: output, shape index: {0}]
  %s2 = inlined_call_operand.hbm [shape: f32[16,128], index: 2, kind: output, shape index: {1}]
  %3 = xla_tuple %s1, %s2
  %s4 = sld [smem:[#allocation0]]
  $region26: #{tpu_custom_call.1} parent=0
    _
  %s6 = ssub.s32 1, %s4
  %s7 = scalar_select 0, %s6, %s4
  $region1: #{tpu_custom_call.1} parent=0
    #allocation2 [shape = 'u8[8192]{0}', space=vmem, size = 0x2000, scoped, tag = 'input window, operand 0, single buffered']
    #allocation3 [shape = 's32[1]{0}', space=sflag, size = 0x4, scoped, tag = 'scoped memory for tpu_custom_call.1']
    #allocation4 [shape = 's32[1]{0}', space=sflag, size = 0x4, scoped, tag = 'scoped memory for tpu_custom_call.1']
    #allocation5 [shape = 'u8[32768]{0}', space=vmem, size = 0x8000, scoped, tag = 'output window, operand 0, single buffered']
    #allocation6 [shape = 'u8[8192]{0}', space=vmem, size = 0x2000, scoped, tag = 'output window, operand 1, single buffered']
    #allocation7 [shape = 's32[1]{0}', space=sflag, size = 0x4, scoped, tag = 'scoped memory for tpu_custom_call.1']
    %8 = vsyncpa [#allocation3], 0
    %9 = vsyncpa [#allocation4], 0
    %10 = vsyncpa [#allocation7], 0
    // Predicated region
    $region2: #{tpu_custom_call.1} parent=1 // pred_check
      _
    $region3: #{tpu_custom_call.1} parent=1 // pred_check_branch
      %12 = sbr.rel (0) target = $region5
    $region4: #{tpu_custom_call.1} parent=1 // pred_region
      %14 = vsyncadd [#allocation3], 0
      %s15 = sshll.u32 %s0, 4
      %s16 = int_to_ptr.hbm [resolvable:$true] %s15
      %s17 = sshll.u32 [#allocation2], 4
      %s18 = int_to_ptr.vmem [resolvable:$true] %s17
      %23 = dma.hbm_to_vmem [thread:$0]  %s16, 256, %s18, [#allocation3], 128, 128, 8
    $region5: #{tpu_custom_call.1} parent=1 // pred_fallthru
      _
    // Predicated region
    $region6: #{tpu_custom_call.1} parent=1 // pred_check
      _
    $region7: #{tpu_custom_call.1} parent=1 // pred_check_branch
      %25 = sbr.rel (0) target = $region9
    $region8: #{tpu_custom_call.1} parent=1 // pred_region
      %27 = dma.done [#allocation3], 256
    $region9: #{tpu_custom_call.1} parent=1 // pred_fallthru
      _
    %v28 = vld [vmem:[#allocation2] sm:$0xff]
    %v29 = vld [vmem:[#allocation2 + $0x8] sm:$0xff]
    %32 = vrot.lane.b32.xlu0 %v28, 96
    %v33 = vpop.permute.xlu0 %32
    %34 = vrot.lane.b32.xlu0 %v29, 96
    %v35 = vpop.permute.xlu0 %34
    %38 = vrot.lane.b32.xlu0 %v28, 64
    %v39 = vpop.permute.xlu0 %38
    %40 = vrot.lane.b32.xlu0 %v29, 64
    %v41 = vpop.permute.xlu0 %40
    %44 = vrot.lane.b32.xlu0 %v28, 32
    %v45 = vpop.permute.xlu0 %44
    %46 = vrot.lane.b32.xlu0 %v29, 32
    %v47 = vpop.permute.xlu0 %46
    %v50 = vrot.slane %v39, 4
    %vm51 = vcmask 1047556
    %v52 = vsel %vm51, %v50, %v28
    %v53 = vrot.slane %v28, 4
    %v54 = vsel %vm51, %v39, %v53
    %v56 = vunpack.c.l.s4 1983009808
    %v57 = vunpack.c.0.s8 %v56
    %v58 = vperm.slane %v52, %v57
    %v60 = vunpack.c.l.s4 1983009808
    %v61 = vunpack.c.0.s8 %v60
    %v62 = vperm.slane %v54, %v61
    %v63 = vrot.slane %v45, 4
    %v64 = vsel %vm51, %v63, %v33
    %v65 = vrot.slane %v33, 4
    %v66 = vsel %vm51, %v45, %v65
    %v68 = vunpack.c.l.s4 1983009808
    %v69 = vunpack.c.0.s8 %v68
    %v70 = vperm.slane %v64, %v69
    %v72 = vunpack.c.l.s4 1983009808
    %v73 = vunpack.c.0.s8 %v72
    %v74 = vperm.slane %v66, %v73
    %v75 = vrot.slane %v70, 4
    %v76 = vsel %vm51, %v75, %v58
    %v77 = vrot.slane %v58, 4
    %v78 = vsel %vm51, %v70, %v77
    %v80 = vunpack.c.l.s4 1934713408
    %v81 = vunpack.c.0.s8 %v80
    %v82 = vperm.slane %v76, %v81
    %v84 = vunpack.c.l.s4 1934713408
    %v85 = vunpack.c.0.s8 %v84
    %v86 = vperm.slane %v78, %v85
    %v87 = vrot.slane %v74, 4
    %v88 = vsel %vm51, %v87, %v62
    %v89 = vrot.slane %v62, 4
    %v90 = vsel %vm51, %v74, %v89
    %v92 = vunpack.c.l.s4 1934713408
    %v93 = vunpack.c.0.s8 %v92
    %v94 = vperm.slane %v88, %v93
    %v96 = vunpack.c.l.s4 1934713408
    %v97 = vunpack.c.0.s8 %v96
    %v98 = vperm.slane %v90, %v97
    %v99 = vrot.slane %v82, 4
    %v100 = vsel %vm51, 0.0, %v99
    %v101 = vrot.slane %v86, 4
    %v102 = vsel %vm51, 0.0, %v101
    %v103 = vrot.slane %v94, 4
    %v104 = vsel %vm51, 0.0, %v103
    %v105 = vrot.slane %v98, 4
    %v106 = vsel %vm51, 0.0, %v105
    %v107 = vrot.slane %v41, 4
    %v108 = vsel %vm51, %v107, %v29
    %v109 = vrot.slane %v29, 4
    %v110 = vsel %vm51, %v41, %v109
    %v112 = vunpack.c.l.s4 1983009808
    %v113 = vunpack.c.0.s8 %v112
    %v114 = vperm.slane %v108, %v113
    %v116 = vunpack.c.l.s4 1983009808
    %v117 = vunpack.c.0.s8 %v116
    %v118 = vperm.slane %v110, %v117
    %v119 = vrot.slane %v47, 4
    %v120 = vsel %vm51, %v119, %v35
    %v121 = vrot.slane %v35, 4
    %v122 = vsel %vm51, %v47, %v121
    %v124 = vunpack.c.l.s4 1983009808
    %v125 = vunpack.c.0.s8 %v124
    %v126 = vperm.slane %v120, %v125
    %v128 = vunpack.c.l.s4 1983009808
    %v129 = vunpack.c.0.s8 %v128
    %v130 = vperm.slane %v122, %v129
    %v131 = vrot.slane %v126, 4
    %v132 = vsel %vm51, %v131, %v114
    %v133 = vrot.slane %v114, 4
    %v134 = vsel %vm51, %v126, %v133
    %v136 = vunpack.c.l.s4 1934713408
    %v137 = vunpack.c.0.s8 %v136
    %v138 = vperm.slane %v132, %v137
    %v140 = vunpack.c.l.s4 1934713408
    %v141 = vunpack.c.0.s8 %v140
    %v142 = vperm.slane %v134, %v141
    %v143 = vrot.slane %v130, 4
    %v144 = vsel %vm51, %v143, %v118
    %v145 = vrot.slane %v118, 4
    %v146 = vsel %vm51, %v130, %v145
    %v148 = vunpack.c.l.s4 1934713408
    %v149 = vunpack.c.0.s8 %v148
    %v150 = vperm.slane %v144, %v149
    %v152 = vunpack.c.l.s4 1934713408
    %v153 = vunpack.c.0.s8 %v152
    %v154 = vperm.slane %v146, %v153
    %v155 = vrot.slane %v138, 4
    %v156 = vsel %vm51, 0.0, %v155
    %v157 = vrot.slane %v142, 4
    %v158 = vsel %vm51, 0.0, %v157
    %v159 = vrot.slane %v150, 4
    %v160 = vsel %vm51, 0.0, %v159
    %v161 = vrot.slane %v154, 4
    %v162 = vsel %vm51, 0.0, %v161
    %v163 = vsel %vm51, %v101, %v82
    %v165 = vunpack.c.l.s4 1983009808
    %v166 = vunpack.c.0.s8 %v165
    %v167 = vperm.slane %v163, %v166
    %v168 = vrot.slane %v102, 4
    %v169 = vsel %vm51, %v168, %v100
    %v171 = vunpack.c.l.s4 1983009808
    %v172 = vunpack.c.0.s8 %v171
    %v173 = vperm.slane %v169, %v172
    %v174 = vsel %vm51, %v105, %v94
    %v176 = vunpack.c.l.s4 1983009808
    %v177 = vunpack.c.0.s8 %v176
    %v178 = vperm.slane %v174, %v177
    %v179 = vrot.slane %v106, 4
    %v180 = vsel %vm51, %v179, %v104
    %v182 = vunpack.c.l.s4 1983009808
    %v183 = vunpack.c.0.s8 %v182
    %v184 = vperm.slane %v180, %v183
    %v185 = vrot.slane %v173, 4
    %v186 = vsel %vm51, %v185, %v167
    %v187 = vrot.slane %v167, 4
    %v188 = vsel %vm51, %v173, %v187
    %v190 = vunpack.c.l.s4 1934713408
    %v191 = vunpack.c.0.s8 %v190
    %v192 = vperm.slane %v186, %v191
    %v194 = vunpack.c.l.s4 1934713408
    %v195 = vunpack.c.0.s8 %v194
    %v196 = vperm.slane %v188, %v195
    %v197 = vrot.slane %v184, 4
    %v198 = vsel %vm51, %v197, %v178
    %v199 = vrot.slane %v178, 4
    %v200 = vsel %vm51, %v184, %v199
    %v202 = vunpack.c.l.s4 1934713408
    %v203 = vunpack.c.0.s8 %v202
    %v204 = vperm.slane %v198, %v203
    %v206 = vunpack.c.l.s4 1934713408
    %v207 = vunpack.c.0.s8 %v206
    %v208 = vperm.slane %v200, %v207
    %v209 = vrot.slane %v204, 4
    %v210 = vsel %vm51, %v209, %v192
    %v211 = vrot.slane %v192, 4
    %v212 = vsel %vm51, %v204, %v211
    %v213 = vrot.slane %v208, 4
    %v214 = vsel %vm51, %v213, %v196
    %v215 = vrot.slane %v196, 4
    %v216 = vsel %vm51, %v208, %v215
    %v217 = vsel %vm51, %v157, %v138
    %v219 = vunpack.c.l.s4 1983009808
    %v220 = vunpack.c.0.s8 %v219
    %v221 = vperm.slane %v217, %v220
    %v222 = vrot.slane %v158, 4
    %v223 = vsel %vm51, %v222, %v156
    %v225 = vunpack.c.l.s4 1983009808
    %v226 = vunpack.c.0.s8 %v225
    %v227 = vperm.slane %v223, %v226
    %v228 = vsel %vm51, %v161, %v150
    %v230 = vunpack.c.l.s4 1983009808
    %v231 = vunpack.c.0.s8 %v230
    %v232 = vperm.slane %v228, %v231
    %v233 = vrot.slane %v162, 4
    %v234 = vsel %vm51, %v233, %v160
    %v236 = vunpack.c.l.s4 1983009808
    %v237 = vunpack.c.0.s8 %v236
    %v238 = vperm.slane %v234, %v237
    %v239 = vrot.slane %v227, 4
    %v240 = vsel %vm51, %v239, %v221
    %v241 = vrot.slane %v221, 4
    %v242 = vsel %vm51, %v227, %v241
    %v244 = vunpack.c.l.s4 1934713408
    %v245 = vunpack.c.0.s8 %v244
    %v246 = vperm.slane %v240, %v245
    %v248 = vunpack.c.l.s4 1934713408
    %v249 = vunpack.c.0.s8 %v248
    %v250 = vperm.slane %v242, %v249
    %v251 = vrot.slane %v238, 4
    %v252 = vsel %vm51, %v251, %v232
    %v253 = vrot.slane %v232, 4
    %v254 = vsel %vm51, %v238, %v253
    %v256 = vunpack.c.l.s4 1934713408
    %v257 = vunpack.c.0.s8 %v256
    %v258 = vperm.slane %v252, %v257
    %v260 = vunpack.c.l.s4 1934713408
    %v261 = vunpack.c.0.s8 %v260
    %v262 = vperm.slane %v254, %v261
    %v263 = vrot.slane %v258, 4
    %v264 = vsel %vm51, %v263, %v246
    %v265 = vrot.slane %v246, 4
    %v266 = vsel %vm51, %v258, %v265
    %v267 = vrot.slane %v262, 4
    %v268 = vsel %vm51, %v267, %v250
    %v269 = vrot.slane %v250, 4
    %v270 = vsel %vm51, %v262, %v269
    %vm271 = vcmask 261120
    %272 = vst.msk [vmem:[#allocation5] sm:$0xff] %vm271, %v210
    %273 = vst.msk [vmem:[#allocation5 + $0x8] sm:$0xff] %vm271, %v264
    %274 = vst.msk [vmem:[#allocation5 + $0x10] sm:$0xff] %vm271, %v212
    %275 = vst.msk [vmem:[#allocation5 + $0x18] sm:$0xff] %vm271, %v266
    %276 = vst.msk [vmem:[#allocation5 + $0x20] sm:$0xff] %vm271, %v214
    %277 = vst.msk [vmem:[#allocation5 + $0x28] sm:$0xff] %vm271, %v268
    %278 = vst.msk [vmem:[#allocation5 + $0x30] sm:$0xff] %vm271, %v216
    %279 = vst.msk [vmem:[#allocation5 + $0x38] sm:$0xff] %vm271, %v270
    %v280 = vsel %vm271, %v210, 0.0
    %281 = vadd.xlane.f32.xlu0 %v280
    %v282 = vpop.xlane.xlu0 %281
    %v283 = vsel %vm271, %v264, 0.0
    %284 = vadd.xlane.f32.xlu0 %v283
    %v285 = vpop.xlane.xlu0 %284
    %v286 = vsel %vm271, %v212, 0.0
    %287 = vadd.xlane.f32.xlu0 %v286
    %v288 = vpop.xlane.xlu0 %287
    %v289 = vsel %vm271, %v266, 0.0
    %290 = vadd.xlane.f32.xlu0 %v289
    %v291 = vpop.xlane.xlu0 %290
    %v292 = vsel %vm271, %v214, 0.0
    %293 = vadd.xlane.f32.xlu0 %v292
    %v294 = vpop.xlane.xlu0 %293
    %v295 = vsel %vm271, %v268, 0.0
    %296 = vadd.xlane.f32.xlu0 %v295
    %v297 = vpop.xlane.xlu0 %296
    %v298 = vsel %vm271, %v216, 0.0
    %299 = vadd.xlane.f32.xlu0 %v298
    %v300 = vpop.xlane.xlu0 %299
    %v301 = vsel %vm271, %v270, 0.0
    %302 = vadd.xlane.f32.xlu0 %v301
    %v303 = vpop.xlane.xlu0 %302
    %v304 = vrcp.pop 32.0
    %v305 = vmul.f32 32.0, %v304
    %v306 = vsub.f32 1.0, %v305
    %v307 = vmul.f32 %v304, %v306
    %v308 = vadd.f32 %v304, %v307
    %vm309 = vweird.f32 %v304
    %v310 = vsel %vm309, %v304, %v308
    %v311 = vmul.f32 %v282, %v310
    %v312 = vmul.f32 %v285, %v310
    %v313 = vmul.f32 %v288, %v310
    %v314 = vmul.f32 %v291, %v310
    %v315 = vmul.f32 %v294, %v310
    %v316 = vmul.f32 %v297, %v310
    %v317 = vmul.f32 %v300, %v310
    %v318 = vmul.f32 %v303, %v310
    %v319 = vsub.f32 %v210, %v311
    %v320 = vsub.f32 %v264, %v312
    %v321 = vsub.f32 %v212, %v313
    %v322 = vsub.f32 %v266, %v314
    %v323 = vsub.f32 %v214, %v315
    %v324 = vsub.f32 %v268, %v316
    %v325 = vsub.f32 %v216, %v317
    %v326 = vsub.f32 %v270, %v318
    %v327 = vrot.slane %v323, 4
    %v328 = vsel %vm51, %v327, %v319
    %v329 = vrot.slane %v319, 4
    %v330 = vsel %vm51, %v323, %v329
    %v332 = vunpack.c.l.s4 1983009808
    %v333 = vunpack.c.0.s8 %v332
    %v334 = vperm.slane %v328, %v333
    %v336 = vunpack.c.l.s4 1983009808
    %v337 = vunpack.c.0.s8 %v336
    %v338 = vperm.slane %v330, %v337
    %v339 = vrot.slane %v325, 4
    %v340 = vsel %vm51, %v339, %v321
    %v341 = vrot.slane %v321, 4
    %v342 = vsel %vm51, %v325, %v341
    %v344 = vunpack.c.l.s4 1983009808
    %v345 = vunpack.c.0.s8 %v344
    %v346 = vperm.slane %v340, %v345
    %v348 = vunpack.c.l.s4 1983009808
    %v349 = vunpack.c.0.s8 %v348
    %v350 = vperm.slane %v342, %v349
    %v351 = vrot.slane %v346, 4
    %v352 = vsel %vm51, %v351, %v334
    %v353 = vrot.slane %v334, 4
    %v354 = vsel %vm51, %v346, %v353
    %v356 = vunpack.c.l.s4 1934713408
    %v357 = vunpack.c.0.s8 %v356
    %v358 = vperm.slane %v352, %v357
    %v360 = vunpack.c.l.s4 1934713408
    %v361 = vunpack.c.0.s8 %v360
    %v362 = vperm.slane %v354, %v361
    %v363 = vrot.slane %v350, 4
    %v364 = vsel %vm51, %v363, %v338
    %v365 = vrot.slane %v338, 4
    %v366 = vsel %vm51, %v350, %v365
    %v368 = vunpack.c.l.s4 1934713408
    %v369 = vunpack.c.0.s8 %v368
    %v370 = vperm.slane %v364, %v369
    %v372 = vunpack.c.l.s4 1934713408
    %v373 = vunpack.c.0.s8 %v372
    %v374 = vperm.slane %v366, %v373
    %v375 = vrot.slane %v358, 4
    %v376 = vsel %vm51, 0.0, %v375
    %v377 = vrot.slane %v362, 4
    %v378 = vsel %vm51, 0.0, %v377
    %v379 = vrot.slane %v370, 4
    %v380 = vsel %vm51, 0.0, %v379
    %v381 = vrot.slane %v374, 4
    %v382 = vsel %vm51, 0.0, %v381
    %v383 = vrot.slane %v324, 4
    %v384 = vsel %vm51, %v383, %v320
    %v385 = vrot.slane %v320, 4
    %v386 = vsel %vm51, %v324, %v385
    %v388 = vunpack.c.l.s4 1983009808
    %v389 = vunpack.c.0.s8 %v388
    %v390 = vperm.slane %v384, %v389
    %v392 = vunpack.c.l.s4 1983009808
    %v393 = vunpack.c.0.s8 %v392
    %v394 = vperm.slane %v386, %v393
    %v395 = vrot.slane %v326, 4
    %v396 = vsel %vm51, %v395, %v322
    %v397 = vrot.slane %v322, 4
    %v398 = vsel %vm51, %v326, %v397
    %v400 = vunpack.c.l.s4 1983009808
    %v401 = vunpack.c.0.s8 %v400
    %v402 = vperm.slane %v396, %v401
    %v404 = vunpack.c.l.s4 1983009808
    %v405 = vunpack.c.0.s8 %v404
    %v406 = vperm.slane %v398, %v405
    %v407 = vrot.slane %v402, 4
    %v408 = vsel %vm51, %v407, %v390
    %v409 = vrot.slane %v390, 4
    %v410 = vsel %vm51, %v402, %v409
    %v412 = vunpack.c.l.s4 1934713408
    %v413 = vunpack.c.0.s8 %v412
    %v414 = vperm.slane %v408, %v413
    %v416 = vunpack.c.l.s4 1934713408
    %v417 = vunpack.c.0.s8 %v416
    %v418 = vperm.slane %v410, %v417
    %v419 = vrot.slane %v406, 4
    %v420 = vsel %vm51, %v419, %v394
    %v421 = vrot.slane %v394, 4
    %v422 = vsel %vm51, %v406, %v421
    %v424 = vunpack.c.l.s4 1934713408
    %v425 = vunpack.c.0.s8 %v424
    %v426 = vperm.slane %v420, %v425
    %v428 = vunpack.c.l.s4 1934713408
    %v429 = vunpack.c.0.s8 %v428
    %v430 = vperm.slane %v422, %v429
    %v431 = vrot.slane %v414, 4
    %v432 = vsel %vm51, 0.0, %v431
    %v433 = vrot.slane %v418, 4
    %v434 = vsel %vm51, 0.0, %v433
    %v435 = vrot.slane %v426, 4
    %v436 = vsel %vm51, 0.0, %v435
    %v437 = vrot.slane %v430, 4
    %v438 = vsel %vm51, 0.0, %v437
    %v439 = vsel %vm51, %v377, %v358
    %v441 = vunpack.c.l.s4 1983009808
    %v442 = vunpack.c.0.s8 %v441
    %v443 = vperm.slane %v439, %v442
    %v444 = vrot.slane %v378, 4
    %v445 = vsel %vm51, %v444, %v376
    %v447 = vunpack.c.l.s4 1983009808
    %v448 = vunpack.c.0.s8 %v447
    %v449 = vperm.slane %v445, %v448
    %v450 = vsel %vm51, %v381, %v370
    %v452 = vunpack.c.l.s4 1983009808
    %v453 = vunpack.c.0.s8 %v452
    %v454 = vperm.slane %v450, %v453
    %v455 = vrot.slane %v382, 4
    %v456 = vsel %vm51, %v455, %v380
    %v458 = vunpack.c.l.s4 1983009808
    %v459 = vunpack.c.0.s8 %v458
    %v460 = vperm.slane %v456, %v459
    %v461 = vrot.slane %v449, 4
    %v462 = vsel %vm51, %v461, %v443
    %v463 = vrot.slane %v443, 4
    %v464 = vsel %vm51, %v449, %v463
    %v466 = vunpack.c.l.s4 1934713408
    %v467 = vunpack.c.0.s8 %v466
    %v468 = vperm.slane %v462, %v467
    %v470 = vunpack.c.l.s4 1934713408
    %v471 = vunpack.c.0.s8 %v470
    %v472 = vperm.slane %v464, %v471
    %v473 = vrot.slane %v460, 4
    %v474 = vsel %vm51, %v473, %v454
    %v475 = vrot.slane %v454, 4
    %v476 = vsel %vm51, %v460, %v475
    %v478 = vunpack.c.l.s4 1934713408
    %v479 = vunpack.c.0.s8 %v478
    %v480 = vperm.slane %v474, %v479
    %v482 = vunpack.c.l.s4 1934713408
    %v483 = vunpack.c.0.s8 %v482
    %v484 = vperm.slane %v476, %v483
    %v485 = vrot.slane %v480, 4
    %v486 = vsel %vm51, %v485, %v468
    %v487 = vrot.slane %v468, 4
    %v488 = vsel %vm51, %v480, %v487
    %v489 = vrot.slane %v484, 4
    %v490 = vsel %vm51, %v489, %v472
    %v491 = vrot.slane %v472, 4
    %v492 = vsel %vm51, %v484, %v491
    %v493 = vsel %vm51, %v433, %v414
    %v495 = vunpack.c.l.s4 1983009808
    %v496 = vunpack.c.0.s8 %v495
    %v497 = vperm.slane %v493, %v496
    %v498 = vrot.slane %v434, 4
    %v499 = vsel %vm51, %v498, %v432
    %v501 = vunpack.c.l.s4 1983009808
    %v502 = vunpack.c.0.s8 %v501
    %v503 = vperm.slane %v499, %v502
    %v504 = vsel %vm51, %v437, %v426
    %v506 = vunpack.c.l.s4 1983009808
    %v507 = vunpack.c.0.s8 %v506
    %v508 = vperm.slane %v504, %v507
    %v509 = vrot.slane %v438, 4
    %v510 = vsel %vm51, %v509, %v436
    %v512 = vunpack.c.l.s4 1983009808
    %v513 = vunpack.c.0.s8 %v512
    %v514 = vperm.slane %v510, %v513
    %v515 = vrot.slane %v503, 4
    %v516 = vsel %vm51, %v515, %v497
    %v517 = vrot.slane %v497, 4
    %v518 = vsel %vm51, %v503, %v517
    %v520 = vunpack.c.l.s4 1934713408
    %v521 = vunpack.c.0.s8 %v520
    %v522 = vperm.slane %v516, %v521
    %v524 = vunpack.c.l.s4 1934713408
    %v525 = vunpack.c.0.s8 %v524
    %v526 = vperm.slane %v518, %v525
    %v527 = vrot.slane %v514, 4
    %v528 = vsel %vm51, %v527, %v508
    %v529 = vrot.slane %v508, 4
    %v530 = vsel %vm51, %v514, %v529
    %v532 = vunpack.c.l.s4 1934713408
    %v533 = vunpack.c.0.s8 %v532
    %v534 = vperm.slane %v528, %v533
    %v536 = vunpack.c.l.s4 1934713408
    %v537 = vunpack.c.0.s8 %v536
    %v538 = vperm.slane %v530, %v537
    %v539 = vrot.slane %v534, 4
    %v540 = vsel %vm51, %v539, %v522
    %v541 = vrot.slane %v522, 4
    %v542 = vsel %vm51, %v534, %v541
    %v543 = vrot.slane %v538, 4
    %v544 = vsel %vm51, %v543, %v526
    %v545 = vrot.slane %v526, 4
    %v546 = vsel %vm51, %v538, %v545
    %549 = vrot.lane.b32.xlu0 %v488, 32
    %v550 = vpop.permute.xlu0 %549
    %551 = vrot.lane.b32.xlu0 %v542, 32
    %v552 = vpop.permute.xlu0 %551
    %557 = vrot.lane.b32.xlu0 %v490, 64
    %v558 = vpop.permute.xlu0 %557
    %559 = vrot.lane.b32.xlu0 %v544, 64
    %v560 = vpop.permute.xlu0 %559
    %565 = vrot.lane.b32.xlu0 %v492, 96
    %v566 = vpop.permute.xlu0 %565
    %567 = vrot.lane.b32.xlu0 %v546, 96
    %v568 = vpop.permute.xlu0 %567
    %v571 = vsel %vm271, %v486, %v550
    %v572 = vsel %vm271, %v540, %v552
    %vm573 = vcmask 523264
    %v574 = vsel %vm573, %v571, %v558
    %v575 = vsel %vm573, %v572, %v560
    %vm576 = vcmask 785408
    %v577 = vsel %vm576, %v574, %v566
    %v578 = vsel %vm576, %v575, %v568
    %579 = vst [vmem:[#allocation6] sm:$0xff] %v577
    %580 = vst [vmem:[#allocation6 + $0x8] sm:$0xff] %v578
    // Predicated region
    $region10: #{tpu_custom_call.1} parent=1 // pred_check
      _
    $region11: #{tpu_custom_call.1} parent=1 // pred_check_branch
      %582 = sbr.rel (0) target = $region13
    $region12: #{tpu_custom_call.1} parent=1 // pred_region
      %584 = vsyncadd [#allocation4], 0
      %s585 = sshll.u32 [#allocation5], 4
      %s586 = int_to_ptr.vmem [resolvable:$true] %s585
      %s587 = sshll.u32 %s1, 4
      %s588 = int_to_ptr.hbm [resolvable:$true] %s587
      %593 = dma.vmem_to_hbm [thread:$0]  %s586, 1024, %s588, [#allocation4], 128, 128, 8
    $region13: #{tpu_custom_call.1} parent=1 // pred_fallthru
      _
    // Predicated region
    $region14: #{tpu_custom_call.1} parent=1 // pred_check
      _
    $region15: #{tpu_custom_call.1} parent=1 // pred_check_branch
      %595 = sbr.rel (0) target = $region17
    $region16: #{tpu_custom_call.1} parent=1 // pred_region
      %597 = vsyncadd [#allocation7], 0
      %s598 = sshll.u32 [#allocation6], 4
      %s599 = int_to_ptr.vmem [resolvable:$true] %s598
      %s600 = sshll.u32 %s2, 4
      %s601 = int_to_ptr.hbm [resolvable:$true] %s600
      %606 = dma.vmem_to_hbm [thread:$0]  %s599, 256, %s601, [#allocation7], 128, 128, 8
    $region17: #{tpu_custom_call.1} parent=1 // pred_fallthru
      _
    // Predicated region
    $region18: #{tpu_custom_call.1} parent=1 // pred_check
      _
    $region19: #{tpu_custom_call.1} parent=1 // pred_check_branch
      %608 = sbr.rel (0) target = $region21
    $region20: #{tpu_custom_call.1} parent=1 // pred_region
      %610 = dma.done [#allocation4], 1024
    $region21: #{tpu_custom_call.1} parent=1 // pred_fallthru
      _
    // Predicated region
    $region22: #{tpu_custom_call.1} parent=1 // pred_check
      _
    $region23: #{tpu_custom_call.1} parent=1 // pred_check_branch
      %612 = sbr.rel (0) target = $region25
    $region24: #{tpu_custom_call.1} parent=1 // pred_region
      %614 = dma.done [#allocation7], 256
    $region25: #{tpu_custom_call.1} parent=1 // pred_fallthru
      _
    %615 = vsyncpa [#allocation3], 1
    %616 = vsyncpa [#allocation4], 1
    %617 = vsyncpa [#allocation7], 1

// kernel: tpu_custom_call.1
$region0: #{tpu_custom_call.1}
  #allocation0 [shape = 'u32[]', space=smem, size = 0x4, offset = 0x4, fixed_abs, tag = 'smem constant byte address 0x4 - core index']
  #allocation1 [shape = 'u32[72,128]{1,0:T(1,128)}', space=vmem, size = 0x9000, scoped, tag = 'internal scratch']
  #allocation2 [shape = 'bf16[4,128,32]{2,1,0:T(8,128)(2,1)}', space=vmem, size = 0x20000, scoped, tag = 'scratch operand']
  #allocation3 [shape = 'bf16[4,128,32]{2,1,0:T(8,128)(2,1)}', space=vmem, size = 0x20000, scoped, tag = 'scratch operand']
  %s0 = inlined_call_operand.hbm [shape: f32[2,128,128], index: 0, kind: input, shape index: {}]
  %s1 = inlined_call_operand.hbm [shape: bf16[128,128], index: 1, kind: input, shape index: {}]
  %s2 = inlined_call_operand.hbm [shape: bf16[128,256], index: 2, kind: input, shape index: {}]
  %s3 = inlined_call_operand.hbm [shape: bf16[128,128], index: 3, kind: input, shape index: {}]
  %s4 = inlined_call_operand.vmem [shape: f32[1,128], index: 4, kind: input, shape index: {}]
  %s5 = inlined_call_operand.vmem [shape: f32[1,128], index: 5, kind: input, shape index: {}]
  %s6 = inlined_call_operand.vmem [shape: f32[1,128], index: 6, kind: input, shape index: {}]
  %s7 = inlined_call_operand.hbm [shape: bf16[128,256], index: 7, kind: input, shape index: {}]
  %s8 = inlined_call_operand.vmem [shape: f32[1,256], index: 8, kind: input, shape index: {}]
  %s9 = inlined_call_operand.hbm [shape: bf16[256,128], index: 9, kind: input, shape index: {}]
  %s10 = inlined_call_operand.vmem [shape: f32[1,128], index: 10, kind: input, shape index: {}]
  %s11 = inlined_call_operand.vmem [shape: f32[1,128], index: 11, kind: input, shape index: {}]
  %s12 = inlined_call_operand.vmem [shape: f32[1,128], index: 12, kind: input, shape index: {}]
  %s13 = inlined_call_operand.hbm [shape: f32[2,128,128], index: 13, kind: output, shape index: {}]
  %s14 = sld [smem:[#allocation0]]
  $region113: #{tpu_custom_call.1} parent=0
    _
  %s16 = ssub.s32 1, %s14
  %s17 = scalar_select 0, %s16, %s14
  $region1: #{tpu_custom_call.1} parent=0
    #allocation4 [shape = 'u8[131072]{0}', space=vmem, size = 0x20000, scoped, tag = 'input window, operand 0']
    #allocation5 [shape = 's32[2]{0}', space=sflag, size = 0x8, scoped, tag = 'scoped memory for tpu_custom_call.1']
    #allocation6 [shape = 's32[2]{0}', space=sflag, size = 0x8, scoped, tag = 'scoped memory for tpu_custom_call.1']
    #allocation7 [shape = 'u8[32768]{0}', space=vmem, size = 0x8000, scoped, tag = 'input window, operand 1, single buffered']
    #allocation8 [shape = 's32[1]{0}', space=sflag, size = 0x4, scoped, tag = 'scoped memory for tpu_custom_call.1']
    #allocation9 [shape = 'u8[65536]{0}', space=vmem, size = 0x10000, scoped, tag = 'input window, operand 2, single buffered']
    #allocation10 [shape = 'u8[32768]{0}', space=vmem, size = 0x8000, scoped, tag = 'input window, operand 3, single buffered']
    #allocation11 [shape = 's32[1]{0}', space=sflag, size = 0x4, scoped, tag = 'scoped memory for tpu_custom_call.1']
    #allocation12 [shape = 'u8[65536]{0}', space=vmem, size = 0x10000, scoped, tag = 'input window, operand 7, single buffered']
    #allocation13 [shape = 'u8[65536]{0}', space=vmem, size = 0x10000, scoped, tag = 'input window, operand 9, single buffered']
    #allocation14 [shape = 's32[1]{0}', space=sflag, size = 0x4, scoped, tag = 'scoped memory for tpu_custom_call.1']
    #allocation15 [shape = 'u8[65536]{0}', space=vmem, size = 0x10000, scoped, tag = 'output window, operand 0']
    %18 = vsyncpa [#allocation5], 0
    %s19 = scalar_lea.sflag [#allocation5], 1
    %20 = vsyncpa %s19, 0
    %21 = vsyncpa [#allocation8], 0
    %22 = vsyncpa [#allocation11], 0
    %23 = vsyncpa [#allocation14], 0
    %24 = vsyncpa [#allocation6], 0
    %s25 = scalar_lea.sflag [#allocation6], 1
    %26 = vsyncpa %s25, 0
    loop: start=0, step=1, limit=6
    $region2: #{tpu_custom_call.1} parent=1 // loop_pre_header
      _
    $region3: #{tpu_custom_call.1} parent=1 // loop_header
      %s28 = sphi 0, %s32
      %p29 = scmp.ge.s32.totalorder %s28, 6
      %s35 = sphi 0, %s47
      %s36 = sphi 0, %s43
      %s37 = sphi 0, %s35
      %s38 = sphi 0, %s36
      %s39 = sphi 0, %s37
      %s40 = sphi 0, %s38
      %s50 = sphi 0, %s52
      %s53 = sphi 0, %s50
      %s54 = sphi 0, %s53
      %s70 = sphi 0, %s54
      %s74 = sphi 0, %s74
      %s76 = sphi 0, %s74
      %s77 = sphi 0, %s76
      %s91 = sphi 0, %s77
      %s95 = sphi 0, %s95
      %s97 = sphi 0, %s95
      %s98 = sphi 0, %s97
      %s112 = sphi 0, %s98
      %s116 = sphi 0, %s116
      %s118 = sphi 0, %s116
      %s119 = sphi 0, %s118
      %s133 = sphi 0, %s119
      %s137 = sphi 0, %s137
      %s139 = sphi 0, %s137
      %s140 = sphi 0, %s139
      %s154 = sphi 0, %s140
      %s158 = sphi 0, %s158
      %s160 = sphi 0, %s158
      %s161 = sphi 0, %s160
      %s175 = sphi 0, %s161
      %s179 = sphi 0, %s179
      %s181 = sphi 0, %s179
      %s182 = sphi 0, %s181
      %s196 = sphi 0, %s182
      %s200 = sphi 0, %s200
      %s202 = sphi 0, %s200
      %s203 = sphi 0, %s202
      %s217 = sphi 0, %s203
      %s221 = sphi 0, %s221
      %s223 = sphi 0, %s221
      %s224 = sphi 0, %s223
      %s238 = sphi 0, %s224
      %s242 = sphi 0, %s242
      %s244 = sphi 0, %s242
      %s245 = sphi 0, %s244
      %s259 = sphi 0, %s245
      %s263 = sphi 0, %s263
      %s265 = sphi 0, %s263
      %s266 = sphi 0, %s265
      %s280 = sphi 0, %s266
      %s284 = sphi 0, %s284
      %s286 = sphi 0, %s284
      %s287 = sphi 0, %s286
      %s301 = sphi 0, %s287
      %s305 = sphi 0, %s305
      %s307 = sphi 0, %s305
      %s308 = sphi 0, %s307
      %s322 = sphi 0, %s308
      %s330 = sphi 0, %s332
      %s333 = sphi 0, %s330
      %s334 = sphi 0, %s333
      %s350 = sphi 0, %s334
    $region4: #{tpu_custom_call.1} parent=1 // loop_header_branch
      %31 = sbr.rel (%p29) target = $region8
    $region5: #{tpu_custom_call.1} parent=1 // loop_body
      %s33 = ssub.s32 %s28, 1
      %s34 = ssub.s32 %s28, 2
      %s41 = sadd.s32 1, %s36
      %p42 = scmp.ge.s32.totalorder %s41, 2
      %s43 = scalar_select %p42, 0, %s41
      %s44 = sadd.s32 1, %s35
      %s45 = scalar_select %p42, %s44, %s35
      %p46 = scmp.ge.s32.totalorder %s45, 2
      %s47 = scalar_select %p46, 0, %s45
      %s48 = ssub.s32 %s35, %s47
      %p49 = scmp.eq.s32.totalorder %s48, 0
      %s51 = sadd.s32 %s50, 1
      %s52 = scalar_select %p49, %s50, %s51
      %p55 = pneg %p49
      %p56 = scmp.eq.s32.totalorder %s28, 3
      %p57 = por %p55, %p56
      %p58 = scmp.ne.s32.totalorder %s50, %s53
      %p59 = scmp.eq.s32.totalorder %s28, 0
      %p60 = por %p58, %p59
      %p61 = scmp.ne.s32.totalorder %s50, %s53
      %p62 = scmp.eq.s32.totalorder %s33, 3
      %p63 = por %p61, %p62
      %p64 = scmp.ne.s32.totalorder %s53, %s54
      %p65 = scmp.eq.s32.totalorder %s33, 0
      %p66 = por %p64, %p65
      %p67 = scmp.ne.s32.totalorder %s53, %s54
      %p68 = scmp.eq.s32.totalorder %s34, 3
      %p69 = por %p67, %p68
      %p71 = scmp.ne.s32.totalorder %s54, %s70
      %p72 = scmp.eq.s32.totalorder %s34, 0
      %p73 = por %p71, %p72
      %s75 = sadd.s32 %s74, 1
      %p78 = scmp.eq.s32.totalorder %s28, 3
      %p79 = scmp.ne.s32.totalorder %s74, %s76
      %p80 = scmp.eq.s32.totalorder %s28, 0
      %p81 = por %p79, %p80
      %p82 = scmp.ne.s32.totalorder %s74, %s76
      %p83 = scmp.eq.s32.totalorder %s33, 3
      %p84 = por %p82, %p83
      %p85 = scmp.ne.s32.totalorder %s76, %s77
      %p86 = scmp.eq.s32.totalorder %s33, 0
      %p87 = por %p85, %p86
      %p88 = scmp.ne.s32.totalorder %s76, %s77
      %p89 = scmp.eq.s32.totalorder %s34, 3
      %p90 = por %p88, %p89
      %p92 = scmp.ne.s32.totalorder %s77, %s91
      %p93 = scmp.eq.s32.totalorder %s34, 0
      %p94 = por %p92, %p93
      %s96 = sadd.s32 %s95, 1
      %p99 = scmp.eq.s32.totalorder %s28, 3
      %p100 = scmp.ne.s32.totalorder %s95, %s97
      %p101 = scmp.eq.s32.totalorder %s28, 0
      %p102 = por %p100, %p101
      %p103 = scmp.ne.s32.totalorder %s95, %s97
      %p104 = scmp.eq.s32.totalorder %s33, 3
      %p105 = por %p103, %p104
      %p106 = scmp.ne.s32.totalorder %s97, %s98
      %p107 = scmp.eq.s32.totalorder %s33, 0
      %p108 = por %p106, %p107
      %p109 = scmp.ne.s32.totalorder %s97, %s98
      %p110 = scmp.eq.s32.totalorder %s34, 3
      %p111 = por %p109, %p110
      %p113 = scmp.ne.s32.totalorder %s98, %s112
      %p114 = scmp.eq.s32.totalorder %s34, 0
      %p115 = por %p113, %p114
      %s117 = sadd.s32 %s116, 1
      %p120 = scmp.eq.s32.totalorder %s28, 3
      %p121 = scmp.ne.s32.totalorder %s116, %s118
      %p122 = scmp.eq.s32.totalorder %s28, 0
      %p123 = por %p121, %p122
      %p124 = scmp.ne.s32.totalorder %s116, %s118
      %p125 = scmp.eq.s32.totalorder %s33, 3
      %p126 = por %p124, %p125
      %p127 = scmp.ne.s32.totalorder %s118, %s119
      %p128 = scmp.eq.s32.totalorder %s33, 0
      %p129 = por %p127, %p128
      %p130 = scmp.ne.s32.totalorder %s118, %s119
      %p131 = scmp.eq.s32.totalorder %s34, 3
      %p132 = por %p130, %p131
      %p134 = scmp.ne.s32.totalorder %s119, %s133
      %p135 = scmp.eq.s32.totalorder %s34, 0
      %p136 = por %p134, %p135
      %s138 = sadd.s32 %s137, 1
      %p141 = scmp.eq.s32.totalorder %s28, 3
      %p142 = scmp.ne.s32.totalorder %s137, %s139
      %p143 = scmp.eq.s32.totalorder %s28, 0
      %p144 = por %p142, %p143
      %p145 = scmp.ne.s32.totalorder %s137, %s139
      %p146 = scmp.eq.s32.totalorder %s33, 3
      %p147 = por %p145, %p146
      %p148 = scmp.ne.s32.totalorder %s139, %s140
      %p149 = scmp.eq.s32.totalorder %s33, 0
      %p150 = por %p148, %p149
      %p151 = scmp.ne.s32.totalorder %s139, %s140
      %p152 = scmp.eq.s32.totalorder %s34, 3
      %p153 = por %p151, %p152
      %p155 = scmp.ne.s32.totalorder %s140, %s154
      %p156 = scmp.eq.s32.totalorder %s34, 0
      %p157 = por %p155, %p156
      %s159 = sadd.s32 %s158, 1
      %p162 = scmp.eq.s32.totalorder %s28, 3
      %p163 = scmp.ne.s32.totalorder %s158, %s160
      %p164 = scmp.eq.s32.totalorder %s28, 0
      %p165 = por %p163, %p164
      %p166 = scmp.ne.s32.totalorder %s158, %s160
      %p167 = scmp.eq.s32.totalorder %s33, 3
      %p168 = por %p166, %p167
      %p169 = scmp.ne.s32.totalorder %s160, %s161
      %p170 = scmp.eq.s32.totalorder %s33, 0
      %p171 = por %p169, %p170
      %p172 = scmp.ne.s32.totalorder %s160, %s161
      %p173 = scmp.eq.s32.totalorder %s34, 3
      %p174 = por %p172, %p173
      %p176 = scmp.ne.s32.totalorder %s161, %s175
      %p177 = scmp.eq.s32.totalorder %s34, 0
      %p178 = por %p176, %p177
      %s180 = sadd.s32 %s179, 1
      %p183 = scmp.eq.s32.totalorder %s28, 3
      %p184 = scmp.ne.s32.totalorder %s179, %s181
      %p185 = scmp.eq.s32.totalorder %s28, 0
      %p186 = por %p184, %p185
      %p187 = scmp.ne.s32.totalorder %s179, %s181
      %p188 = scmp.eq.s32.totalorder %s33, 3
      %p189 = por %p187, %p188
      %p190 = scmp.ne.s32.totalorder %s181, %s182
      %p191 = scmp.eq.s32.totalorder %s33, 0
      %p192 = por %p190, %p191
      %p193 = scmp.ne.s32.totalorder %s181, %s182
      %p194 = scmp.eq.s32.totalorder %s34, 3
      %p195 = por %p193, %p194
      %p197 = scmp.ne.s32.totalorder %s182, %s196
      %p198 = scmp.eq.s32.totalorder %s34, 0
      %p199 = por %p197, %p198
      %s201 = sadd.s32 %s200, 1
      %p204 = scmp.eq.s32.totalorder %s28, 3
      %p205 = scmp.ne.s32.totalorder %s200, %s202
      %p206 = scmp.eq.s32.totalorder %s28, 0
      %p207 = por %p205, %p206
      %p208 = scmp.ne.s32.totalorder %s200, %s202
      %p209 = scmp.eq.s32.totalorder %s33, 3
      %p210 = por %p208, %p209
      %p211 = scmp.ne.s32.totalorder %s202, %s203
      %p212 = scmp.eq.s32.totalorder %s33, 0
      %p213 = por %p211, %p212
      %p214 = scmp.ne.s32.totalorder %s202, %s203
      %p215 = scmp.eq.s32.totalorder %s34, 3
      %p216 = por %p214, %p215
      %p218 = scmp.ne.s32.totalorder %s203, %s217
      %p219 = scmp.eq.s32.totalorder %s34, 0
      %p220 = por %p218, %p219
      %s222 = sadd.s32 %s221, 1
      %p225 = scmp.eq.s32.totalorder %s28, 3
      %p226 = scmp.ne.s32.totalorder %s221, %s223
      %p227 = scmp.eq.s32.totalorder %s28, 0
      %p228 = por %p226, %p227
      %p229 = scmp.ne.s32.totalorder %s221, %s223
      %p230 = scmp.eq.s32.totalorder %s33, 3
      %p231 = por %p229, %p230
      %p232 = scmp.ne.s32.totalorder %s223, %s224
      %p233 = scmp.eq.s32.totalorder %s33, 0
      %p234 = por %p232, %p233
      %p235 = scmp.ne.s32.totalorder %s223, %s224
      %p236 = scmp.eq.s32.totalorder %s34, 3
      %p237 = por %p235, %p236
      %p239 = scmp.ne.s32.totalorder %s224, %s238
      %p240 = scmp.eq.s32.totalorder %s34, 0
      %p241 = por %p239, %p240
      %s243 = sadd.s32 %s242, 1
      %p246 = scmp.eq.s32.totalorder %s28, 3
      %p247 = scmp.ne.s32.totalorder %s242, %s244
      %p248 = scmp.eq.s32.totalorder %s28, 0
      %p249 = por %p247, %p248
      %p250 = scmp.ne.s32.totalorder %s242, %s244
      %p251 = scmp.eq.s32.totalorder %s33, 3
      %p252 = por %p250, %p251
      %p253 = scmp.ne.s32.totalorder %s244, %s245
      %p254 = scmp.eq.s32.totalorder %s33, 0
      %p255 = por %p253, %p254
      %p256 = scmp.ne.s32.totalorder %s244, %s245
      %p257 = scmp.eq.s32.totalorder %s34, 3
      %p258 = por %p256, %p257
      %p260 = scmp.ne.s32.totalorder %s245, %s259
      %p261 = scmp.eq.s32.totalorder %s34, 0
      %p262 = por %p260, %p261
      %s264 = sadd.s32 %s263, 1
      %p267 = scmp.eq.s32.totalorder %s28, 3
      %p268 = scmp.ne.s32.totalorder %s263, %s265
      %p269 = scmp.eq.s32.totalorder %s28, 0
      %p270 = por %p268, %p269
      %p271 = scmp.ne.s32.totalorder %s263, %s265
      %p272 = scmp.eq.s32.totalorder %s33, 3
      %p273 = por %p271, %p272
      %p274 = scmp.ne.s32.totalorder %s265, %s266
      %p275 = scmp.eq.s32.totalorder %s33, 0
      %p276 = por %p274, %p275
      %p277 = scmp.ne.s32.totalorder %s265, %s266
      %p278 = scmp.eq.s32.totalorder %s34, 3
      %p279 = por %p277, %p278
      %p281 = scmp.ne.s32.totalorder %s266, %s280
      %p282 = scmp.eq.s32.totalorder %s34, 0
      %p283 = por %p281, %p282
      %s285 = sadd.s32 %s284, 1
      %p288 = scmp.eq.s32.totalorder %s28, 3
      %p289 = scmp.ne.s32.totalorder %s284, %s286
      %p290 = scmp.eq.s32.totalorder %s28, 0
      %p291 = por %p289, %p290
      %p292 = scmp.ne.s32.totalorder %s284, %s286
      %p293 = scmp.eq.s32.totalorder %s33, 3
      %p294 = por %p292, %p293
      %p295 = scmp.ne.s32.totalorder %s286, %s287
      %p296 = scmp.eq.s32.totalorder %s33, 0
      %p297 = por %p295, %p296
      %p298 = scmp.ne.s32.totalorder %s286, %s287
      %p299 = scmp.eq.s32.totalorder %s34, 3
      %p300 = por %p298, %p299
      %p302 = scmp.ne.s32.totalorder %s287, %s301
      %p303 = scmp.eq.s32.totalorder %s34, 0
      %p304 = por %p302, %p303
      %s306 = sadd.s32 %s305, 1
      %p309 = scmp.eq.s32.totalorder %s28, 3
      %p310 = scmp.ne.s32.totalorder %s305, %s307
      %p311 = scmp.eq.s32.totalorder %s28, 0
      %p312 = por %p310, %p311
      %p313 = scmp.ne.s32.totalorder %s305, %s307
      %p314 = scmp.eq.s32.totalorder %s33, 3
      %p315 = por %p313, %p314
      %p316 = scmp.ne.s32.totalorder %s307, %s308
      %p317 = scmp.eq.s32.totalorder %s33, 0
      %p318 = por %p316, %p317
      %p319 = scmp.ne.s32.totalorder %s307, %s308
      %p320 = scmp.eq.s32.totalorder %s34, 3
      %p321 = por %p319, %p320
      %p323 = scmp.ne.s32.totalorder %s308, %s322
      %p324 = scmp.eq.s32.totalorder %s34, 0
      %p325 = por %p323, %p324
      %s326 = ssub.s32 %s35, %s47
      %s327 = ssub.s32 %s36, %s43
      %s328 = sor.u32 %s326, %s327
      %p329 = scmp.eq.s32.totalorder %s328, 0
      %s331 = sadd.s32 %s330, 1
      %s332 = scalar_select %p329, %s330, %s331
      %p335 = pneg %p329
      %p336 = scmp.eq.s32.totalorder %s28, 3
      %p337 = por %p335, %p336
      %p338 = scmp.ne.s32.totalorder %s330, %s333
      %p339 = scmp.eq.s32.totalorder %s28, 0
      %p340 = por %p338, %p339
      %p341 = scmp.ne.s32.totalorder %s330, %s333
      %p342 = scmp.eq.s32.totalorder %s33, 3
      %p343 = por %p341, %p342
      %p344 = scmp.ne.s32.totalorder %s333, %s334
      %p345 = scmp.eq.s32.totalorder %s33, 0
      %p346 = por %p344, %p345
      %p347 = scmp.ne.s32.totalorder %s333, %s334
      %p348 = scmp.eq.s32.totalorder %s34, 3
      %p349 = por %p347, %p348
      %p351 = scmp.ne.s32.totalorder %s334, %s350
      %p352 = scmp.eq.s32.totalorder %s34, 0
      %p353 = por %p351, %p352
      %p354 = scmp.le.s32.totalorder 1, %s28
      %p355 = scmp.lt.s32.totalorder %s28, 5
      %p356 = pnand %p354, %p355
      %p357 = pneg %p356
      // Predicated region
      $region9: #{tpu_custom_call.1} parent=5 // pred_check
        _
      $region10: #{tpu_custom_call.1} parent=5 // pred_check_branch
        %359 = sbr.rel (%p356) target = $region12
      $region11: #{tpu_custom_call.1} parent=5 // pred_region
        %s360 = ssub.s32 %s28, 1
        // Predicated region
        $region13: #{tpu_custom_call.1} parent=11 // pred_check
          %p361 = pneg %p87
        $region14: #{tpu_custom_call.1} parent=11 // pred_check_branch
          %363 = sbr.rel (%p361) target = $region16
        $region15: #{tpu_custom_call.1} parent=11 // pred_region
          %365 = vsyncadd [#allocation8], 0
          %s366 = sshll.u32 %s1, 4
          %s367 = int_to_ptr.hbm [resolvable:$true] %s366
          %s368 = sshll.u32 [#allocation7], 4
          %s369 = int_to_ptr.vmem [resolvable:$true] %s368
          %374 = dma.hbm_to_vmem [thread:$0]  %s367, 1024, %s369, [#allocation8], 64, 64, 4
        $region16: #{tpu_custom_call.1} parent=11 // pred_fallthru
          _
        // Predicated region
        $region17: #{tpu_custom_call.1} parent=11 // pred_check
          %p375 = pneg %p108
        $region18: #{tpu_custom_call.1} parent=11 // pred_check_branch
          %377 = sbr.rel (%p375) target = $region20
        $region19: #{tpu_custom_call.1} parent=11 // pred_region
          %379 = vsyncadd [#allocation8], 0
          %s380 = sshll.u32 %s2, 4
          %s381 = int_to_ptr.hbm [resolvable:$true] %s380
          %s382 = sshll.u32 [#allocation9], 4
          %s383 = int_to_ptr.vmem [resolvable:$true] %s382
          %388 = dma.hbm_to_vmem [thread:$0]  %s381, 2048, %s383, [#allocation8], 128, 128, 8
        $region20: #{tpu_custom_call.1} parent=11 // pred_fallthru
          _
        // Predicated region
        $region21: #{tpu_custom_call.1} parent=11 // pred_check
          %p389 = pneg %p129
        $region22: #{tpu_custom_call.1} parent=11 // pred_check_branch
          %391 = sbr.rel (%p389) target = $region24
        $region23: #{tpu_custom_call.1} parent=11 // pred_region
          %393 = vsyncadd [#allocation11], 0
          %s394 = sshll.u32 %s3, 4
          %s395 = int_to_ptr.hbm [resolvable:$true] %s394
          %s396 = sshll.u32 [#allocation10], 4
          %s397 = int_to_ptr.vmem [resolvable:$true] %s396
          %402 = dma.hbm_to_vmem [thread:$0]  %s395, 1024, %s397, [#allocation11], 64, 64, 4
        $region24: #{tpu_custom_call.1} parent=11 // pred_fallthru
          _
        // Predicated region
        $region25: #{tpu_custom_call.1} parent=11 // pred_check
          %p403 = pneg %p150
        $region26: #{tpu_custom_call.1} parent=11 // pred_check_branch
          %405 = sbr.rel (%p403) target = $region28
        $region27: #{tpu_custom_call.1} parent=11 // pred_region
          _
        $region28: #{tpu_custom_call.1} parent=11 // pred_fallthru
          _
        // Predicated region
        $region29: #{tpu_custom_call.1} parent=11 // pred_check
          %p406 = pneg %p171
        $region30: #{tpu_custom_call.1} parent=11 // pred_check_branch
          %408 = sbr.rel (%p406) target = $region32
        $region31: #{tpu_custom_call.1} parent=11 // pred_region
          _
        $region32: #{tpu_custom_call.1} parent=11 // pred_fallthru
          _
        // Predicated region
        $region33: #{tpu_custom_call.1} parent=11 // pred_check
          %p409 = pneg %p192
        $region34: #{tpu_custom_call.1} parent=11 // pred_check_branch
          %411 = sbr.rel (%p409) target = $region36
        $region35: #{tpu_custom_call.1} parent=11 // pred_region
          _
        $region36: #{tpu_custom_call.1} parent=11 // pred_fallthru
          _
        // Predicated region
        $region37: #{tpu_custom_call.1} parent=11 // pred_check
          %p412 = pneg %p213
        $region38: #{tpu_custom_call.1} parent=11 // pred_check_branch
          %414 = sbr.rel (%p412) target = $region40
        $region39: #{tpu_custom_call.1} parent=11 // pred_region
          %416 = vsyncadd [#allocation11], 0
          %s417 = sshll.u32 %s7, 4
          %s418 = int_to_ptr.hbm [resolvable:$true] %s417
          %s419 = sshll.u32 [#allocation12], 4
          %s420 = int_to_ptr.vmem [resolvable:$true] %s419
          %425 = dma.hbm_to_vmem [thread:$0]  %s418, 2048, %s420, [#allocation11], 128, 128, 8
        $region40: #{tpu_custom_call.1} parent=11 // pred_fallthru
          _
        // Predicated region
        $region41: #{tpu_custom_call.1} parent=11 // pred_check
          %p426 = pneg %p234
        $region42: #{tpu_custom_call.1} parent=11 // pred_check_branch
          %428 = sbr.rel (%p426) target = $region44
        $region43: #{tpu_custom_call.1} parent=11 // pred_region
          _
        $region44: #{tpu_custom_call.1} parent=11 // pred_fallthru
          _
        // Predicated region
        $region45: #{tpu_custom_call.1} parent=11 // pred_check
          %p429 = pneg %p255
        $region46: #{tpu_custom_call.1} parent=11 // pred_check_branch
          %431 = sbr.rel (%p429) target = $region48
        $region47: #{tpu_custom_call.1} parent=11 // pred_region
          %433 = vsyncadd [#allocation14], 0
          %s434 = sshll.u32 %s9, 4
          %s435 = int_to_ptr.hbm [resolvable:$true] %s434
          %s436 = sshll.u32 [#allocation13], 4
          %s437 = int_to_ptr.vmem [resolvable:$true] %s436
          %442 = dma.hbm_to_vmem [thread:$0]  %s435, 2048, %s437, [#allocation14], 64, 64, 4
        $region48: #{tpu_custom_call.1} parent=11 // pred_fallthru
          _
        // Predicated region
        $region49: #{tpu_custom_call.1} parent=11 // pred_check
          %p443 = pneg %p276
        $region50: #{tpu_custom_call.1} parent=11 // pred_check_branch
          %445 = sbr.rel (%p443) target = $region52
        $region51: #{tpu_custom_call.1} parent=11 // pred_region
          _
        $region52: #{tpu_custom_call.1} parent=11 // pred_fallthru
          _
        // Predicated region
        $region53: #{tpu_custom_call.1} parent=11 // pred_check
          %p446 = pneg %p297
        $region54: #{tpu_custom_call.1} parent=11 // pred_check_branch
          %448 = sbr.rel (%p446) target = $region56
        $region55: #{tpu_custom_call.1} parent=11 // pred_region
          _
        $region56: #{tpu_custom_call.1} parent=11 // pred_fallthru
          _
        // Predicated region
        $region57: #{tpu_custom_call.1} parent=11 // pred_check
          %p449 = pneg %p318
        $region58: #{tpu_custom_call.1} parent=11 // pred_check_branch
          %451 = sbr.rel (%p449) target = $region60
        $region59: #{tpu_custom_call.1} parent=11 // pred_region
          _
        $region60: #{tpu_custom_call.1} parent=11 // pred_fallthru
          _
      $region12: #{tpu_custom_call.1} parent=5 // pred_fallthru
        _
      %p452 = scmp.lt.s32.totalorder %s28, 4
      // Predicated region
      $region61: #{tpu_custom_call.1} parent=5 // pred_check
        %p453 = pneg %p452
      $region62: #{tpu_custom_call.1} parent=5 // pred_check_branch
        %455 = sbr.rel (%p453) target = $region64
      $region63: #{tpu_custom_call.1} parent=5 // pred_region
        // Predicated region
        $region65: #{tpu_custom_call.1} parent=63 // pred_check
          %p456 = pneg %p60
        $region66: #{tpu_custom_call.1} parent=63 // pred_check_branch
          %458 = sbr.rel (%p456) target = $region68
        $region67: #{tpu_custom_call.1} parent=63 // pred_region
          %s459 = sand.u32 %s50, 1
          %s460 = scalar_lea.sflag [#allocation5], %s459
          %s461 = sand.u32 %s50, 1
          %s462 = smul.addr %s461, 128
          %s463 = scalar_lea.vmem [#allocation4], %s462
          %465 = vsyncadd %s460, 0
          %s466 = smul.addr %s35, 16
          %s467 = smul.addr %s466, 8
          %s468 = scalar_lea.hbm %s0, %s467
          %s469 = sshll.u32 %s468, 4
          %s470 = int_to_ptr.hbm [resolvable:$true] %s469
          %s471 = sshll.u32 %s463, 4
          %s472 = int_to_ptr.vmem [resolvable:$true] %s471
          %477 = dma.hbm_to_vmem [thread:$0]  %s470, 2048, %s472, %s460, 128, 128, 8
        $region68: #{tpu_custom_call.1} parent=63 // pred_fallthru
          _
      $region64: #{tpu_custom_call.1} parent=5 // pred_fallthru
        _
      %p478 = scmp.le.s32.totalorder 1, %s28
      %p479 = scmp.lt.s32.totalorder %s28, 5
      %p480 = pnand %p478, %p479
      %p481 = pneg %p480
      // Predicated region
      $region69: #{tpu_custom_call.1} parent=5 // pred_check
        _
      $region70: #{tpu_custom_call.1} parent=5 // pred_check_branch
        %483 = sbr.rel (%p480) target = $region72
      $region71: #{tpu_custom_call.1} parent=5 // pred_region
        %s484 = ssub.s32 %s28, 1
        %s485 = sand.u32 %s53, 1
        %s486 = scalar_lea.sflag [#allocation5], %s485
        %s487 = sand.u32 %s53, 1
        %s488 = smul.addr %s487, 128
        %s489 = scalar_lea.vmem [#allocation4], %s488
        // Predicated region
        $region73: #{tpu_custom_call.1} parent=71 // pred_check
          %p490 = pneg %p66
        $region74: #{tpu_custom_call.1} parent=71 // pred_check_branch
          %492 = sbr.rel (%p490) target = $region76
        $region75: #{tpu_custom_call.1} parent=71 // pred_region
          %494 = dma.done %s486, 2048
        $region76: #{tpu_custom_call.1} parent=71 // pred_fallthru
          _
        // Predicated region
        $region77: #{tpu_custom_call.1} parent=71 // pred_check
          %p495 = pneg %p87
        $region78: #{tpu_custom_call.1} parent=71 // pred_check_branch
          %497 = sbr.rel (%p495) target = $region80
        $region79: #{tpu_custom_call.1} parent=71 // pred_region
          %499 = dma.done [#allocation8], 1024
        $region80: #{tpu_custom_call.1} parent=71 // pred_fallthru
          _
        // Predicated region
        $region81: #{tpu_custom_call.1} parent=71 // pred_check
          %p500 = pneg %p108
        $region82: #{tpu_custom_call.1} parent=71 // pred_check_branch
          %502 = sbr.rel (%p500) target = $region84
        $region83: #{tpu_custom_call.1} parent=71 // pred_region
          %504 = dma.done [#allocation8], 2048
        $region84: #{tpu_custom_call.1} parent=71 // pred_fallthru
          _
        // Predicated region
        $region85: #{tpu_custom_call.1} parent=71 // pred_check
          %p505 = pneg %p129
        $region86: #{tpu_custom_call.1} parent=71 // pred_check_branch
          %507 = sbr.rel (%p505) target = $region88
        $region87: #{tpu_custom_call.1} parent=71 // pred_region
          %509 = dma.done [#allocation11], 1024
        $region88: #{tpu_custom_call.1} parent=71 // pred_fallthru
          _
        // Predicated region
        $region89: #{tpu_custom_call.1} parent=71 // pred_check
          %p510 = pneg %p213
        $region90: #{tpu_custom_call.1} parent=71 // pred_check_branch
          %512 = sbr.rel (%p510) target = $region92
        $region91: #{tpu_custom_call.1} parent=71 // pred_region
          %514 = dma.done [#allocation11], 2048
        $region92: #{tpu_custom_call.1} parent=71 // pred_fallthru
          _
        // Predicated region
        $region93: #{tpu_custom_call.1} parent=71 // pred_check
          %p515 = pneg %p255
        $region94: #{tpu_custom_call.1} parent=71 // pred_check_branch
          %517 = sbr.rel (%p515) target = $region96
        $region95: #{tpu_custom_call.1} parent=71 // pred_region
          %519 = dma.done [#allocation14], 2048
        $region96: #{tpu_custom_call.1} parent=71 // pred_fallthru
          _
        %s520 = sand.u32 %s53, 1
        %s521 = scalar_lea.sflag [#allocation5], %s520
        %s522 = sand.u32 %s53, 1
        %s523 = smul.addr %s522, 128
        %s524 = scalar_lea.vmem [#allocation4], %s523
        %p525 = pneg %p66
        %p526 = pneg %p63
        %p527 = pneg %p87
        %p528 = pneg %p84
        %p529 = pneg %p108
        %p530 = pneg %p105
        %p531 = pneg %p129
        %p532 = pneg %p126
        %p533 = pneg %p150
        %p534 = pneg %p147
        %p535 = pneg %p171
        %p536 = pneg %p168
        %p537 = pneg %p192
        %p538 = pneg %p189
        %p539 = pneg %p213
        %p540 = pneg %p210
        %p541 = pneg %p234
        %p542 = pneg %p231
        %p543 = pneg %p255
        %p544 = pneg %p252
        %p545 = pneg %p276
        %p546 = pneg %p273
        %p547 = pneg %p297
        %p548 = pneg %p294
        %p549 = pneg %p318
        %p550 = pneg %p315
        %p551 = pneg %p346
        %p552 = pneg %p343
        %s553 = sand.u32 %s333, 1
        %s554 = scalar_lea.sflag [#allocation6], %s553
        %s555 = sand.u32 %s333, 1
        %s556 = smul.addr %s555, 64
        %s557 = scalar_lea.vmem [#allocation15], %s556
        %s558 = smul.u32 8, %s38
        %p559 = scmp.eq.s32.totalorder %s38, 0
        // Predicated region
        $region97: #{tpu_custom_call.1} parent=71 // pred_check
          %p560 = pneg %p559
        $region98: #{tpu_custom_call.1} parent=71 // pred_check_branch
          %562 = sbr.rel (%p560) target = $region100
        $region99: #{tpu_custom_call.1} parent=71 // pred_region
          %v563 = vld [vmem:[%s489] sm:$0xff]
          %v564 = vld [vmem:[%s489 + $0x8] sm:$0xff]
          %v565 = vld [vmem:[%s489 + $0x10] sm:$0xff]
          %v566 = vld [vmem:[%s489 + $0x18] sm:$0xff]
          %v567 = vld [vmem:[%s489 + $0x20] sm:$0xff]
          %v568 = vld [vmem:[%s489 + $0x28] sm:$0xff]
          %v569 = vld [vmem:[%s489 + $0x30] sm:$0xff]
          %v570 = vld [vmem:[%s489 + $0x38] sm:$0xff]
          %v571 = vld [vmem:[%s489 + $0x40] sm:$0xff]
          %v572 = vld [vmem:[%s489 + $0x48] sm:$0xff]
          %v573 = vld [vmem:[%s489 + $0x50] sm:$0xff]
          %v574 = vld [vmem:[%s489 + $0x58] sm:$0xff]
          %v575 = vld [vmem:[%s489 + $0x60] sm:$0xff]
          %v576 = vld [vmem:[%s489 + $0x68] sm:$0xff]
          %v577 = vld [vmem:[%s489 + $0x70] sm:$0xff]
          %v578 = vld [vmem:[%s489 + $0x78] sm:$0xff]
          %v579 = vpack.c.bf16 %v564, %v563
          %v580 = vpack.c.bf16 %v566, %v565
          %v581 = vpack.c.bf16 %v568, %v567
          %v582 = vpack.c.bf16 %v570, %v569
          %v583 = vpack.c.bf16 %v572, %v571
          %v584 = vpack.c.bf16 %v574, %v573
          %v585 = vpack.c.bf16 %v576, %v575
          %v586 = vpack.c.bf16 %v578, %v577
          %v587 = vld [vmem:[#allocation9] sm:$0xff]
          %v588 = vld [vmem:[#allocation9 + $0x8] sm:$0xff]
          %v589 = vld [vmem:[#allocation9 + $0x10] sm:$0xff]
          %v590 = vld [vmem:[#allocation9 + $0x18] sm:$0xff]
          %v591 = vld [vmem:[#allocation9 + $0x20] sm:$0xff]
          %v592 = vld [vmem:[#allocation9 + $0x28] sm:$0xff]
          %v593 = vld [vmem:[#allocation9 + $0x30] sm:$0xff]
          %v594 = vld [vmem:[#allocation9 + $0x38] sm:$0xff]
          %v595 = vld [vmem:[#allocation9 + $0x40] sm:$0xff]
          %v596 = vld [vmem:[#allocation9 + $0x48] sm:$0xff]
          %v597 = vld [vmem:[#allocation9 + $0x50] sm:$0xff]
          %v598 = vld [vmem:[#allocation9 + $0x58] sm:$0xff]
          %v599 = vld [vmem:[#allocation9 + $0x60] sm:$0xff]
          %v600 = vld [vmem:[#allocation9 + $0x68] sm:$0xff]
          %v601 = vld [vmem:[#allocation9 + $0x70] sm:$0xff]
          %v602 = vld [vmem:[#allocation9 + $0x78] sm:$0xff]
          %v619 = vunpack.c.l.b16 %v587
          %v620 = vunpack.c.h.b16 %v587
          %v621 = vunpack.c.l.b16 %v588
          %v622 = vunpack.c.h.b16 %v588
          %v623 = vunpack.c.l.b16 %v589
          %v624 = vunpack.c.h.b16 %v589
          %v625 = vunpack.c.l.b16 %v590
          %v626 = vunpack.c.h.b16 %v590
          %v627 = vunpack.c.l.b16 %v591
          %v628 = vunpack.c.h.b16 %v591
          %v629 = vunpack.c.l.b16 %v592
          %v630 = vunpack.c.h.b16 %v592
          %v631 = vunpack.c.l.b16 %v593
          %v632 = vunpack.c.h.b16 %v593
          %v633 = vunpack.c.l.b16 %v594
          %v634 = vunpack.c.h.b16 %v594
          %v635 = vunpack.c.l.b16 %v595
          %v636 = vunpack.c.h.b16 %v595
          %v637 = vunpack.c.l.b16 %v596
          %v638 = vunpack.c.h.b16 %v596
          %v639 = vunpack.c.l.b16 %v597
          %v640 = vunpack.c.h.b16 %v597
          %v641 = vunpack.c.l.b16 %v598
          %v642 = vunpack.c.h.b16 %v598
          %v643 = vunpack.c.l.b16 %v599
          %v644 = vunpack.c.h.b16 %v599
          %v645 = vunpack.c.l.b16 %v600
          %v646 = vunpack.c.h.b16 %v600
          %v647 = vunpack.c.l.b16 %v601
          %v648 = vunpack.c.h.b16 %v601
          %v649 = vunpack.c.l.b16 %v602
          %v650 = vunpack.c.h.b16 %v602
          %v651 = vpack.c.b16 %v621, %v619
          %v652 = vpack.c.b16 %v622, %v620
          %v653 = vpack.c.b16 %v625, %v623
          %v654 = vpack.c.b16 %v626, %v624
          %v655 = vpack.c.b16 %v629, %v627
          %v656 = vpack.c.b16 %v630, %v628
          %v657 = vpack.c.b16 %v633, %v631
          %v658 = vpack.c.b16 %v634, %v632
          %v659 = vpack.c.b16 %v637, %v635
          %v660 = vpack.c.b16 %v638, %v636
          %v661 = vpack.c.b16 %v641, %v639
          %v662 = vpack.c.b16 %v642, %v640
          %v663 = vpack.c.b16 %v645, %v643
          %v664 = vpack.c.b16 %v646, %v644
          %v665 = vpack.c.b16 %v649, %v647
          %v666 = vpack.c.b16 %v650, %v648
          %683 = vmatpush.bf16.msra.mxu0 %v665
          %684 = vmatpush.bf16.msra.mxu0 %v663
          %685 = vmatpush.bf16.msra.mxu0 %v661
          %686 = vmatpush.bf16.msra.mxu0 %v659
          %687 = vmatpush.bf16.msra.mxu0 %v657
          %688 = vmatpush.bf16.msra.mxu0 %v655
          %689 = vmatpush.bf16.msra.mxu0 %v653
          %690 = vmatpush.bf16.msra.mxu0 %v651
          %691 = vmatmul.bf16.gmra.mxu0 %v579
          %v692 = vpop.f32.mrf.mxu0
          %v693 = vadd.f32 0.0, %v692
          %v694 = vpop.f32.mrf.mxu0
          %v695 = vadd.f32 0.0, %v694
          %696 = vmatmul.bf16.gmra.mxu0 %v580
          %v697 = vpop.f32.mrf.mxu0
          %v698 = vadd.f32 0.0, %v697
          %v699 = vpop.f32.mrf.mxu0
          %v700 = vadd.f32 0.0, %v699
          %701 = vmatmul.bf16.gmra.mxu0 %v581
          %v702 = vpop.f32.mrf.mxu0
          %v703 = vadd.f32 0.0, %v702
          %v704 = vpop.f32.mrf.mxu0
          %v705 = vadd.f32 0.0, %v704
          %706 = vmatmul.bf16.gmra.mxu0 %v582
          %v707 = vpop.f32.mrf.mxu0
          %v708 = vadd.f32 0.0, %v707
          %v709 = vpop.f32.mrf.mxu0
          %v710 = vadd.f32 0.0, %v709
          %711 = vmatmul.bf16.gmra.mxu0 %v583
          %v712 = vpop.f32.mrf.mxu0
          %v713 = vadd.f32 0.0, %v712
          %v714 = vpop.f32.mrf.mxu0
          %v715 = vadd.f32 0.0, %v714
          %716 = vmatmul.bf16.gmra.mxu0 %v584
          %v717 = vpop.f32.mrf.mxu0
          %v718 = vadd.f32 0.0, %v717
          %v719 = vpop.f32.mrf.mxu0
          %v720 = vadd.f32 0.0, %v719
          %721 = vmatmul.bf16.gmra.mxu0 %v585
          %v722 = vpop.f32.mrf.mxu0
          %v723 = vadd.f32 0.0, %v722
          %v724 = vpop.f32.mrf.mxu0
          %v725 = vadd.f32 0.0, %v724
          %726 = vmatmul.bf16.gmra.mxu0 %v586
          %v727 = vpop.f32.mrf.mxu0
          %v728 = vadd.f32 0.0, %v727
          %v729 = vpop.f32.mrf.mxu0
          %v730 = vadd.f32 0.0, %v729
          %731 = vdwg.mxu0
          %732 = vmatpush.bf16.msra.mxu0 %v666
          %733 = vmatpush.bf16.msra.mxu0 %v664
          %734 = vmatpush.bf16.msra.mxu0 %v662
          %735 = vmatpush.bf16.msra.mxu0 %v660
          %736 = vmatpush.bf16.msra.mxu0 %v658
          %737 = vmatpush.bf16.msra.mxu0 %v656
          %738 = vmatpush.bf16.msra.mxu0 %v654
          %739 = vmatpush.bf16.msra.mxu0 %v652
          %740 = vmatmul.bf16.gmra.mxu0 %v579
          %v741 = vpop.f32.mrf.mxu0
          %v742 = vadd.f32 0.0, %v741
          %v743 = vpop.f32.mrf.mxu0
          %v744 = vadd.f32 0.0, %v743
          %745 = vmatmul.bf16.gmra.mxu0 %v580
          %v746 = vpop.f32.mrf.mxu0
          %v747 = vadd.f32 0.0, %v746
          %v748 = vpop.f32.mrf.mxu0
          %v749 = vadd.f32 0.0, %v748
          %750 = vmatmul.bf16.gmra.mxu0 %v581
          %v751 = vpop.f32.mrf.mxu0
          %v752 = vadd.f32 0.0, %v751
          %v753 = vpop.f32.mrf.mxu0
          %v754 = vadd.f32 0.0, %v753
          %755 = vmatmul.bf16.gmra.mxu0 %v582
          %v756 = vpop.f32.mrf.mxu0
          %v757 = vadd.f32 0.0, %v756
          %v758 = vpop.f32.mrf.mxu0
          %v759 = vadd.f32 0.0, %v758
          %760 = vmatmul.bf16.gmra.mxu0 %v583
          %v761 = vpop.f32.mrf.mxu0
          %v762 = vadd.f32 0.0, %v761
          %v763 = vpop.f32.mrf.mxu0
          %v764 = vadd.f32 0.0, %v763
          %765 = vmatmul.bf16.gmra.mxu0 %v584
          %v766 = vpop.f32.mrf.mxu0
          %v767 = vadd.f32 0.0, %v766
          %v768 = vpop.f32.mrf.mxu0
          %v769 = vadd.f32 0.0, %v768
          %770 = vmatmul.bf16.gmra.mxu0 %v585
          %v771 = vpop.f32.mrf.mxu0
          %v772 = vadd.f32 0.0, %v771
          %v773 = vpop.f32.mrf.mxu0
          %v774 = vadd.f32 0.0, %v773
          %775 = vmatmul.bf16.gmra.mxu0 %v586
          %v776 = vpop.f32.mrf.mxu0
          %v777 = vadd.f32 0.0, %v776
          %v778 = vpop.f32.mrf.mxu0
          %v779 = vadd.f32 0.0, %v778
          %780 = vdwg.mxu0
          %v781 = vpack.c.bf16 %v742, %v693
          %v782 = vpack.c.bf16 %v744, %v695
          %v783 = vpack.c.bf16 %v747, %v698
          %v784 = vpack.c.bf16 %v749, %v700
          %v785 = vpack.c.bf16 %v752, %v703
          %v786 = vpack.c.bf16 %v754, %v705
          %v787 = vpack.c.bf16 %v757, %v708
          %v788 = vpack.c.bf16 %v759, %v710
          %v789 = vpack.c.bf16 %v762, %v713
          %v790 = vpack.c.bf16 %v764, %v715
          %v791 = vpack.c.bf16 %v767, %v718
          %v792 = vpack.c.bf16 %v769, %v720
          %v793 = vpack.c.bf16 %v772, %v723
          %v794 = vpack.c.bf16 %v774, %v725
          %v795 = vpack.c.bf16 %v777, %v728
          %v796 = vpack.c.bf16 %v779, %v730
          %813 = vrot.lane.b32.xlu0 %v781, 96
          %v814 = vpop.permute.xlu0 %813
          %815 = vrot.lane.b32.xlu0 %v782, 96
          %v816 = vpop.permute.xlu0 %815
          %817 = vrot.lane.b32.xlu0 %v783, 96
          %v818 = vpop.permute.xlu0 %817
          %819 = vrot.lane.b32.xlu0 %v784, 96
          %v820 = vpop.permute.xlu0 %819
          %821 = vrot.lane.b32.xlu0 %v785, 96
          %v822 = vpop.permute.xlu0 %821
          %823 = vrot.lane.b32.xlu0 %v786, 96
          %v824 = vpop.permute.xlu0 %823
          %825 = vrot.lane.b32.xlu0 %v787, 96
          %v826 = vpop.permute.xlu0 %825
          %827 = vrot.lane.b32.xlu0 %v788, 96
          %v828 = vpop.permute.xlu0 %827
          %829 = vrot.lane.b32.xlu0 %v789, 96
          %v830 = vpop.permute.xlu0 %829
          %831 = vrot.lane.b32.xlu0 %v790, 96
          %v832 = vpop.permute.xlu0 %831
          %833 = vrot.lane.b32.xlu0 %v791, 96
          %v834 = vpop.permute.xlu0 %833
          %835 = vrot.lane.b32.xlu0 %v792, 96
          %v836 = vpop.permute.xlu0 %835
          %837 = vrot.lane.b32.xlu0 %v793, 96
          %v838 = vpop.permute.xlu0 %837
          %839 = vrot.lane.b32.xlu0 %v794, 96
          %v840 = vpop.permute.xlu0 %839
          %841 = vrot.lane.b32.xlu0 %v795, 96
          %v842 = vpop.permute.xlu0 %841
          %843 = vrot.lane.b32.xlu0 %v796, 96
          %v844 = vpop.permute.xlu0 %843
          %861 = vrot.lane.b32.xlu0 %v781, 64
          %v862 = vpop.permute.xlu0 %861
          %863 = vrot.lane.b32.xlu0 %v782, 64
          %v864 = vpop.permute.xlu0 %863
          %865 = vrot.lane.b32.xlu0 %v783, 64
          %v866 = vpop.permute.xlu0 %865
          %867 = vrot.lane.b32.xlu0 %v784, 64
          %v868 = vpop.permute.xlu0 %867
          %869 = vrot.lane.b32.xlu0 %v785, 64
          %v870 = vpop.permute.xlu0 %869
          %871 = vrot.lane.b32.xlu0 %v786, 64
          %v872 = vpop.permute.xlu0 %871
          %873 = vrot.lane.b32.xlu0 %v787, 64
          %v874 = vpop.permute.xlu0 %873
          %875 = vrot.lane.b32.xlu0 %v788, 64
          %v876 = vpop.permute.xlu0 %875
          %877 = vrot.lane.b32.xlu0 %v789, 64
          %v878 = vpop.permute.xlu0 %877
          %879 = vrot.lane.b32.xlu0 %v790, 64
          %v880 = vpop.permute.xlu0 %879
          %881 = vrot.lane.b32.xlu0 %v791, 64
          %v882 = vpop.permute.xlu0 %881
          %883 = vrot.lane.b32.xlu0 %v792, 64
          %v884 = vpop.permute.xlu0 %883
          %885 = vrot.lane.b32.xlu0 %v793, 64
          %v886 = vpop.permute.xlu0 %885
          %887 = vrot.lane.b32.xlu0 %v794, 64
          %v888 = vpop.permute.xlu0 %887
          %889 = vrot.lane.b32.xlu0 %v795, 64
          %v890 = vpop.permute.xlu0 %889
          %891 = vrot.lane.b32.xlu0 %v796, 64
          %v892 = vpop.permute.xlu0 %891
          %909 = vrot.lane.b32.xlu0 %v781, 32
          %v910 = vpop.permute.xlu0 %909
          %911 = vrot.lane.b32.xlu0 %v782, 32
          %v912 = vpop.permute.xlu0 %911
          %913 = vrot.lane.b32.xlu0 %v783, 32
          %v914 = vpop.permute.xlu0 %913
          %915 = vrot.lane.b32.xlu0 %v784, 32
          %v916 = vpop.permute.xlu0 %915
          %917 = vrot.lane.b32.xlu0 %v785, 32
          %v918 = vpop.permute.xlu0 %917
          %919 = vrot.lane.b32.xlu0 %v786, 32
          %v920 = vpop.permute.xlu0 %919
          %921 = vrot.lane.b32.xlu0 %v787, 32
          %v922 = vpop.permute.xlu0 %921
          %923 = vrot.lane.b32.xlu0 %v788, 32
          %v924 = vpop.permute.xlu0 %923
          %925 = vrot.lane.b32.xlu0 %v789, 32
          %v926 = vpop.permute.xlu0 %925
          %927 = vrot.lane.b32.xlu0 %v790, 32
          %v928 = vpop.permute.xlu0 %927
          %929 = vrot.lane.b32.xlu0 %v791, 32
          %v930 = vpop.permute.xlu0 %929
          %931 = vrot.lane.b32.xlu0 %v792, 32
          %v932 = vpop.permute.xlu0 %931
          %933 = vrot.lane.b32.xlu0 %v793, 32
          %v934 = vpop.permute.xlu0 %933
          %935 = vrot.lane.b32.xlu0 %v794, 32
          %v936 = vpop.permute.xlu0 %935
          %937 = vrot.lane.b32.xlu0 %v795, 32
          %v938 = vpop.permute.xlu0 %937
          %939 = vrot.lane.b32.xlu0 %v796, 32
          %v940 = vpop.permute.xlu0 %939
          %vm957 = vcmask 257024
          %958 = vst.msk [vmem:[#allocation2] sm:$0xf] %vm957, %v781
          %959 = vst.msk [vmem:[#allocation2 + $0x4] sm:$0xf] %vm957, %v782
          %960 = vst.msk [vmem:[#allocation2 + $0x8] sm:$0xf] %vm957, %v783
          %961 = vst.msk [vmem:[#allocation2 + $0xc] sm:$0xf] %vm957, %v784
          %962 = vst.msk [vmem:[#allocation2 + $0x10] sm:$0xf] %vm957, %v785
          %963 = vst.msk [vmem:[#allocation2 + $0x14] sm:$0xf] %vm957, %v786
          %964 = vst.msk [vmem:[#allocation2 + $0x18] sm:$0xf] %vm957, %v787
          %965 = vst.msk [vmem:[#allocation2 + $0x1c] sm:$0xf] %vm957, %v788
          %966 = vst.msk [vmem:[#allocation2 + $0x20] sm:$0xf] %vm957, %v789
          %967 = vst.msk [vmem:[#allocation2 + $0x24] sm:$0xf] %vm957, %v790
          %968 = vst.msk [vmem:[#allocation2 + $0x28] sm:$0xf] %vm957, %v791
          %969 = vst.msk [vmem:[#allocation2 + $0x2c] sm:$0xf] %vm957, %v792
          %970 = vst.msk [vmem:[#allocation2 + $0x30] sm:$0xf] %vm957, %v793
          %971 = vst.msk [vmem:[#allocation2 + $0x34] sm:$0xf] %vm957, %v794
          %972 = vst.msk [vmem:[#allocation2 + $0x38] sm:$0xf] %vm957, %v795
          %973 = vst.msk [vmem:[#allocation2 + $0x3c] sm:$0xf] %vm957, %v796
          %974 = vst.msk [vmem:[#allocation2 + $0x40] sm:$0xf] %vm957, %v814
          %975 = vst.msk [vmem:[#allocation2 + $0x44] sm:$0xf] %vm957, %v816
          %976 = vst.msk [vmem:[#allocation2 + $0x48] sm:$0xf] %vm957, %v818
          %977 = vst.msk [vmem:[#allocation2 + $0x4c] sm:$0xf] %vm957, %v820
          %978 = vst.msk [vmem:[#allocation2 + $0x50] sm:$0xf] %vm957, %v822
          %979 = vst.msk [vmem:[#allocation2 + $0x54] sm:$0xf] %vm957, %v824
          %980 = vst.msk [vmem:[#allocation2 + $0x58] sm:$0xf] %vm957, %v826
          %981 = vst.msk [vmem:[#allocation2 + $0x5c] sm:$0xf] %vm957, %v828
          %982 = vst.msk [vmem:[#allocation2 + $0x60] sm:$0xf] %vm957, %v830
          %983 = vst.msk [vmem:[#allocation2 + $0x64] sm:$0xf] %vm957, %v832
          %984 = vst.msk [vmem:[#allocation2 + $0x68] sm:$0xf] %vm957, %v834
          %985 = vst.msk [vmem:[#allocation2 + $0x6c] sm:$0xf] %vm957, %v836
          %986 = vst.msk [vmem:[#allocation2 + $0x70] sm:$0xf] %vm957, %v838
          %987 = vst.msk [vmem:[#allocation2 + $0x74] sm:$0xf] %vm957, %v840
          %988 = vst.msk [vmem:[#allocation2 + $0x78] sm:$0xf] %vm957, %v842
          %989 = vst.msk [vmem:[#allocation2 + $0x7c] sm:$0xf] %vm957, %v844
          %990 = vst.msk [vmem:[#allocation2 + $0x80] sm:$0xf] %vm957, %v862
          %991 = vst.msk [vmem:[#allocation2 + $0x84] sm:$0xf] %vm957, %v864
          %992 = vst.msk [vmem:[#allocation2 + $0x88] sm:$0xf] %vm957, %v866
          %993 = vst.msk [vmem:[#allocation2 + $0x8c] sm:$0xf] %vm957, %v868
          %994 = vst.msk [vmem:[#allocation2 + $0x90] sm:$0xf] %vm957, %v870
          %995 = vst.msk [vmem:[#allocation2 + $0x94] sm:$0xf] %vm957, %v872
          %996 = vst.msk [vmem:[#allocation2 + $0x98] sm:$0xf] %vm957, %v874
          %997 = vst.msk [vmem:[#allocation2 + $0x9c] sm:$0xf] %vm957, %v876
          %998 = vst.msk [vmem:[#allocation2 + $0xa0] sm:$0xf] %vm957, %v878
          %999 = vst.msk [vmem:[#allocation2 + $0xa4] sm:$0xf] %vm957, %v880
          %1000 = vst.msk [vmem:[#allocation2 + $0xa8] sm:$0xf] %vm957, %v882
          %1001 = vst.msk [vmem:[#allocation2 + $0xac] sm:$0xf] %vm957, %v884
          %1002 = vst.msk [vmem:[#allocation2 + $0xb0] sm:$0xf] %vm957, %v886
          %1003 = vst.msk [vmem:[#allocation2 + $0xb4] sm:$0xf] %vm957, %v888
          %1004 = vst.msk [vmem:[#allocation2 + $0xb8] sm:$0xf] %vm957, %v890
          %1005 = vst.msk [vmem:[#allocation2 + $0xbc] sm:$0xf] %vm957, %v892
          %1006 = vst.msk [vmem:[#allocation2 + $0xc0] sm:$0xf] %vm957, %v910
          %1007 = vst.msk [vmem:[#allocation2 + $0xc4] sm:$0xf] %vm957, %v912
          %1008 = vst.msk [vmem:[#allocation2 + $0xc8] sm:$0xf] %vm957, %v914
          %1009 = vst.msk [vmem:[#allocation2 + $0xcc] sm:$0xf] %vm957, %v916
          %1010 = vst.msk [vmem:[#allocation2 + $0xd0] sm:$0xf] %vm957, %v918
          %1011 = vst.msk [vmem:[#allocation2 + $0xd4] sm:$0xf] %vm957, %v920
          %1012 = vst.msk [vmem:[#allocation2 + $0xd8] sm:$0xf] %vm957, %v922
          %1013 = vst.msk [vmem:[#allocation2 + $0xdc] sm:$0xf] %vm957, %v924
          %1014 = vst.msk [vmem:[#allocation2 + $0xe0] sm:$0xf] %vm957, %v926
          %1015 = vst.msk [vmem:[#allocation2 + $0xe4] sm:$0xf] %vm957, %v928
          %1016 = vst.msk [vmem:[#allocation2 + $0xe8] sm:$0xf] %vm957, %v930
          %1017 = vst.msk [vmem:[#allocation2 + $0xec] sm:$0xf] %vm957, %v932
          %1018 = vst.msk [vmem:[#allocation2 + $0xf0] sm:$0xf] %vm957, %v934
          %1019 = vst.msk [vmem:[#allocation2 + $0xf4] sm:$0xf] %vm957, %v936
          %1020 = vst.msk [vmem:[#allocation2 + $0xf8] sm:$0xf] %vm957, %v938
          %1021 = vst.msk [vmem:[#allocation2 + $0xfc] sm:$0xf] %vm957, %v940
          %v1022 = vrot.slane %v781, 4
          %v1023 = vrot.slane %v782, 4
          %v1024 = vrot.slane %v783, 4
          %v1025 = vrot.slane %v784, 4
          %v1026 = vrot.slane %v785, 4
          %v1027 = vrot.slane %v786, 4
          %v1028 = vrot.slane %v787, 4
          %v1029 = vrot.slane %v788, 4
          %v1030 = vrot.slane %v789, 4
          %v1031 = vrot.slane %v790, 4
          %v1032 = vrot.slane %v791, 4
          %v1033 = vrot.slane %v792, 4
          %v1034 = vrot.slane %v793, 4
          %v1035 = vrot.slane %v794, 4
          %v1036 = vrot.slane %v795, 4
          %v1037 = vrot.slane %v796, 4
          %v1054 = vrot.slane %v814, 4
          %v1055 = vrot.slane %v816, 4
          %v1056 = vrot.slane %v818, 4
          %v1057 = vrot.slane %v820, 4
          %v1058 = vrot.slane %v822, 4
          %v1059 = vrot.slane %v824, 4
          %v1060 = vrot.slane %v826, 4
          %v1061 = vrot.slane %v828, 4
          %v1062 = vrot.slane %v830, 4
          %v1063 = vrot.slane %v832, 4
          %v1064 = vrot.slane %v834, 4
          %v1065 = vrot.slane %v836, 4
          %v1066 = vrot.slane %v838, 4
          %v1067 = vrot.slane %v840, 4
          %v1068 = vrot.slane %v842, 4
          %v1069 = vrot.slane %v844, 4
          %v1086 = vrot.slane %v862, 4
          %v1087 = vrot.slane %v864, 4
          %v1088 = vrot.slane %v866, 4
          %v1089 = vrot.slane %v868, 4
          %v1090 = vrot.slane %v870, 4
          %v1091 = vrot.slane %v872, 4
          %v1092 = vrot.slane %v874, 4
          %v1093 = vrot.slane %v876, 4
          %v1094 = vrot.slane %v878, 4
          %v1095 = vrot.slane %v880, 4
          %v1096 = vrot.slane %v882, 4
          %v1097 = vrot.slane %v884, 4
          %v1098 = vrot.slane %v886, 4
          %v1099 = vrot.slane %v888, 4
          %v1100 = vrot.slane %v890, 4
          %v1101 = vrot.slane %v892, 4
          %v1118 = vrot.slane %v910, 4
          %v1119 = vrot.slane %v912, 4
          %v1120 = vrot.slane %v914, 4
          %v1121 = vrot.slane %v916, 4
          %v1122 = vrot.slane %v918, 4
          %v1123 = vrot.slane %v920, 4
          %v1124 = vrot.slane %v922, 4
          %v1125 = vrot.slane %v924, 4
          %v1126 = vrot.slane %v926, 4
          %v1127 = vrot.slane %v928, 4
          %v1128 = vrot.slane %v930, 4
          %v1129 = vrot.slane %v932, 4
          %v1130 = vrot.slane %v934, 4
          %v1131 = vrot.slane %v936, 4
          %v1132 = vrot.slane %v938, 4
          %v1133 = vrot.slane %v940, 4
          %1150 = vst.msk [vmem:[#allocation3] sm:$0xf] %vm957, %v1022
          %1151 = vst.msk [vmem:[#allocation3 + $0x4] sm:$0xf] %vm957, %v1023
          %1152 = vst.msk [vmem:[#allocation3 + $0x8] sm:$0xf] %vm957, %v1024
          %1153 = vst.msk [vmem:[#allocation3 + $0xc] sm:$0xf] %vm957, %v1025
          %1154 = vst.msk [vmem:[#allocation3 + $0x10] sm:$0xf] %vm957, %v1026
          %1155 = vst.msk [vmem:[#allocation3 + $0x14] sm:$0xf] %vm957, %v1027
          %1156 = vst.msk [vmem:[#allocation3 + $0x18] sm:$0xf] %vm957, %v1028
          %1157 = vst.msk [vmem:[#allocation3 + $0x1c] sm:$0xf] %vm957, %v1029
          %1158 = vst.msk [vmem:[#allocation3 + $0x20] sm:$0xf] %vm957, %v1030
          %1159 = vst.msk [vmem:[#allocation3 + $0x24] sm:$0xf] %vm957, %v1031
          %1160 = vst.msk [vmem:[#allocation3 + $0x28] sm:$0xf] %vm957, %v1032
          %1161 = vst.msk [vmem:[#allocation3 + $0x2c] sm:$0xf] %vm957, %v1033
          %1162 = vst.msk [vmem:[#allocation3 + $0x30] sm:$0xf] %vm957, %v1034
          %1163 = vst.msk [vmem:[#allocation3 + $0x34] sm:$0xf] %vm957, %v1035
          %1164 = vst.msk [vmem:[#allocation3 + $0x38] sm:$0xf] %vm957, %v1036
          %1165 = vst.msk [vmem:[#allocation3 + $0x3c] sm:$0xf] %vm957, %v1037
          %1166 = vst.msk [vmem:[#allocation3 + $0x40] sm:$0xf] %vm957, %v1054
          %1167 = vst.msk [vmem:[#allocation3 + $0x44] sm:$0xf] %vm957, %v1055
          %1168 = vst.msk [vmem:[#allocation3 + $0x48] sm:$0xf] %vm957, %v1056
          %1169 = vst.msk [vmem:[#allocation3 + $0x4c] sm:$0xf] %vm957, %v1057
          %1170 = vst.msk [vmem:[#allocation3 + $0x50] sm:$0xf] %vm957, %v1058
          %1171 = vst.msk [vmem:[#allocation3 + $0x54] sm:$0xf] %vm957, %v1059
          %1172 = vst.msk [vmem:[#allocation3 + $0x58] sm:$0xf] %vm957, %v1060
          %1173 = vst.msk [vmem:[#allocation3 + $0x5c] sm:$0xf] %vm957, %v1061
          %1174 = vst.msk [vmem:[#allocation3 + $0x60] sm:$0xf] %vm957, %v1062
          %1175 = vst.msk [vmem:[#allocation3 + $0x64] sm:$0xf] %vm957, %v1063
          %1176 = vst.msk [vmem:[#allocation3 + $0x68] sm:$0xf] %vm957, %v1064
          %1177 = vst.msk [vmem:[#allocation3 + $0x6c] sm:$0xf] %vm957, %v1065
          %1178 = vst.msk [vmem:[#allocation3 + $0x70] sm:$0xf] %vm957, %v1066
          %1179 = vst.msk [vmem:[#allocation3 + $0x74] sm:$0xf] %vm957, %v1067
          %1180 = vst.msk [vmem:[#allocation3 + $0x78] sm:$0xf] %vm957, %v1068
          %1181 = vst.msk [vmem:[#allocation3 + $0x7c] sm:$0xf] %vm957, %v1069
          %1182 = vst.msk [vmem:[#allocation3 + $0x80] sm:$0xf] %vm957, %v1086
          %1183 = vst.msk [vmem:[#allocation3 + $0x84] sm:$0xf] %vm957, %v1087
          %1184 = vst.msk [vmem:[#allocation3 + $0x88] sm:$0xf] %vm957, %v1088
          %1185 = vst.msk [vmem:[#allocation3 + $0x8c] sm:$0xf] %vm957, %v1089
          %1186 = vst.msk [vmem:[#allocation3 + $0x90] sm:$0xf] %vm957, %v1090
          %1187 = vst.msk [vmem:[#allocation3 + $0x94] sm:$0xf] %vm957, %v1091
          %1188 = vst.msk [vmem:[#allocation3 + $0x98] sm:$0xf] %vm957, %v1092
          %1189 = vst.msk [vmem:[#allocation3 + $0x9c] sm:$0xf] %vm957, %v1093
          %1190 = vst.msk [vmem:[#allocation3 + $0xa0] sm:$0xf] %vm957, %v1094
          %1191 = vst.msk [vmem:[#allocation3 + $0xa4] sm:$0xf] %vm957, %v1095
          %1192 = vst.msk [vmem:[#allocation3 + $0xa8] sm:$0xf] %vm957, %v1096
          %1193 = vst.msk [vmem:[#allocation3 + $0xac] sm:$0xf] %vm957, %v1097
          %1194 = vst.msk [vmem:[#allocation3 + $0xb0] sm:$0xf] %vm957, %v1098
          %1195 = vst.msk [vmem:[#allocation3 + $0xb4] sm:$0xf] %vm957, %v1099
          %1196 = vst.msk [vmem:[#allocation3 + $0xb8] sm:$0xf] %vm957, %v1100
          %1197 = vst.msk [vmem:[#allocation3 + $0xbc] sm:$0xf] %vm957, %v1101
          %1198 = vst.msk [vmem:[#allocation3 + $0xc0] sm:$0xf] %vm957, %v1118
          %1199 = vst.msk [vmem:[#allocation3 + $0xc4] sm:$0xf] %vm957, %v1119
          %1200 = vst.msk [vmem:[#allocation3 + $0xc8] sm:$0xf] %vm957, %v1120
          %1201 = vst.msk [vmem:[#allocation3 + $0xcc] sm:$0xf] %vm957, %v1121
          %1202 = vst.msk [vmem:[#allocation3 + $0xd0] sm:$0xf] %vm957, %v1122
          %1203 = vst.msk [vmem:[#allocation3 + $0xd4] sm:$0xf] %vm957, %v1123
          %1204 = vst.msk [vmem:[#allocation3 + $0xd8] sm:$0xf] %vm957, %v1124
          %1205 = vst.msk [vmem:[#allocation3 + $0xdc] sm:$0xf] %vm957, %v1125
          %1206 = vst.msk [vmem:[#allocation3 + $0xe0] sm:$0xf] %vm957, %v1126
          %1207 = vst.msk [vmem:[#allocation3 + $0xe4] sm:$0xf] %vm957, %v1127
          %1208 = vst.msk [vmem:[#allocation3 + $0xe8] sm:$0xf] %vm957, %v1128
          %1209 = vst.msk [vmem:[#allocation3 + $0xec] sm:$0xf] %vm957, %v1129
          %1210 = vst.msk [vmem:[#allocation3 + $0xf0] sm:$0xf] %vm957, %v1130
          %1211 = vst.msk [vmem:[#allocation3 + $0xf4] sm:$0xf] %vm957, %v1131
          %1212 = vst.msk [vmem:[#allocation3 + $0xf8] sm:$0xf] %vm957, %v1132
          %1213 = vst.msk [vmem:[#allocation3 + $0xfc] sm:$0xf] %vm957, %v1133
        $region100: #{tpu_custom_call.1} parent=71 // pred_fallthru
          _
        %s1214 = smul.u32 %s38, 64
        %s1215 = scalar_lea.vmem %s489, %s1214 [#allocation4]
        %v1216 = vld [vmem:[%s1215] sm:$0xff]
        %v1217 = vld [vmem:[%s1215 + $0x8] sm:$0xff]
        %v1218 = vld [vmem:[%s1215 + $0x10] sm:$0xff]
        %v1219 = vld [vmem:[%s1215 + $0x18] sm:$0xff]
        %v1220 = vld [vmem:[%s1215 + $0x20] sm:$0xff]
        %v1221 = vld [vmem:[%s1215 + $0x28] sm:$0xff]
        %v1222 = vld [vmem:[%s1215 + $0x30] sm:$0xff]
        %v1223 = vld [vmem:[%s1215 + $0x38] sm:$0xff]
        %v1224 = vpack.c.bf16 %v1217, %v1216
        %v1225 = vpack.c.bf16 %v1219, %v1218
        %v1226 = vpack.c.bf16 %v1221, %v1220
        %v1227 = vpack.c.bf16 %v1223, %v1222
        %v1228 = vld [vmem:[#allocation7] sm:$0xf]
        %v1229 = vld [vmem:[#allocation7 + $0x4] sm:$0xf]
        %v1230 = vld [vmem:[#allocation7 + $0x8] sm:$0xf]
        %v1231 = vld [vmem:[#allocation7 + $0xc] sm:$0xf]
        %v1232 = vld [vmem:[#allocation7 + $0x10] sm:$0xf]
        %v1233 = vld [vmem:[#allocation7 + $0x14] sm:$0xf]
        %v1234 = vld [vmem:[#allocation7 + $0x18] sm:$0xf]
        %v1235 = vld [vmem:[#allocation7 + $0x1c] sm:$0xf]
        %v1236 = vld [vmem:[#allocation7 + $0x20] sm:$0xf]
        %v1237 = vld [vmem:[#allocation7 + $0x24] sm:$0xf]
        %v1238 = vld [vmem:[#allocation7 + $0x28] sm:$0xf]
        %v1239 = vld [vmem:[#allocation7 + $0x2c] sm:$0xf]
        %v1240 = vld [vmem:[#allocation7 + $0x30] sm:$0xf]
        %v1241 = vld [vmem:[#allocation7 + $0x34] sm:$0xf]
        %v1242 = vld [vmem:[#allocation7 + $0x38] sm:$0xf]
        %v1243 = vld [vmem:[#allocation7 + $0x3c] sm:$0xf]
        %v1260 = vunpack.c.l.b16 %v1228
        %v1261 = vunpack.c.l.b16 %v1229
        %v1262 = vunpack.c.l.b16 %v1230
        %v1263 = vunpack.c.l.b16 %v1231
        %v1264 = vunpack.c.l.b16 %v1232
        %v1265 = vunpack.c.l.b16 %v1233
        %v1266 = vunpack.c.l.b16 %v1234
        %v1267 = vunpack.c.l.b16 %v1235
        %v1268 = vunpack.c.l.b16 %v1236
        %v1269 = vunpack.c.l.b16 %v1237
        %v1270 = vunpack.c.l.b16 %v1238
        %v1271 = vunpack.c.l.b16 %v1239
        %v1272 = vunpack.c.l.b16 %v1240
        %v1273 = vunpack.c.l.b16 %v1241
        %v1274 = vunpack.c.l.b16 %v1242
        %v1275 = vunpack.c.l.b16 %v1243
        %v1276 = vpack.c.b16 %v1261, %v1260
        %v1277 = vpack.c.b16 %v1263, %v1262
        %v1278 = vpack.c.b16 %v1265, %v1264
        %v1279 = vpack.c.b16 %v1267, %v1266
        %v1280 = vpack.c.b16 %v1269, %v1268
        %v1281 = vpack.c.b16 %v1271, %v1270
        %v1282 = vpack.c.b16 %v1273, %v1272
        %v1283 = vpack.c.b16 %v1275, %v1274
        %1292 = vmatpush.bf16.msra.mxu0 %v1283
        %1293 = vmatpush.bf16.msra.mxu0 %v1282
        %1294 = vmatpush.bf16.msra.mxu0 %v1281
        %1295 = vmatpush.bf16.msra.mxu0 %v1280
        %1296 = vmatpush.bf16.msra.mxu0 %v1279
        %1297 = vmatpush.bf16.msra.mxu0 %v1278
        %1298 = vmatpush.bf16.msra.mxu0 %v1277
        %1299 = vmatpush.bf16.msra.mxu0 %v1276
        %1300 = vmatmul.bf16.gmra.mxu0 %v1224
        %v1301 = vpop.f32.mrf.mxu0
        %v1302 = vadd.f32 0.0, %v1301
        %v1303 = vpop.f32.mrf.mxu0
        %v1304 = vadd.f32 0.0, %v1303
        %1305 = vmatmul.bf16.gmra.mxu0 %v1225
        %v1306 = vpop.f32.mrf.mxu0
        %v1307 = vadd.f32 0.0, %v1306
        %v1308 = vpop.f32.mrf.mxu0
        %v1309 = vadd.f32 0.0, %v1308
        %1310 = vmatmul.bf16.gmra.mxu0 %v1226
        %v1311 = vpop.f32.mrf.mxu0
        %v1312 = vadd.f32 0.0, %v1311
        %v1313 = vpop.f32.mrf.mxu0
        %v1314 = vadd.f32 0.0, %v1313
        %1315 = vmatmul.bf16.gmra.mxu0 %v1227
        %v1316 = vpop.f32.mrf.mxu0
        %v1317 = vadd.f32 0.0, %v1316
        %v1318 = vpop.f32.mrf.mxu0
        %v1319 = vadd.f32 0.0, %v1318
        %1320 = vdwg.mxu0
        %v1321 = vpack.c.bf16 %v1302, %v1302
        %v1322 = vpack.c.bf16 %v1304, %v1304
        %v1323 = vpack.c.bf16 %v1307, %v1307
        %v1324 = vpack.c.bf16 %v1309, %v1309
        %v1325 = vpack.c.bf16 %v1312, %v1312
        %v1326 = vpack.c.bf16 %v1314, %v1314
        %v1327 = vpack.c.bf16 %v1317, %v1317
        %v1328 = vpack.c.bf16 %v1319, %v1319
        %1337 = vrot.lane.b32.xlu0 %v1321, 96
        %v1338 = vpop.permute.xlu0 %1337
        %1339 = vrot.lane.b32.xlu0 %v1322, 96
        %v1340 = vpop.permute.xlu0 %1339
        %1341 = vrot.lane.b32.xlu0 %v1323, 96
        %v1342 = vpop.permute.xlu0 %1341
        %1343 = vrot.lane.b32.xlu0 %v1324, 96
        %v1344 = vpop.permute.xlu0 %1343
        %1345 = vrot.lane.b32.xlu0 %v1325, 96
        %v1346 = vpop.permute.xlu0 %1345
        %1347 = vrot.lane.b32.xlu0 %v1326, 96
        %v1348 = vpop.permute.xlu0 %1347
        %1349 = vrot.lane.b32.xlu0 %v1327, 96
        %v1350 = vpop.permute.xlu0 %1349
        %1351 = vrot.lane.b32.xlu0 %v1328, 96
        %v1352 = vpop.permute.xlu0 %1351
        %1353 = vrot.lane.b32.xlu0 %v1321, 64
        %v1354 = vpop.permute.xlu0 %1353
        %1355 = vrot.lane.b32.xlu0 %v1322, 64
        %v1356 = vpop.permute.xlu0 %1355
        %1357 = vrot.lane.b32.xlu0 %v1323, 64
        %v1358 = vpop.permute.xlu0 %1357
        %1359 = vrot.lane.b32.xlu0 %v1324, 64
        %v1360 = vpop.permute.xlu0 %1359
        %1361 = vrot.lane.b32.xlu0 %v1325, 64
        %v1362 = vpop.permute.xlu0 %1361
        %1363 = vrot.lane.b32.xlu0 %v1326, 64
        %v1364 = vpop.permute.xlu0 %1363
        %1365 = vrot.lane.b32.xlu0 %v1327, 64
        %v1366 = vpop.permute.xlu0 %1365
        %1367 = vrot.lane.b32.xlu0 %v1328, 64
        %v1368 = vpop.permute.xlu0 %1367
        %1369 = vrot.lane.b32.xlu0 %v1321, 32
        %v1370 = vpop.permute.xlu0 %1369
        %1371 = vrot.lane.b32.xlu0 %v1322, 32
        %v1372 = vpop.permute.xlu0 %1371
        %1373 = vrot.lane.b32.xlu0 %v1323, 32
        %v1374 = vpop.permute.xlu0 %1373
        %1375 = vrot.lane.b32.xlu0 %v1324, 32
        %v1376 = vpop.permute.xlu0 %1375
        %1377 = vrot.lane.b32.xlu0 %v1325, 32
        %v1378 = vpop.permute.xlu0 %1377
        %1379 = vrot.lane.b32.xlu0 %v1326, 32
        %v1380 = vpop.permute.xlu0 %1379
        %1381 = vrot.lane.b32.xlu0 %v1327, 32
        %v1382 = vpop.permute.xlu0 %1381
        %1383 = vrot.lane.b32.xlu0 %v1328, 32
        %v1384 = vpop.permute.xlu0 %1383
        %v1385 = vld [vmem:[#allocation2] sm:$0xf]
        %v1386 = vld [vmem:[#allocation2 + $0x4] sm:$0xf]
        %v1387 = vld [vmem:[#allocation2 + $0x8] sm:$0xf]
        %v1388 = vld [vmem:[#allocation2 + $0xc] sm:$0xf]
        %v1389 = vld [vmem:[#allocation2 + $0x10] sm:$0xf]
        %v1390 = vld [vmem:[#allocation2 + $0x14] sm:$0xf]
        %v1391 = vld [vmem:[#allocation2 + $0x18] sm:$0xf]
        %v1392 = vld [vmem:[#allocation2 + $0x1c] sm:$0xf]
        %v1393 = vld [vmem:[#allocation2 + $0x20] sm:$0xf]
        %v1394 = vld [vmem:[#allocation2 + $0x24] sm:$0xf]
        %v1395 = vld [vmem:[#allocation2 + $0x28] sm:$0xf]
        %v1396 = vld [vmem:[#allocation2 + $0x2c] sm:$0xf]
        %v1397 = vld [vmem:[#allocation2 + $0x30] sm:$0xf]
        %v1398 = vld [vmem:[#allocation2 + $0x34] sm:$0xf]
        %v1399 = vld [vmem:[#allocation2 + $0x38] sm:$0xf]
        %v1400 = vld [vmem:[#allocation2 + $0x3c] sm:$0xf]
        %v1401 = vld [vmem:[#allocation2 + $0x40] sm:$0xf]
        %v1402 = vld [vmem:[#allocation2 + $0x44] sm:$0xf]
        %v1403 = vld [vmem:[#allocation2 + $0x48] sm:$0xf]
        %v1404 = vld [vmem:[#allocation2 + $0x4c] sm:$0xf]
        %v1405 = vld [vmem:[#allocation2 + $0x50] sm:$0xf]
        %v1406 = vld [vmem:[#allocation2 + $0x54] sm:$0xf]
        %v1407 = vld [vmem:[#allocation2 + $0x58] sm:$0xf]
        %v1408 = vld [vmem:[#allocation2 + $0x5c] sm:$0xf]
        %v1409 = vld [vmem:[#allocation2 + $0x60] sm:$0xf]
        %v1410 = vld [vmem:[#allocation2 + $0x64] sm:$0xf]
        %v1411 = vld [vmem:[#allocation2 + $0x68] sm:$0xf]
        %v1412 = vld [vmem:[#allocation2 + $0x6c] sm:$0xf]
        %v1413 = vld [vmem:[#allocation2 + $0x70] sm:$0xf]
        %v1414 = vld [vmem:[#allocation2 + $0x74] sm:$0xf]
        %v1415 = vld [vmem:[#allocation2 + $0x78] sm:$0xf]
        %v1416 = vld [vmem:[#allocation2 + $0x7c] sm:$0xf]
        %v1417 = vld [vmem:[#allocation2 + $0x80] sm:$0xf]
        %v1418 = vld [vmem:[#allocation2 + $0x84] sm:$0xf]
        %v1419 = vld [vmem:[#allocation2 + $0x88] sm:$0xf]
        %v1420 = vld [vmem:[#allocation2 + $0x8c] sm:$0xf]
        %v1421 = vld [vmem:[#allocation2 + $0x90] sm:$0xf]
        %v1422 = vld [vmem:[#allocation2 + $0x94] sm:$0xf]
        %v1423 = vld [vmem:[#allocation2 + $0x98] sm:$0xf]
        %v1424 = vld [vmem:[#allocation2 + $0x9c] sm:$0xf]
        %v1425 = vld [vmem:[#allocation2 + $0xa0] sm:$0xf]
        %v1426 = vld [vmem:[#allocation2 + $0xa4] sm:$0xf]
        %v1427 = vld [vmem:[#allocation2 + $0xa8] sm:$0xf]
        %v1428 = vld [vmem:[#allocation2 + $0xac] sm:$0xf]
        %v1429 = vld [vmem:[#allocation2 + $0xb0] sm:$0xf]
        %v1430 = vld [vmem:[#allocation2 + $0xb4] sm:$0xf]
        %v1431 = vld [vmem:[#allocation2 + $0xb8] sm:$0xf]
        %v1432 = vld [vmem:[#allocation2 + $0xbc] sm:$0xf]
        %v1433 = vld [vmem:[#allocation2 + $0xc0] sm:$0xf]
        %v1434 = vld [vmem:[#allocation2 + $0xc4] sm:$0xf]
        %v1435 = vld [vmem:[#allocation2 + $0xc8] sm:$0xf]
        %v1436 = vld [vmem:[#allocation2 + $0xcc] sm:$0xf]
        %v1437 = vld [vmem:[#allocation2 + $0xd0] sm:$0xf]
        %v1438 = vld [vmem:[#allocation2 + $0xd4] sm:$0xf]
        %v1439 = vld [vmem:[#allocation2 + $0xd8] sm:$0xf]
        %v1440 = vld [vmem:[#allocation2 + $0xdc] sm:$0xf]
        %v1441 = vld [vmem:[#allocation2 + $0xe0] sm:$0xf]
        %v1442 = vld [vmem:[#allocation2 + $0xe4] sm:$0xf]
        %v1443 = vld [vmem:[#allocation2 + $0xe8] sm:$0xf]
        %v1444 = vld [vmem:[#allocation2 + $0xec] sm:$0xf]
        %v1445 = vld [vmem:[#allocation2 + $0xf0] sm:$0xf]
        %v1446 = vld [vmem:[#allocation2 + $0xf4] sm:$0xf]
        %v1447 = vld [vmem:[#allocation2 + $0xf8] sm:$0xf]
        %v1448 = vld [vmem:[#allocation2 + $0xfc] sm:$0xf]
        %v1449 = vld [vmem:[#allocation3] sm:$0xf]
        %v1450 = vld [vmem:[#allocation3 + $0x4] sm:$0xf]
        %v1451 = vld [vmem:[#allocation3 + $0x8] sm:$0xf]
        %v1452 = vld [vmem:[#allocation3 + $0xc] sm:$0xf]
        %v1453 = vld [vmem:[#allocation3 + $0x10] sm:$0xf]
        %v1454 = vld [vmem:[#allocation3 + $0x14] sm:$0xf]
        %v1455 = vld [vmem:[#allocation3 + $0x18] sm:$0xf]
        %v1456 = vld [vmem:[#allocation3 + $0x1c] sm:$0xf]
        %v1457 = vld [vmem:[#allocation3 + $0x20] sm:$0xf]
        %v1458 = vld [vmem:[#allocation3 + $0x24] sm:$0xf]
        %v1459 = vld [vmem:[#allocation3 + $0x28] sm:$0xf]
        %v1460 = vld [vmem:[#allocation3 + $0x2c] sm:$0xf]
        %v1461 = vld [vmem:[#allocation3 + $0x30] sm:$0xf]
        %v1462 = vld [vmem:[#allocation3 + $0x34] sm:$0xf]
        %v1463 = vld [vmem:[#allocation3 + $0x38] sm:$0xf]
        %v1464 = vld [vmem:[#allocation3 + $0x3c] sm:$0xf]
        %v1465 = vld [vmem:[#allocation3 + $0x40] sm:$0xf]
        %v1466 = vld [vmem:[#allocation3 + $0x44] sm:$0xf]
        %v1467 = vld [vmem:[#allocation3 + $0x48] sm:$0xf]
        %v1468 = vld [vmem:[#allocation3 + $0x4c] sm:$0xf]
        %v1469 = vld [vmem:[#allocation3 + $0x50] sm:$0xf]
        %v1470 = vld [vmem:[#allocation3 + $0x54] sm:$0xf]
        %v1471 = vld [vmem:[#allocation3 + $0x58] sm:$0xf]
        %v1472 = vld [vmem:[#allocation3 + $0x5c] sm:$0xf]
        %v1473 = vld [vmem:[#allocation3 + $0x60] sm:$0xf]
        %v1474 = vld [vmem:[#allocation3 + $0x64] sm:$0xf]
        %v1475 = vld [vmem:[#allocation3 + $0x68] sm:$0xf]
        %v1476 = vld [vmem:[#allocation3 + $0x6c] sm:$0xf]
        %v1477 = vld [vmem:[#allocation3 + $0x70] sm:$0xf]
        %v1478 = vld [vmem:[#allocation3 + $0x74] sm:$0xf]
        %v1479 = vld [vmem:[#allocation3 + $0x78] sm:$0xf]
        %v1480 = vld [vmem:[#allocation3 + $0x7c] sm:$0xf]
        %v1481 = vld [vmem:[#allocation3 + $0x80] sm:$0xf]
        %v1482 = vld [vmem:[#allocation3 + $0x84] sm:$0xf]
        %v1483 = vld [vmem:[#allocation3 + $0x88] sm:$0xf]
        %v1484 = vld [vmem:[#allocation3 + $0x8c] sm:$0xf]
        %v1485 = vld [vmem:[#allocation3 + $0x90] sm:$0xf]
        %v1486 = vld [vmem:[#allocation3 + $0x94] sm:$0xf]
        %v1487 = vld [vmem:[#allocation3 + $0x98] sm:$0xf]
        %v1488 = vld [vmem:[#allocation3 + $0x9c] sm:$0xf]
        %v1489 = vld [vmem:[#allocation3 + $0xa0] sm:$0xf]
        %v1490 = vld [vmem:[#allocation3 + $0xa4] sm:$0xf]
        %v1491 = vld [vmem:[#allocation3 + $0xa8] sm:$0xf]
        %v1492 = vld [vmem:[#allocation3 + $0xac] sm:$0xf]
        %v1493 = vld [vmem:[#allocation3 + $0xb0] sm:$0xf]
        %v1494 = vld [vmem:[#allocation3 + $0xb4] sm:$0xf]
        %v1495 = vld [vmem:[#allocation3 + $0xb8] sm:$0xf]
        %v1496 = vld [vmem:[#allocation3 + $0xbc] sm:$0xf]
        %v1497 = vld [vmem:[#allocation3 + $0xc0] sm:$0xf]
        %v1498 = vld [vmem:[#allocation3 + $0xc4] sm:$0xf]
        %v1499 = vld [vmem:[#allocation3 + $0xc8] sm:$0xf]
        %v1500 = vld [vmem:[#allocation3 + $0xcc] sm:$0xf]
        %v1501 = vld [vmem:[#allocation3 + $0xd0] sm:$0xf]
        %v1502 = vld [vmem:[#allocation3 + $0xd4] sm:$0xf]
        %v1503 = vld [vmem:[#allocation3 + $0xd8] sm:$0xf]
        %v1504 = vld [vmem:[#allocation3 + $0xdc] sm:$0xf]
        %v1505 = vld [vmem:[#allocation3 + $0xe0] sm:$0xf]
        %v1506 = vld [vmem:[#allocation3 + $0xe4] sm:$0xf]
        %v1507 = vld [vmem:[#allocation3 + $0xe8] sm:$0xf]
        %v1508 = vld [vmem:[#allocation3 + $0xec] sm:$0xf]
        %v1509 = vld [vmem:[#allocation3 + $0xf0] sm:$0xf]
        %v1510 = vld [vmem:[#allocation3 + $0xf4] sm:$0xf]
        %v1511 = vld [vmem:[#allocation3 + $0xf8] sm:$0xf]
        %v1512 = vld [vmem:[#allocation3 + $0xfc] sm:$0xf]
        %v1513 = vunpack.c.l.b16 %v1321
        %v1514 = vunpack.c.l.b16 %v1322
        %v1515 = vunpack.c.l.b16 %v1323
        %v1516 = vunpack.c.l.b16 %v1324
        %v1517 = vunpack.c.l.b16 %v1325
        %v1518 = vunpack.c.l.b16 %v1326
        %v1519 = vunpack.c.l.b16 %v1327
        %v1520 = vunpack.c.l.b16 %v1328
        %v1521 = vpack.c.b16 %v1514, %v1513
        %v1522 = vpack.c.b16 %v1516, %v1515
        %v1523 = vpack.c.b16 %v1518, %v1517
        %v1524 = vpack.c.b16 %v1520, %v1519
        %v1541 = vunpack.c.l.b16 %v1385
        %v1542 = vunpack.c.l.b16 %v1386
        %v1543 = vunpack.c.l.b16 %v1387
        %v1544 = vunpack.c.l.b16 %v1388
        %v1545 = vunpack.c.l.b16 %v1389
        %v1546 = vunpack.c.l.b16 %v1390
        %v1547 = vunpack.c.l.b16 %v1391
        %v1548 = vunpack.c.l.b16 %v1392
        %v1549 = vunpack.c.l.b16 %v1393
        %v1550 = vunpack.c.l.b16 %v1394
        %v1551 = vunpack.c.l.b16 %v1395
        %v1552 = vunpack.c.l.b16 %v1396
        %v1553 = vunpack.c.l.b16 %v1397
        %v1554 = vunpack.c.l.b16 %v1398
        %v1555 = vunpack.c.l.b16 %v1399
        %v1556 = vunpack.c.l.b16 %v1400
        %v1557 = vpack.c.b16 %v1542, %v1541
        %v1558 = vpack.c.b16 %v1544, %v1543
        %v1559 = vpack.c.b16 %v1546, %v1545
        %v1560 = vpack.c.b16 %v1548, %v1547
        %v1561 = vpack.c.b16 %v1550, %v1549
        %v1562 = vpack.c.b16 %v1552, %v1551
        %v1563 = vpack.c.b16 %v1554, %v1553
        %v1564 = vpack.c.b16 %v1556, %v1555
        %vm1565 = vcmask 261120
        %v1567 = vsel %vm1565, %v1521, 0
        %v1570 = vsel %vm1565, %v1522, 0
        %v1573 = vsel %vm1565, %v1523, 0
        %v1576 = vsel %vm1565, %v1524, 0
        %v1579 = vsel %vm1565, %v1557, 0
        %v1582 = vsel %vm1565, %v1558, 0
        %v1585 = vsel %vm1565, %v1559, 0
        %v1588 = vsel %vm1565, %v1560, 0
        %v1591 = vsel %vm1565, %v1561, 0
        %v1594 = vsel %vm1565, %v1562, 0
        %v1597 = vsel %vm1565, %v1563, 0
        %v1600 = vsel %vm1565, %v1564, 0
        %1602 = vmatpush.bf16.xpose.msra.mxu0 %v1600
        %1603 = vmatpush.bf16.xpose.msra.mxu0 %v1597
        %1604 = vmatpush.bf16.xpose.msra.mxu0 %v1594
        %1605 = vmatpush.bf16.xpose.msra.mxu0 %v1591
        %1606 = vmatpush.bf16.xpose.msra.mxu0 %v1588
        %1607 = vmatpush.bf16.xpose.msra.mxu0 %v1585
        %1608 = vmatpush.bf16.xpose.msra.mxu0 %v1582
        %1609 = vmatpush.bf16.xpose.msra.mxu0 %v1579
        %1610 = vmatmul.bf16.gmra.mxu0 %v1567
        %v1611 = vpop.f32.mrf.mxu0
        %v1612 = vadd.f32 0.0, %v1611
        %v1613 = vpop.f32.mrf.mxu0
        %v1614 = vadd.f32 0.0, %v1613
        %1615 = vmatmul.bf16.gmra.mxu0 %v1570
        %v1616 = vpop.f32.mrf.mxu0
        %v1617 = vadd.f32 0.0, %v1616
        %v1618 = vpop.f32.mrf.mxu0
        %v1619 = vadd.f32 0.0, %v1618
        %1620 = vmatmul.bf16.gmra.mxu0 %v1573
        %v1621 = vpop.f32.mrf.mxu0
        %v1622 = vadd.f32 0.0, %v1621
        %v1623 = vpop.f32.mrf.mxu0
        %v1624 = vadd.f32 0.0, %v1623
        %1625 = vmatmul.bf16.gmra.mxu0 %v1576
        %v1626 = vpop.f32.mrf.mxu0
        %v1627 = vadd.f32 0.0, %v1626
        %v1628 = vpop.f32.mrf.mxu0
        %v1629 = vadd.f32 0.0, %v1628
        %1630 = vdwg.mxu0
        %v1631 = vunpack.c.l.b16 %v1338
        %v1632 = vunpack.c.l.b16 %v1340
        %v1633 = vunpack.c.l.b16 %v1342
        %v1634 = vunpack.c.l.b16 %v1344
        %v1635 = vunpack.c.l.b16 %v1346
        %v1636 = vunpack.c.l.b16 %v1348
        %v1637 = vunpack.c.l.b16 %v1350
        %v1638 = vunpack.c.l.b16 %v1352
        %v1639 = vpack.c.b16 %v1632, %v1631
        %v1640 = vpack.c.b16 %v1634, %v1633
        %v1641 = vpack.c.b16 %v1636, %v1635
        %v1642 = vpack.c.b16 %v1638, %v1637
        %v1659 = vunpack.c.l.b16 %v1401
        %v1660 = vunpack.c.l.b16 %v1402
        %v1661 = vunpack.c.l.b16 %v1403
        %v1662 = vunpack.c.l.b16 %v1404
        %v1663 = vunpack.c.l.b16 %v1405
        %v1664 = vunpack.c.l.b16 %v1406
        %v1665 = vunpack.c.l.b16 %v1407
        %v1666 = vunpack.c.l.b16 %v1408
        %v1667 = vunpack.c.l.b16 %v1409
        %v1668 = vunpack.c.l.b16 %v1410
        %v1669 = vunpack.c.l.b16 %v1411
        %v1670 = vunpack.c.l.b16 %v1412
        %v1671 = vunpack.c.l.b16 %v1413
        %v1672 = vunpack.c.l.b16 %v1414
        %v1673 = vunpack.c.l.b16 %v1415
        %v1674 = vunpack.c.l.b16 %v1416
        %v1675 = vpack.c.b16 %v1660, %v1659
        %v1676 = vpack.c.b16 %v1662, %v1661
        %v1677 = vpack.c.b16 %v1664, %v1663
        %v1678 = vpack.c.b16 %v1666, %v1665
        %v1679 = vpack.c.b16 %v1668, %v1667
        %v1680 = vpack.c.b16 %v1670, %v1669
        %v1681 = vpack.c.b16 %v1672, %v1671
        %v1682 = vpack.c.b16 %v1674, %v1673
        %v1684 = vsel %vm1565, %v1639, 0
        %v1687 = vsel %vm1565, %v1640, 0
        %v1690 = vsel %vm1565, %v1641, 0
        %v1693 = vsel %vm1565, %v1642, 0
        %v1696 = vsel %vm1565, %v1675, 0
        %v1699 = vsel %vm1565, %v1676, 0
        %v1702 = vsel %vm1565, %v1677, 0
        %v1705 = vsel %vm1565, %v1678, 0
        %v1708 = vsel %vm1565, %v1679, 0
        %v1711 = vsel %vm1565, %v1680, 0
        %v1714 = vsel %vm1565, %v1681, 0
        %v1717 = vsel %vm1565, %v1682, 0
        %1719 = vmatpush.bf16.xpose.msra.mxu0 %v1717
        %1720 = vmatpush.bf16.xpose.msra.mxu0 %v1714
        %1721 = vmatpush.bf16.xpose.msra.mxu0 %v1711
        %1722 = vmatpush.bf16.xpose.msra.mxu0 %v1708
        %1723 = vmatpush.bf16.xpose.msra.mxu0 %v1705
        %1724 = vmatpush.bf16.xpose.msra.mxu0 %v1702
        %1725 = vmatpush.bf16.xpose.msra.mxu0 %v1699
        %1726 = vmatpush.bf16.xpose.msra.mxu0 %v1696
        %1727 = vmatmul.bf16.gmra.mxu0 %v1684
        %v1728 = vpop.f32.mrf.mxu0
        %v1729 = vadd.f32 0.0, %v1728
        %v1730 = vpop.f32.mrf.mxu0
        %v1731 = vadd.f32 0.0, %v1730
        %1732 = vmatmul.bf16.gmra.mxu0 %v1687
        %v1733 = vpop.f32.mrf.mxu0
        %v1734 = vadd.f32 0.0, %v1733
        %v1735 = vpop.f32.mrf.mxu0
        %v1736 = vadd.f32 0.0, %v1735
        %1737 = vmatmul.bf16.gmra.mxu0 %v1690
        %v1738 = vpop.f32.mrf.mxu0
        %v1739 = vadd.f32 0.0, %v1738
        %v1740 = vpop.f32.mrf.mxu0
        %v1741 = vadd.f32 0.0, %v1740
        %1742 = vmatmul.bf16.gmra.mxu0 %v1693
        %v1743 = vpop.f32.mrf.mxu0
        %v1744 = vadd.f32 0.0, %v1743
        %v1745 = vpop.f32.mrf.mxu0
        %v1746 = vadd.f32 0.0, %v1745
        %1747 = vdwg.mxu0
        %v1748 = vunpack.c.l.b16 %v1354
        %v1749 = vunpack.c.l.b16 %v1356
        %v1750 = vunpack.c.l.b16 %v1358
        %v1751 = vunpack.c.l.b16 %v1360
        %v1752 = vunpack.c.l.b16 %v1362
        %v1753 = vunpack.c.l.b16 %v1364
        %v1754 = vunpack.c.l.b16 %v1366
        %v1755 = vunpack.c.l.b16 %v1368
        %v1756 = vpack.c.b16 %v1749, %v1748
        %v1757 = vpack.c.b16 %v1751, %v1750
        %v1758 = vpack.c.b16 %v1753, %v1752
        %v1759 = vpack.c.b16 %v1755, %v1754
        %v1776 = vunpack.c.l.b16 %v1417
        %v1777 = vunpack.c.l.b16 %v1418
        %v1778 = vunpack.c.l.b16 %v1419
        %v1779 = vunpack.c.l.b16 %v1420
        %v1780 = vunpack.c.l.b16 %v1421
        %v1781 = vunpack.c.l.b16 %v1422
        %v1782 = vunpack.c.l.b16 %v1423
        %v1783 = vunpack.c.l.b16 %v1424
        %v1784 = vunpack.c.l.b16 %v1425
        %v1785 = vunpack.c.l.b16 %v1426
        %v1786 = vunpack.c.l.b16 %v1427
        %v1787 = vunpack.c.l.b16 %v1428
        %v1788 = vunpack.c.l.b16 %v1429
        %v1789 = vunpack.c.l.b16 %v1430
        %v1790 = vunpack.c.l.b16 %v1431
        %v1791 = vunpack.c.l.b16 %v1432
        %v1792 = vpack.c.b16 %v1777, %v1776
        %v1793 = vpack.c.b16 %v1779, %v1778
        %v1794 = vpack.c.b16 %v1781, %v1780
        %v1795 = vpack.c.b16 %v1783, %v1782
        %v1796 = vpack.c.b16 %v1785, %v1784
        %v1797 = vpack.c.b16 %v1787, %v1786
        %v1798 = vpack.c.b16 %v1789, %v1788
        %v1799 = vpack.c.b16 %v1791, %v1790
        %v1801 = vsel %vm1565, %v1756, 0
        %v1804 = vsel %vm1565, %v1757, 0
        %v1807 = vsel %vm1565, %v1758, 0
        %v1810 = vsel %vm1565, %v1759, 0
        %v1813 = vsel %vm1565, %v1792, 0
        %v1816 = vsel %vm1565, %v1793, 0
        %v1819 = vsel %vm1565, %v1794, 0
        %v1822 = vsel %vm1565, %v1795, 0
        %v1825 = vsel %vm1565, %v1796, 0
        %v1828 = vsel %vm1565, %v1797, 0
        %v1831 = vsel %vm1565, %v1798, 0
        %v1834 = vsel %vm1565, %v1799, 0
        %1836 = vmatpush.bf16.xpose.msra.mxu0 %v1834
        %1837 = vmatpush.bf16.xpose.msra.mxu0 %v1831
        %1838 = vmatpush.bf16.xpose.msra.mxu0 %v1828
        %1839 = vmatpush.bf16.xpose.msra.mxu0 %v1825
        %1840 = vmatpush.bf16.xpose.msra.mxu0 %v1822
        %1841 = vmatpush.bf16.xpose.msra.mxu0 %v1819
        %1842 = vmatpush.bf16.xpose.msra.mxu0 %v1816
        %1843 = vmatpush.bf16.xpose.msra.mxu0 %v1813
        %1844 = vmatmul.bf16.gmra.mxu0 %v1801
        %v1845 = vpop.f32.mrf.mxu0
        %v1846 = vadd.f32 0.0, %v1845
        %v1847 = vpop.f32.mrf.mxu0
        %v1848 = vadd.f32 0.0, %v1847
        %1849 = vmatmul.bf16.gmra.mxu0 %v1804
        %v1850 = vpop.f32.mrf.mxu0
        %v1851 = vadd.f32 0.0, %v1850
        %v1852 = vpop.f32.mrf.mxu0
        %v1853 = vadd.f32 0.0, %v1852
        %1854 = vmatmul.bf16.gmra.mxu0 %v1807
        %v1855 = vpop.f32.mrf.mxu0
        %v1856 = vadd.f32 0.0, %v1855
        %v1857 = vpop.f32.mrf.mxu0
        %v1858 = vadd.f32 0.0, %v1857
        %1859 = vmatmul.bf16.gmra.mxu0 %v1810
        %v1860 = vpop.f32.mrf.mxu0
        %v1861 = vadd.f32 0.0, %v1860
        %v1862 = vpop.f32.mrf.mxu0
        %v1863 = vadd.f32 0.0, %v1862
        %1864 = vdwg.mxu0
        %v1865 = vunpack.c.l.b16 %v1370
        %v1866 = vunpack.c.l.b16 %v1372
        %v1867 = vunpack.c.l.b16 %v1374
        %v1868 = vunpack.c.l.b16 %v1376
        %v1869 = vunpack.c.l.b16 %v1378
        %v1870 = vunpack.c.l.b16 %v1380
        %v1871 = vunpack.c.l.b16 %v1382
        %v1872 = vunpack.c.l.b16 %v1384
        %v1873 = vpack.c.b16 %v1866, %v1865
        %v1874 = vpack.c.b16 %v1868, %v1867
        %v1875 = vpack.c.b16 %v1870, %v1869
        %v1876 = vpack.c.b16 %v1872, %v1871
        %v1893 = vunpack.c.l.b16 %v1433
        %v1894 = vunpack.c.l.b16 %v1434
        %v1895 = vunpack.c.l.b16 %v1435
        %v1896 = vunpack.c.l.b16 %v1436
        %v1897 = vunpack.c.l.b16 %v1437
        %v1898 = vunpack.c.l.b16 %v1438
        %v1899 = vunpack.c.l.b16 %v1439
        %v1900 = vunpack.c.l.b16 %v1440
        %v1901 = vunpack.c.l.b16 %v1441
        %v1902 = vunpack.c.l.b16 %v1442
        %v1903 = vunpack.c.l.b16 %v1443
        %v1904 = vunpack.c.l.b16 %v1444
        %v1905 = vunpack.c.l.b16 %v1445
        %v1906 = vunpack.c.l.b16 %v1446
        %v1907 = vunpack.c.l.b16 %v1447
        %v1908 = vunpack.c.l.b16 %v1448
        %v1909 = vpack.c.b16 %v1894, %v1893
        %v1910 = vpack.c.b16 %v1896, %v1895
        %v1911 = vpack.c.b16 %v1898, %v1897
        %v1912 = vpack.c.b16 %v1900, %v1899
        %v1913 = vpack.c.b16 %v1902, %v1901
        %v1914 = vpack.c.b16 %v1904, %v1903
        %v1915 = vpack.c.b16 %v1906, %v1905
        %v1916 = vpack.c.b16 %v1908, %v1907
        %v1918 = vsel %vm1565, %v1873, 0
        %v1921 = vsel %vm1565, %v1874, 0
        %v1924 = vsel %vm1565, %v1875, 0
        %v1927 = vsel %vm1565, %v1876, 0
        %v1930 = vsel %vm1565, %v1909, 0
        %v1933 = vsel %vm1565, %v1910, 0
        %v1936 = vsel %vm1565, %v1911, 0
        %v1939 = vsel %vm1565, %v1912, 0
        %v1942 = vsel %vm1565, %v1913, 0
        %v1945 = vsel %vm1565, %v1914, 0
        %v1948 = vsel %vm1565, %v1915, 0
        %v1951 = vsel %vm1565, %v1916, 0
        %1953 = vmatpush.bf16.xpose.msra.mxu0 %v1951
        %1954 = vmatpush.bf16.xpose.msra.mxu0 %v1948
        %1955 = vmatpush.bf16.xpose.msra.mxu0 %v1945
        %1956 = vmatpush.bf16.xpose.msra.mxu0 %v1942
        %1957 = vmatpush.bf16.xpose.msra.mxu0 %v1939
        %1958 = vmatpush.bf16.xpose.msra.mxu0 %v1936
        %1959 = vmatpush.bf16.xpose.msra.mxu0 %v1933
        %1960 = vmatpush.bf16.xpose.msra.mxu0 %v1930
        %1961 = vmatmul.bf16.gmra.mxu0 %v1918
        %v1962 = vpop.f32.mrf.mxu0
        %v1963 = vadd.f32 0.0, %v1962
        %v1964 = vpop.f32.mrf.mxu0
        %v1965 = vadd.f32 0.0, %v1964
        %1966 = vmatmul.bf16.gmra.mxu0 %v1921
        %v1967 = vpop.f32.mrf.mxu0
        %v1968 = vadd.f32 0.0, %v1967
        %v1969 = vpop.f32.mrf.mxu0
        %v1970 = vadd.f32 0.0, %v1969
        %1971 = vmatmul.bf16.gmra.mxu0 %v1924
        %v1972 = vpop.f32.mrf.mxu0
        %v1973 = vadd.f32 0.0, %v1972
        %v1974 = vpop.f32.mrf.mxu0
        %v1975 = vadd.f32 0.0, %v1974
        %1976 = vmatmul.bf16.gmra.mxu0 %v1927
        %v1977 = vpop.f32.mrf.mxu0
        %v1978 = vadd.f32 0.0, %v1977
        %v1979 = vpop.f32.mrf.mxu0
        %v1980 = vadd.f32 0.0, %v1979
        %1981 = vdwg.mxu0
        %1982 = vmax.xlane.f32.xlu0 %v1612
        %v1983 = vpop.xlane.xlu0 %1982
        %1984 = vmax.xlane.f32.xlu0 %v1614
        %v1985 = vpop.xlane.xlu0 %1984
        %1986 = vmax.xlane.f32.xlu0 %v1617
        %v1987 = vpop.xlane.xlu0 %1986
        %1988 = vmax.xlane.f32.xlu0 %v1619
        %v1989 = vpop.xlane.xlu0 %1988
        %1990 = vmax.xlane.f32.xlu0 %v1622
        %v1991 = vpop.xlane.xlu0 %1990
        %1992 = vmax.xlane.f32.xlu0 %v1624
        %v1993 = vpop.xlane.xlu0 %1992
        %1994 = vmax.xlane.f32.xlu0 %v1627
        %v1995 = vpop.xlane.xlu0 %1994
        %1996 = vmax.xlane.f32.xlu0 %v1629
        %v1997 = vpop.xlane.xlu0 %1996
        %1998 = vmax.xlane.f32.xlu0 %v1729
        %v1999 = vpop.xlane.xlu0 %1998
        %2000 = vmax.xlane.f32.xlu0 %v1731
        %v2001 = vpop.xlane.xlu0 %2000
        %2002 = vmax.xlane.f32.xlu0 %v1734
        %v2003 = vpop.xlane.xlu0 %2002
        %2004 = vmax.xlane.f32.xlu0 %v1736
        %v2005 = vpop.xlane.xlu0 %2004
        %2006 = vmax.xlane.f32.xlu0 %v1739
        %v2007 = vpop.xlane.xlu0 %2006
        %2008 = vmax.xlane.f32.xlu0 %v1741
        %v2009 = vpop.xlane.xlu0 %2008
        %2010 = vmax.xlane.f32.xlu0 %v1744
        %v2011 = vpop.xlane.xlu0 %2010
        %2012 = vmax.xlane.f32.xlu0 %v1746
        %v2013 = vpop.xlane.xlu0 %2012
        %2014 = vmax.xlane.f32.xlu0 %v1846
        %v2015 = vpop.xlane.xlu0 %2014
        %2016 = vmax.xlane.f32.xlu0 %v1848
        %v2017 = vpop.xlane.xlu0 %2016
        %2018 = vmax.xlane.f32.xlu0 %v1851
        %v2019 = vpop.xlane.xlu0 %2018
        %2020 = vmax.xlane.f32.xlu0 %v1853
        %v2021 = vpop.xlane.xlu0 %2020
        %2022 = vmax.xlane.f32.xlu0 %v1856
        %v2023 = vpop.xlane.xlu0 %2022
        %2024 = vmax.xlane.f32.xlu0 %v1858
        %v2025 = vpop.xlane.xlu0 %2024
        %2026 = vmax.xlane.f32.xlu0 %v1861
        %v2027 = vpop.xlane.xlu0 %2026
        %2028 = vmax.xlane.f32.xlu0 %v1863
        %v2029 = vpop.xlane.xlu0 %2028
        %2030 = vmax.xlane.f32.xlu0 %v1963
        %v2031 = vpop.xlane.xlu0 %2030
        %2032 = vmax.xlane.f32.xlu0 %v1965
        %v2033 = vpop.xlane.xlu0 %2032
        %2034 = vmax.xlane.f32.xlu0 %v1968
        %v2035 = vpop.xlane.xlu0 %2034
        %2036 = vmax.xlane.f32.xlu0 %v1970
        %v2037 = vpop.xlane.xlu0 %2036
        %2038 = vmax.xlane.f32.xlu0 %v1973
        %v2039 = vpop.xlane.xlu0 %2038
        %2040 = vmax.xlane.f32.xlu0 %v1975
        %v2041 = vpop.xlane.xlu0 %2040
        %2042 = vmax.xlane.f32.xlu0 %v1978
        %v2043 = vpop.xlane.xlu0 %2042
        %2044 = vmax.xlane.f32.xlu0 %v1980
        %v2045 = vpop.xlane.xlu0 %2044
        %v2046 = vsub.f32 %v1612, %v1983
        %v2047 = vsub.f32 %v1614, %v1985
        %v2048 = vsub.f32 %v1617, %v1987
        %v2049 = vsub.f32 %v1619, %v1989
        %v2050 = vsub.f32 %v1622, %v1991
        %v2051 = vsub.f32 %v1624, %v1993
        %v2052 = vsub.f32 %v1627, %v1995
        %v2053 = vsub.f32 %v1629, %v1997
        %v2054 = vsub.f32 %v1729, %v1999
        %v2055 = vsub.f32 %v1731, %v2001
        %v2056 = vsub.f32 %v1734, %v2003
        %v2057 = vsub.f32 %v1736, %v2005
        %v2058 = vsub.f32 %v1739, %v2007
        %v2059 = vsub.f32 %v1741, %v2009
        %v2060 = vsub.f32 %v1744, %v2011
        %v2061 = vsub.f32 %v1746, %v2013
        %v2062 = vsub.f32 %v1846, %v2015
        %v2063 = vsub.f32 %v1848, %v2017
        %v2064 = vsub.f32 %v1851, %v2019
        %v2065 = vsub.f32 %v1853, %v2021
        %v2066 = vsub.f32 %v1856, %v2023
        %v2067 = vsub.f32 %v1858, %v2025
        %v2068 = vsub.f32 %v1861, %v2027
        %v2069 = vsub.f32 %v1863, %v2029
        %v2070 = vsub.f32 %v1963, %v2031
        %v2071 = vsub.f32 %v1965, %v2033
        %v2072 = vsub.f32 %v1968, %v2035
        %v2073 = vsub.f32 %v1970, %v2037
        %v2074 = vsub.f32 %v1973, %v2039
        %v2075 = vsub.f32 %v1975, %v2041
        %v2076 = vsub.f32 %v1978, %v2043
        %v2077 = vsub.f32 %v1980, %v2045
        %v2078 = vmul.f32 %v2046, 1.442695
        %v2079 = vpow.pop %v2078
        %v2080 = vmul.f32 %v2047, 1.442695
        %v2081 = vpow.pop %v2080
        %v2082 = vmul.f32 %v2048, 1.442695
        %v2083 = vpow.pop %v2082
        %v2084 = vmul.f32 %v2049, 1.442695
        %v2085 = vpow.pop %v2084
        %v2086 = vmul.f32 %v2050, 1.442695
        %v2087 = vpow.pop %v2086
        %v2088 = vmul.f32 %v2051, 1.442695
        %v2089 = vpow.pop %v2088
        %v2090 = vmul.f32 %v2052, 1.442695
        %v2091 = vpow.pop %v2090
        %v2092 = vmul.f32 %v2053, 1.442695
        %v2093 = vpow.pop %v2092
        %v2094 = vmul.f32 %v2054, 1.442695
        %v2095 = vpow.pop %v2094
        %v2096 = vmul.f32 %v2055, 1.442695
        %v2097 = vpow.pop %v2096
        %v2098 = vmul.f32 %v2056, 1.442695
        %v2099 = vpow.pop %v2098
        %v2100 = vmul.f32 %v2057, 1.442695
        %v2101 = vpow.pop %v2100
        %v2102 = vmul.f32 %v2058, 1.442695
        %v2103 = vpow.pop %v2102
        %v2104 = vmul.f32 %v2059, 1.442695
        %v2105 = vpow.pop %v2104
        %v2106 = vmul.f32 %v2060, 1.442695
        %v2107 = vpow.pop %v2106
        %v2108 = vmul.f32 %v2061, 1.442695
        %v2109 = vpow.pop %v2108
        %v2110 = vmul.f32 %v2062, 1.442695
        %v2111 = vpow.pop %v2110
        %v2112 = vmul.f32 %v2063, 1.442695
        %v2113 = vpow.pop %v2112
        %v2114 = vmul.f32 %v2064, 1.442695
        %v2115 = vpow.pop %v2114
        %v2116 = vmul.f32 %v2065, 1.442695
        %v2117 = vpow.pop %v2116
        %v2118 = vmul.f32 %v2066, 1.442695
        %v2119 = vpow.pop %v2118
        %v2120 = vmul.f32 %v2067, 1.442695
        %v2121 = vpow.pop %v2120
        %v2122 = vmul.f32 %v2068, 1.442695
        %v2123 = vpow.pop %v2122
        %v2124 = vmul.f32 %v2069, 1.442695
        %v2125 = vpow.pop %v2124
        %v2126 = vmul.f32 %v2070, 1.442695
        %v2127 = vpow.pop %v2126
        %v2128 = vmul.f32 %v2071, 1.442695
        %v2129 = vpow.pop %v2128
        %v2130 = vmul.f32 %v2072, 1.442695
        %v2131 = vpow.pop %v2130
        %v2132 = vmul.f32 %v2073, 1.442695
        %v2133 = vpow.pop %v2132
        %v2134 = vmul.f32 %v2074, 1.442695
        %v2135 = vpow.pop %v2134
        %v2136 = vmul.f32 %v2075, 1.442695
        %v2137 = vpow.pop %v2136
        %v2138 = vmul.f32 %v2076, 1.442695
        %v2139 = vpow.pop %v2138
        %v2140 = vmul.f32 %v2077, 1.442695
        %v2141 = vpow.pop %v2140
        %2142 = vadd.xlane.f32.xlu0 %v2079
        %v2143 = vpop.xlane.xlu0 %2142
        %2144 = vadd.xlane.f32.xlu0 %v2081
        %v2145 = vpop.xlane.xlu0 %2144
        %2146 = vadd.xlane.f32.xlu0 %v2083
        %v2147 = vpop.xlane.xlu0 %2146
        %2148 = vadd.xlane.f32.xlu0 %v2085
        %v2149 = vpop.xlane.xlu0 %2148
        %2150 = vadd.xlane.f32.xlu0 %v2087
        %v2151 = vpop.xlane.xlu0 %2150
        %2152 = vadd.xlane.f32.xlu0 %v2089
        %v2153 = vpop.xlane.xlu0 %2152
        %2154 = vadd.xlane.f32.xlu0 %v2091
        %v2155 = vpop.xlane.xlu0 %2154
        %2156 = vadd.xlane.f32.xlu0 %v2093
        %v2157 = vpop.xlane.xlu0 %2156
        %2158 = vadd.xlane.f32.xlu0 %v2095
        %v2159 = vpop.xlane.xlu0 %2158
        %2160 = vadd.xlane.f32.xlu0 %v2097
        %v2161 = vpop.xlane.xlu0 %2160
        %2162 = vadd.xlane.f32.xlu0 %v2099
        %v2163 = vpop.xlane.xlu0 %2162
        %2164 = vadd.xlane.f32.xlu0 %v2101
        %v2165 = vpop.xlane.xlu0 %2164
        %2166 = vadd.xlane.f32.xlu0 %v2103
        %v2167 = vpop.xlane.xlu0 %2166
        %2168 = vadd.xlane.f32.xlu0 %v2105
        %v2169 = vpop.xlane.xlu0 %2168
        %2170 = vadd.xlane.f32.xlu0 %v2107
        %v2171 = vpop.xlane.xlu0 %2170
        %2172 = vadd.xlane.f32.xlu0 %v2109
        %v2173 = vpop.xlane.xlu0 %2172
        %2174 = vadd.xlane.f32.xlu0 %v2111
        %v2175 = vpop.xlane.xlu0 %2174
        %2176 = vadd.xlane.f32.xlu0 %v2113
        %v2177 = vpop.xlane.xlu0 %2176
        %2178 = vadd.xlane.f32.xlu0 %v2115
        %v2179 = vpop.xlane.xlu0 %2178
        %2180 = vadd.xlane.f32.xlu0 %v2117
        %v2181 = vpop.xlane.xlu0 %2180
        %2182 = vadd.xlane.f32.xlu0 %v2119
        %v2183 = vpop.xlane.xlu0 %2182
        %2184 = vadd.xlane.f32.xlu0 %v2121
        %v2185 = vpop.xlane.xlu0 %2184
        %2186 = vadd.xlane.f32.xlu0 %v2123
        %v2187 = vpop.xlane.xlu0 %2186
        %2188 = vadd.xlane.f32.xlu0 %v2125
        %v2189 = vpop.xlane.xlu0 %2188
        %2190 = vadd.xlane.f32.xlu0 %v2127
        %v2191 = vpop.xlane.xlu0 %2190
        %2192 = vadd.xlane.f32.xlu0 %v2129
        %v2193 = vpop.xlane.xlu0 %2192
        %2194 = vadd.xlane.f32.xlu0 %v2131
        %v2195 = vpop.xlane.xlu0 %2194
        %2196 = vadd.xlane.f32.xlu0 %v2133
        %v2197 = vpop.xlane.xlu0 %2196
        %2198 = vadd.xlane.f32.xlu0 %v2135
        %v2199 = vpop.xlane.xlu0 %2198
        %2200 = vadd.xlane.f32.xlu0 %v2137
        %v2201 = vpop.xlane.xlu0 %2200
        %2202 = vadd.xlane.f32.xlu0 %v2139
        %v2203 = vpop.xlane.xlu0 %2202
        %2204 = vadd.xlane.f32.xlu0 %v2141
        %v2205 = vpop.xlane.xlu0 %2204
        %v2206 = vpack.c.bf16 %v2079, %v2079
        %v2207 = vpack.c.bf16 %v2081, %v2081
        %v2208 = vpack.c.bf16 %v2083, %v2083
        %v2209 = vpack.c.bf16 %v2085, %v2085
        %v2210 = vpack.c.bf16 %v2087, %v2087
        %v2211 = vpack.c.bf16 %v2089, %v2089
        %v2212 = vpack.c.bf16 %v2091, %v2091
        %v2213 = vpack.c.bf16 %v2093, %v2093
        %v2214 = vpack.c.bf16 %v2095, %v2095
        %v2215 = vpack.c.bf16 %v2097, %v2097
        %v2216 = vpack.c.bf16 %v2099, %v2099
        %v2217 = vpack.c.bf16 %v2101, %v2101
        %v2218 = vpack.c.bf16 %v2103, %v2103
        %v2219 = vpack.c.bf16 %v2105, %v2105
        %v2220 = vpack.c.bf16 %v2107, %v2107
        %v2221 = vpack.c.bf16 %v2109, %v2109
        %v2222 = vpack.c.bf16 %v2111, %v2111
        %v2223 = vpack.c.bf16 %v2113, %v2113
        %v2224 = vpack.c.bf16 %v2115, %v2115
        %v2225 = vpack.c.bf16 %v2117, %v2117
        %v2226 = vpack.c.bf16 %v2119, %v2119
        %v2227 = vpack.c.bf16 %v2121, %v2121
        %v2228 = vpack.c.bf16 %v2123, %v2123
        %v2229 = vpack.c.bf16 %v2125, %v2125
        %v2230 = vpack.c.bf16 %v2127, %v2127
        %v2231 = vpack.c.bf16 %v2129, %v2129
        %v2232 = vpack.c.bf16 %v2131, %v2131
        %v2233 = vpack.c.bf16 %v2133, %v2133
        %v2234 = vpack.c.bf16 %v2135, %v2135
        %v2235 = vpack.c.bf16 %v2137, %v2137
        %v2236 = vpack.c.bf16 %v2139, %v2139
        %v2237 = vpack.c.bf16 %v2141, %v2141
        %v2246 = vunpack.c.l.b16 %v2206
        %v2247 = vunpack.c.l.b16 %v2207
        %v2248 = vunpack.c.l.b16 %v2208
        %v2249 = vunpack.c.l.b16 %v2209
        %v2250 = vunpack.c.l.b16 %v2210
        %v2251 = vunpack.c.l.b16 %v2211
        %v2252 = vunpack.c.l.b16 %v2212
        %v2253 = vunpack.c.l.b16 %v2213
        %v2254 = vpack.c.b16 %v2247, %v2246
        %v2255 = vpack.c.b16 %v2249, %v2248
        %v2256 = vpack.c.b16 %v2251, %v2250
        %v2257 = vpack.c.b16 %v2253, %v2252
        %v2278 = vunpack.c.l.b16 %v1449
        %v2279 = vunpack.c.l.b16 %v1450
        %v2280 = vunpack.c.l.b16 %v1451
        %v2281 = vunpack.c.l.b16 %v1452
        %v2282 = vunpack.c.l.b16 %v1453
        %v2283 = vunpack.c.l.b16 %v1454
        %v2284 = vunpack.c.l.b16 %v1455
        %v2285 = vunpack.c.l.b16 %v1456
        %v2286 = vunpack.c.l.b16 %v1457
        %v2287 = vunpack.c.l.b16 %v1458
        %v2288 = vunpack.c.l.b16 %v1459
        %v2289 = vunpack.c.l.b16 %v1460
        %v2290 = vunpack.c.l.b16 %v1461
        %v2291 = vunpack.c.l.b16 %v1462
        %v2292 = vunpack.c.l.b16 %v1463
        %v2293 = vunpack.c.l.b16 %v1464
        %v2294 = vpack.c.b16 %v2279, %v2278
        %v2295 = vpack.c.b16 %v2281, %v2280
        %v2296 = vpack.c.b16 %v2283, %v2282
        %v2297 = vpack.c.b16 %v2285, %v2284
        %v2298 = vpack.c.b16 %v2287, %v2286
        %v2299 = vpack.c.b16 %v2289, %v2288
        %v2300 = vpack.c.b16 %v2291, %v2290
        %v2301 = vpack.c.b16 %v2293, %v2292
        %2310 = vmatpush.bf16.msra.mxu0 %v2301
        %2311 = vmatpush.bf16.msra.mxu0 %v2300
        %2312 = vmatpush.bf16.msra.mxu0 %v2299
        %2313 = vmatpush.bf16.msra.mxu0 %v2298
        %2314 = vmatpush.bf16.msra.mxu0 %v2297
        %2315 = vmatpush.bf16.msra.mxu0 %v2296
        %2316 = vmatpush.bf16.msra.mxu0 %v2295
        %2317 = vmatpush.bf16.msra.mxu0 %v2294
        %2318 = vmatmul.bf16.gmra.mxu0 %v2254
        %v2319 = vpop.f32.mrf.mxu0
        %v2320 = vadd.f32 0.0, %v2319
        %v2321 = vpop.f32.mrf.mxu0
        %v2322 = vadd.f32 0.0, %v2321
        %2323 = vmatmul.bf16.gmra.mxu0 %v2255
        %v2324 = vpop.f32.mrf.mxu0
        %v2325 = vadd.f32 0.0, %v2324
        %v2326 = vpop.f32.mrf.mxu0
        %v2327 = vadd.f32 0.0, %v2326
        %2328 = vmatmul.bf16.gmra.mxu0 %v2256
        %v2329 = vpop.f32.mrf.mxu0
        %v2330 = vadd.f32 0.0, %v2329
        %v2331 = vpop.f32.mrf.mxu0
        %v2332 = vadd.f32 0.0, %v2331
        %2333 = vmatmul.bf16.gmra.mxu0 %v2257
        %v2334 = vpop.f32.mrf.mxu0
        %v2335 = vadd.f32 0.0, %v2334
        %v2336 = vpop.f32.mrf.mxu0
        %v2337 = vadd.f32 0.0, %v2336
        %2338 = vdwg.mxu0
        %v2347 = vunpack.c.l.b16 %v2214
        %v2348 = vunpack.c.l.b16 %v2215
        %v2349 = vunpack.c.l.b16 %v2216
        %v2350 = vunpack.c.l.b16 %v2217
        %v2351 = vunpack.c.l.b16 %v2218
        %v2352 = vunpack.c.l.b16 %v2219
        %v2353 = vunpack.c.l.b16 %v2220
        %v2354 = vunpack.c.l.b16 %v2221
        %v2355 = vpack.c.b16 %v2348, %v2347
        %v2356 = vpack.c.b16 %v2350, %v2349
        %v2357 = vpack.c.b16 %v2352, %v2351
        %v2358 = vpack.c.b16 %v2354, %v2353
        %v2379 = vunpack.c.l.b16 %v1465
        %v2380 = vunpack.c.l.b16 %v1466
        %v2381 = vunpack.c.l.b16 %v1467
        %v2382 = vunpack.c.l.b16 %v1468
        %v2383 = vunpack.c.l.b16 %v1469
        %v2384 = vunpack.c.l.b16 %v1470
        %v2385 = vunpack.c.l.b16 %v1471
        %v2386 = vunpack.c.l.b16 %v1472
        %v2387 = vunpack.c.l.b16 %v1473
        %v2388 = vunpack.c.l.b16 %v1474
        %v2389 = vunpack.c.l.b16 %v1475
        %v2390 = vunpack.c.l.b16 %v1476
        %v2391 = vunpack.c.l.b16 %v1477
        %v2392 = vunpack.c.l.b16 %v1478
        %v2393 = vunpack.c.l.b16 %v1479
        %v2394 = vunpack.c.l.b16 %v1480
        %v2395 = vpack.c.b16 %v2380, %v2379
        %v2396 = vpack.c.b16 %v2382, %v2381
        %v2397 = vpack.c.b16 %v2384, %v2383
        %v2398 = vpack.c.b16 %v2386, %v2385
        %v2399 = vpack.c.b16 %v2388, %v2387
        %v2400 = vpack.c.b16 %v2390, %v2389
        %v2401 = vpack.c.b16 %v2392, %v2391
        %v2402 = vpack.c.b16 %v2394, %v2393
        %2411 = vmatpush.bf16.msra.mxu0 %v2402
        %2412 = vmatpush.bf16.msra.mxu0 %v2401
        %2413 = vmatpush.bf16.msra.mxu0 %v2400
        %2414 = vmatpush.bf16.msra.mxu0 %v2399
        %2415 = vmatpush.bf16.msra.mxu0 %v2398
        %2416 = vmatpush.bf16.msra.mxu0 %v2397
        %2417 = vmatpush.bf16.msra.mxu0 %v2396
        %2418 = vmatpush.bf16.msra.mxu0 %v2395
        %2419 = vmatmul.bf16.gmra.mxu0 %v2355
        %v2420 = vpop.f32.mrf.mxu0
        %v2421 = vadd.f32 0.0, %v2420
        %v2422 = vpop.f32.mrf.mxu0
        %v2423 = vadd.f32 0.0, %v2422
        %2424 = vmatmul.bf16.gmra.mxu0 %v2356
        %v2425 = vpop.f32.mrf.mxu0
        %v2426 = vadd.f32 0.0, %v2425
        %v2427 = vpop.f32.mrf.mxu0
        %v2428 = vadd.f32 0.0, %v2427
        %2429 = vmatmul.bf16.gmra.mxu0 %v2357
        %v2430 = vpop.f32.mrf.mxu0
        %v2431 = vadd.f32 0.0, %v2430
        %v2432 = vpop.f32.mrf.mxu0
        %v2433 = vadd.f32 0.0, %v2432
        %2434 = vmatmul.bf16.gmra.mxu0 %v2358
        %v2435 = vpop.f32.mrf.mxu0
        %v2436 = vadd.f32 0.0, %v2435
        %v2437 = vpop.f32.mrf.mxu0
        %v2438 = vadd.f32 0.0, %v2437
        %2439 = vdwg.mxu0
        %v2448 = vunpack.c.l.b16 %v2222
        %v2449 = vunpack.c.l.b16 %v2223
        %v2450 = vunpack.c.l.b16 %v2224
        %v2451 = vunpack.c.l.b16 %v2225
        %v2452 = vunpack.c.l.b16 %v2226
        %v2453 = vunpack.c.l.b16 %v2227
        %v2454 = vunpack.c.l.b16 %v2228
        %v2455 = vunpack.c.l.b16 %v2229
        %v2456 = vpack.c.b16 %v2449, %v2448
        %v2457 = vpack.c.b16 %v2451, %v2450
        %v2458 = vpack.c.b16 %v2453, %v2452
        %v2459 = vpack.c.b16 %v2455, %v2454
        %v2480 = vunpack.c.l.b16 %v1481
        %v2481 = vunpack.c.l.b16 %v1482
        %v2482 = vunpack.c.l.b16 %v1483
        %v2483 = vunpack.c.l.b16 %v1484
        %v2484 = vunpack.c.l.b16 %v1485
        %v2485 = vunpack.c.l.b16 %v1486
        %v2486 = vunpack.c.l.b16 %v1487
        %v2487 = vunpack.c.l.b16 %v1488
        %v2488 = vunpack.c.l.b16 %v1489
        %v2489 = vunpack.c.l.b16 %v1490
        %v2490 = vunpack.c.l.b16 %v1491
        %v2491 = vunpack.c.l.b16 %v1492
        %v2492 = vunpack.c.l.b16 %v1493
        %v2493 = vunpack.c.l.b16 %v1494
        %v2494 = vunpack.c.l.b16 %v1495
        %v2495 = vunpack.c.l.b16 %v1496
        %v2496 = vpack.c.b16 %v2481, %v2480
        %v2497 = vpack.c.b16 %v2483, %v2482
        %v2498 = vpack.c.b16 %v2485, %v2484
        %v2499 = vpack.c.b16 %v2487, %v2486
        %v2500 = vpack.c.b16 %v2489, %v2488
        %v2501 = vpack.c.b16 %v2491, %v2490
        %v2502 = vpack.c.b16 %v2493, %v2492
        %v2503 = vpack.c.b16 %v2495, %v2494
        %2512 = vmatpush.bf16.msra.mxu0 %v2503
        %2513 = vmatpush.bf16.msra.mxu0 %v2502
        %2514 = vmatpush.bf16.msra.mxu0 %v2501
        %2515 = vmatpush.bf16.msra.mxu0 %v2500
        %2516 = vmatpush.bf16.msra.mxu0 %v2499
        %2517 = vmatpush.bf16.msra.mxu0 %v2498
        %2518 = vmatpush.bf16.msra.mxu0 %v2497
        %2519 = vmatpush.bf16.msra.mxu0 %v2496
        %2520 = vmatmul.bf16.gmra.mxu0 %v2456
        %v2521 = vpop.f32.mrf.mxu0
        %v2522 = vadd.f32 0.0, %v2521
        %v2523 = vpop.f32.mrf.mxu0
        %v2524 = vadd.f32 0.0, %v2523
        %2525 = vmatmul.bf16.gmra.mxu0 %v2457
        %v2526 = vpop.f32.mrf.mxu0
        %v2527 = vadd.f32 0.0, %v2526
        %v2528 = vpop.f32.mrf.mxu0
        %v2529 = vadd.f32 0.0, %v2528
        %2530 = vmatmul.bf16.gmra.mxu0 %v2458
        %v2531 = vpop.f32.mrf.mxu0
        %v2532 = vadd.f32 0.0, %v2531
        %v2533 = vpop.f32.mrf.mxu0
        %v2534 = vadd.f32 0.0, %v2533
        %2535 = vmatmul.bf16.gmra.mxu0 %v2459
        %v2536 = vpop.f32.mrf.mxu0
        %v2537 = vadd.f32 0.0, %v2536
        %v2538 = vpop.f32.mrf.mxu0
        %v2539 = vadd.f32 0.0, %v2538
        %2540 = vdwg.mxu0
        %v2549 = vunpack.c.l.b16 %v2230
        %v2550 = vunpack.c.l.b16 %v2231
        %v2551 = vunpack.c.l.b16 %v2232
        %v2552 = vunpack.c.l.b16 %v2233
        %v2553 = vunpack.c.l.b16 %v2234
        %v2554 = vunpack.c.l.b16 %v2235
        %v2555 = vunpack.c.l.b16 %v2236
        %v2556 = vunpack.c.l.b16 %v2237
        %v2557 = vpack.c.b16 %v2550, %v2549
        %v2558 = vpack.c.b16 %v2552, %v2551
        %v2559 = vpack.c.b16 %v2554, %v2553
        %v2560 = vpack.c.b16 %v2556, %v2555
        %v2581 = vunpack.c.l.b16 %v1497
        %v2582 = vunpack.c.l.b16 %v1498
        %v2583 = vunpack.c.l.b16 %v1499
        %v2584 = vunpack.c.l.b16 %v1500
        %v2585 = vunpack.c.l.b16 %v1501
        %v2586 = vunpack.c.l.b16 %v1502
        %v2587 = vunpack.c.l.b16 %v1503
        %v2588 = vunpack.c.l.b16 %v1504
        %v2589 = vunpack.c.l.b16 %v1505
        %v2590 = vunpack.c.l.b16 %v1506
        %v2591 = vunpack.c.l.b16 %v1507
        %v2592 = vunpack.c.l.b16 %v1508
        %v2593 = vunpack.c.l.b16 %v1509
        %v2594 = vunpack.c.l.b16 %v1510
        %v2595 = vunpack.c.l.b16 %v1511
        %v2596 = vunpack.c.l.b16 %v1512
        %v2597 = vpack.c.b16 %v2582, %v2581
        %v2598 = vpack.c.b16 %v2584, %v2583
        %v2599 = vpack.c.b16 %v2586, %v2585
        %v2600 = vpack.c.b16 %v2588, %v2587
        %v2601 = vpack.c.b16 %v2590, %v2589
        %v2602 = vpack.c.b16 %v2592, %v2591
        %v2603 = vpack.c.b16 %v2594, %v2593
        %v2604 = vpack.c.b16 %v2596, %v2595
        %2613 = vmatpush.bf16.msra.mxu0 %v2604
        %2614 = vmatpush.bf16.msra.mxu0 %v2603
        %2615 = vmatpush.bf16.msra.mxu0 %v2602
        %2616 = vmatpush.bf16.msra.mxu0 %v2601
        %2617 = vmatpush.bf16.msra.mxu0 %v2600
        %2618 = vmatpush.bf16.msra.mxu0 %v2599
        %2619 = vmatpush.bf16.msra.mxu0 %v2598
        %2620 = vmatpush.bf16.msra.mxu0 %v2597
        %2621 = vmatmul.bf16.gmra.mxu0 %v2557
        %v2622 = vpop.f32.mrf.mxu0
        %v2623 = vadd.f32 0.0, %v2622
        %v2624 = vpop.f32.mrf.mxu0
        %v2625 = vadd.f32 0.0, %v2624
        %2626 = vmatmul.bf16.gmra.mxu0 %v2558
        %v2627 = vpop.f32.mrf.mxu0
        %v2628 = vadd.f32 0.0, %v2627
        %v2629 = vpop.f32.mrf.mxu0
        %v2630 = vadd.f32 0.0, %v2629
        %2631 = vmatmul.bf16.gmra.mxu0 %v2559
        %v2632 = vpop.f32.mrf.mxu0
        %v2633 = vadd.f32 0.0, %v2632
        %v2634 = vpop.f32.mrf.mxu0
        %v2635 = vadd.f32 0.0, %v2634
        %2636 = vmatmul.bf16.gmra.mxu0 %v2560
        %v2637 = vpop.f32.mrf.mxu0
        %v2638 = vadd.f32 0.0, %v2637
        %v2639 = vpop.f32.mrf.mxu0
        %v2640 = vadd.f32 0.0, %v2639
        %2641 = vdwg.mxu0
        %v2642 = vrcp.pop %v2143
        %v2643 = vrcp.pop %v2145
        %v2644 = vrcp.pop %v2147
        %v2645 = vrcp.pop %v2149
        %v2646 = vrcp.pop %v2151
        %v2647 = vrcp.pop %v2153
        %v2648 = vrcp.pop %v2155
        %v2649 = vrcp.pop %v2157
        %v2650 = vrcp.pop %v2159
        %v2651 = vrcp.pop %v2161
        %v2652 = vrcp.pop %v2163
        %v2653 = vrcp.pop %v2165
        %v2654 = vrcp.pop %v2167
        %v2655 = vrcp.pop %v2169
        %v2656 = vrcp.pop %v2171
        %v2657 = vrcp.pop %v2173
        %v2658 = vrcp.pop %v2175
        %v2659 = vrcp.pop %v2177
        %v2660 = vrcp.pop %v2179
        %v2661 = vrcp.pop %v2181
        %v2662 = vrcp.pop %v2183
        %v2663 = vrcp.pop %v2185
        %v2664 = vrcp.pop %v2187
        %v2665 = vrcp.pop %v2189
        %v2666 = vrcp.pop %v2191
        %v2667 = vrcp.pop %v2193
        %v2668 = vrcp.pop %v2195
        %v2669 = vrcp.pop %v2197
        %v2670 = vrcp.pop %v2199
        %v2671 = vrcp.pop %v2201
        %v2672 = vrcp.pop %v2203
        %v2673 = vrcp.pop %v2205
        %v2674 = vmul.f32 %v2320, %v2642
        %v2675 = vmul.f32 %v2322, %v2643
        %v2676 = vmul.f32 %v2325, %v2644
        %v2677 = vmul.f32 %v2327, %v2645
        %v2678 = vmul.f32 %v2330, %v2646
        %v2679 = vmul.f32 %v2332, %v2647
        %v2680 = vmul.f32 %v2335, %v2648
        %v2681 = vmul.f32 %v2337, %v2649
        %v2682 = vmul.f32 %v2421, %v2650
        %v2683 = vmul.f32 %v2423, %v2651
        %v2684 = vmul.f32 %v2426, %v2652
        %v2685 = vmul.f32 %v2428, %v2653
        %v2686 = vmul.f32 %v2431, %v2654
        %v2687 = vmul.f32 %v2433, %v2655
        %v2688 = vmul.f32 %v2436, %v2656
        %v2689 = vmul.f32 %v2438, %v2657
        %v2690 = vmul.f32 %v2522, %v2658
        %v2691 = vmul.f32 %v2524, %v2659
        %v2692 = vmul.f32 %v2527, %v2660
        %v2693 = vmul.f32 %v2529, %v2661
        %v2694 = vmul.f32 %v2532, %v2662
        %v2695 = vmul.f32 %v2534, %v2663
        %v2696 = vmul.f32 %v2537, %v2664
        %v2697 = vmul.f32 %v2539, %v2665
        %v2698 = vmul.f32 %v2623, %v2666
        %v2699 = vmul.f32 %v2625, %v2667
        %v2700 = vmul.f32 %v2628, %v2668
        %v2701 = vmul.f32 %v2630, %v2669
        %v2702 = vmul.f32 %v2633, %v2670
        %v2703 = vmul.f32 %v2635, %v2671
        %v2704 = vmul.f32 %v2638, %v2672
        %v2705 = vmul.f32 %v2640, %v2673
        %2714 = vrot.lane.b32.xlu0 %v2682, 32
        %v2715 = vpop.permute.xlu0 %2714
        %2716 = vrot.lane.b32.xlu0 %v2683, 32
        %v2717 = vpop.permute.xlu0 %2716
        %2718 = vrot.lane.b32.xlu0 %v2684, 32
        %v2719 = vpop.permute.xlu0 %2718
        %2720 = vrot.lane.b32.xlu0 %v2685, 32
        %v2721 = vpop.permute.xlu0 %2720
        %2722 = vrot.lane.b32.xlu0 %v2686, 32
        %v2723 = vpop.permute.xlu0 %2722
        %2724 = vrot.lane.b32.xlu0 %v2687, 32
        %v2725 = vpop.permute.xlu0 %2724
        %2726 = vrot.lane.b32.xlu0 %v2688, 32
        %v2727 = vpop.permute.xlu0 %2726
        %2728 = vrot.lane.b32.xlu0 %v2689, 32
        %v2729 = vpop.permute.xlu0 %2728
        %2746 = vrot.lane.b32.xlu0 %v2690, 64
        %v2747 = vpop.permute.xlu0 %2746
        %2748 = vrot.lane.b32.xlu0 %v2691, 64
        %v2749 = vpop.permute.xlu0 %2748
        %2750 = vrot.lane.b32.xlu0 %v2692, 64
        %v2751 = vpop.permute.xlu0 %2750
        %2752 = vrot.lane.b32.xlu0 %v2693, 64
        %v2753 = vpop.permute.xlu0 %2752
        %2754 = vrot.lane.b32.xlu0 %v2694, 64
        %v2755 = vpop.permute.xlu0 %2754
        %2756 = vrot.lane.b32.xlu0 %v2695, 64
        %v2757 = vpop.permute.xlu0 %2756
        %2758 = vrot.lane.b32.xlu0 %v2696, 64
        %v2759 = vpop.permute.xlu0 %2758
        %2760 = vrot.lane.b32.xlu0 %v2697, 64
        %v2761 = vpop.permute.xlu0 %2760
        %2778 = vrot.lane.b32.xlu0 %v2698, 96
        %v2779 = vpop.permute.xlu0 %2778
        %2780 = vrot.lane.b32.xlu0 %v2699, 96
        %v2781 = vpop.permute.xlu0 %2780
        %2782 = vrot.lane.b32.xlu0 %v2700, 96
        %v2783 = vpop.permute.xlu0 %2782
        %2784 = vrot.lane.b32.xlu0 %v2701, 96
        %v2785 = vpop.permute.xlu0 %2784
        %2786 = vrot.lane.b32.xlu0 %v2702, 96
        %v2787 = vpop.permute.xlu0 %2786
        %2788 = vrot.lane.b32.xlu0 %v2703, 96
        %v2789 = vpop.permute.xlu0 %2788
        %2790 = vrot.lane.b32.xlu0 %v2704, 96
        %v2791 = vpop.permute.xlu0 %2790
        %2792 = vrot.lane.b32.xlu0 %v2705, 96
        %v2793 = vpop.permute.xlu0 %2792
        %v2802 = vsel %vm1565, %v2674, %v2715
        %v2803 = vsel %vm1565, %v2675, %v2717
        %v2804 = vsel %vm1565, %v2676, %v2719
        %v2805 = vsel %vm1565, %v2677, %v2721
        %v2806 = vsel %vm1565, %v2678, %v2723
        %v2807 = vsel %vm1565, %v2679, %v2725
        %v2808 = vsel %vm1565, %v2680, %v2727
        %v2809 = vsel %vm1565, %v2681, %v2729
        %vm2810 = vcmask 523264
        %v2811 = vsel %vm2810, %v2802, %v2747
        %v2812 = vsel %vm2810, %v2803, %v2749
        %v2813 = vsel %vm2810, %v2804, %v2751
        %v2814 = vsel %vm2810, %v2805, %v2753
        %v2815 = vsel %vm2810, %v2806, %v2755
        %v2816 = vsel %vm2810, %v2807, %v2757
        %v2817 = vsel %vm2810, %v2808, %v2759
        %v2818 = vsel %vm2810, %v2809, %v2761
        %vm2819 = vcmask 785408
        %v2820 = vsel %vm2819, %v2811, %v2779
        %v2821 = vsel %vm2819, %v2812, %v2781
        %v2822 = vsel %vm2819, %v2813, %v2783
        %v2823 = vsel %vm2819, %v2814, %v2785
        %v2824 = vsel %vm2819, %v2815, %v2787
        %v2825 = vsel %vm2819, %v2816, %v2789
        %v2826 = vsel %vm2819, %v2817, %v2791
        %v2827 = vsel %vm2819, %v2818, %v2793
        %v2828 = vpack.c.bf16 %v2821, %v2820
        %v2829 = vpack.c.bf16 %v2823, %v2822
        %v2830 = vpack.c.bf16 %v2825, %v2824
        %v2831 = vpack.c.bf16 %v2827, %v2826
        %v2832 = vld [vmem:[#allocation10] sm:$0xf]
        %v2833 = vld [vmem:[#allocation10 + $0x4] sm:$0xf]
        %v2834 = vld [vmem:[#allocation10 + $0x8] sm:$0xf]
        %v2835 = vld [vmem:[#allocation10 + $0xc] sm:$0xf]
        %v2836 = vld [vmem:[#allocation10 + $0x10] sm:$0xf]
        %v2837 = vld [vmem:[#allocation10 + $0x14] sm:$0xf]
        %v2838 = vld [vmem:[#allocation10 + $0x18] sm:$0xf]
        %v2839 = vld [vmem:[#allocation10 + $0x1c] sm:$0xf]
        %v2840 = vld [vmem:[#allocation10 + $0x20] sm:$0xf]
        %v2841 = vld [vmem:[#allocation10 + $0x24] sm:$0xf]
        %v2842 = vld [vmem:[#allocation10 + $0x28] sm:$0xf]
        %v2843 = vld [vmem:[#allocation10 + $0x2c] sm:$0xf]
        %v2844 = vld [vmem:[#allocation10 + $0x30] sm:$0xf]
        %v2845 = vld [vmem:[#allocation10 + $0x34] sm:$0xf]
        %v2846 = vld [vmem:[#allocation10 + $0x38] sm:$0xf]
        %v2847 = vld [vmem:[#allocation10 + $0x3c] sm:$0xf]
        %v2848 = vld [vmem:[%s4] sm:$0x1]
        %v2850 = vperm.slane %v2848, 0
        %v2868 = vunpack.c.l.b16 %v2832
        %v2869 = vunpack.c.l.b16 %v2833
        %v2870 = vunpack.c.l.b16 %v2834
        %v2871 = vunpack.c.l.b16 %v2835
        %v2872 = vunpack.c.l.b16 %v2836
        %v2873 = vunpack.c.l.b16 %v2837
        %v2874 = vunpack.c.l.b16 %v2838
        %v2875 = vunpack.c.l.b16 %v2839
        %v2876 = vunpack.c.l.b16 %v2840
        %v2877 = vunpack.c.l.b16 %v2841
        %v2878 = vunpack.c.l.b16 %v2842
        %v2879 = vunpack.c.l.b16 %v2843
        %v2880 = vunpack.c.l.b16 %v2844
        %v2881 = vunpack.c.l.b16 %v2845
        %v2882 = vunpack.c.l.b16 %v2846
        %v2883 = vunpack.c.l.b16 %v2847
        %v2884 = vpack.c.b16 %v2869, %v2868
        %v2885 = vpack.c.b16 %v2871, %v2870
        %v2886 = vpack.c.b16 %v2873, %v2872
        %v2887 = vpack.c.b16 %v2875, %v2874
        %v2888 = vpack.c.b16 %v2877, %v2876
        %v2889 = vpack.c.b16 %v2879, %v2878
        %v2890 = vpack.c.b16 %v2881, %v2880
        %v2891 = vpack.c.b16 %v2883, %v2882
        %2900 = vmatpush.bf16.msra.mxu0 %v2891
        %2901 = vmatpush.bf16.msra.mxu0 %v2890
        %2902 = vmatpush.bf16.msra.mxu0 %v2889
        %2903 = vmatpush.bf16.msra.mxu0 %v2888
        %2904 = vmatpush.bf16.msra.mxu0 %v2887
        %2905 = vmatpush.bf16.msra.mxu0 %v2886
        %2906 = vmatpush.bf16.msra.mxu0 %v2885
        %2907 = vmatpush.bf16.msra.mxu0 %v2884
        %2908 = vmatmul.bf16.gmra.mxu0 %v2828
        %v2909 = vpop.f32.mrf.mxu0
        %v2910 = vadd.f32 %v2850, %v2909
        %v2911 = vpop.f32.mrf.mxu0
        %v2912 = vadd.f32 %v2850, %v2911
        %2913 = vmatmul.bf16.gmra.mxu0 %v2829
        %v2914 = vpop.f32.mrf.mxu0
        %v2915 = vadd.f32 %v2850, %v2914
        %v2916 = vpop.f32.mrf.mxu0
        %v2917 = vadd.f32 %v2850, %v2916
        %2918 = vmatmul.bf16.gmra.mxu0 %v2830
        %v2919 = vpop.f32.mrf.mxu0
        %v2920 = vadd.f32 %v2850, %v2919
        %v2921 = vpop.f32.mrf.mxu0
        %v2922 = vadd.f32 %v2850, %v2921
        %2923 = vmatmul.bf16.gmra.mxu0 %v2831
        %v2924 = vpop.f32.mrf.mxu0
        %v2925 = vadd.f32 %v2850, %v2924
        %v2926 = vpop.f32.mrf.mxu0
        %v2927 = vadd.f32 %v2850, %v2926
        %2928 = vdwg.mxu0
        %v2929 = vadd.f32 %v2910, %v1216
        %v2930 = vadd.f32 %v2912, %v1217
        %v2931 = vadd.f32 %v2915, %v1218
        %v2932 = vadd.f32 %v2917, %v1219
        %v2933 = vadd.f32 %v2920, %v1220
        %v2934 = vadd.f32 %v2922, %v1221
        %v2935 = vadd.f32 %v2925, %v1222
        %v2936 = vadd.f32 %v2927, %v1223
        %v2937 = vld [vmem:[%s5] sm:$0x1]
        %v2938 = vld [vmem:[%s6] sm:$0x1]
        %2939 = vadd.xlane.f32.xlu0 %v2929
        %v2940 = vpop.xlane.xlu0 %2939
        %2941 = vadd.xlane.f32.xlu0 %v2930
        %v2942 = vpop.xlane.xlu0 %2941
        %2943 = vadd.xlane.f32.xlu0 %v2931
        %v2944 = vpop.xlane.xlu0 %2943
        %2945 = vadd.xlane.f32.xlu0 %v2932
        %v2946 = vpop.xlane.xlu0 %2945
        %2947 = vadd.xlane.f32.xlu0 %v2933
        %v2948 = vpop.xlane.xlu0 %2947
        %2949 = vadd.xlane.f32.xlu0 %v2934
        %v2950 = vpop.xlane.xlu0 %2949
        %2951 = vadd.xlane.f32.xlu0 %v2935
        %v2952 = vpop.xlane.xlu0 %2951
        %2953 = vadd.xlane.f32.xlu0 %v2936
        %v2954 = vpop.xlane.xlu0 %2953
        %v2955 = vrcp.pop 128.0
        %v2956 = vmul.f32 128.0, %v2955
        %v2957 = vsub.f32 1.0, %v2956
        %v2958 = vmul.f32 %v2955, %v2957
        %v2959 = vadd.f32 %v2955, %v2958
        %vm2960 = vweird.f32 %v2955
        %v2961 = vsel %vm2960, %v2955, %v2959
        %v2962 = vmul.f32 %v2940, %v2961
        %v2963 = vmul.f32 %v2942, %v2961
        %v2964 = vmul.f32 %v2944, %v2961
        %v2965 = vmul.f32 %v2946, %v2961
        %v2966 = vmul.f32 %v2948, %v2961
        %v2967 = vmul.f32 %v2950, %v2961
        %v2968 = vmul.f32 %v2952, %v2961
        %v2969 = vmul.f32 %v2954, %v2961
        %v2970 = vsub.f32 %v2929, %v2962
        %v2971 = vsub.f32 %v2930, %v2963
        %v2972 = vsub.f32 %v2931, %v2964
        %v2973 = vsub.f32 %v2932, %v2965
        %v2974 = vsub.f32 %v2933, %v2966
        %v2975 = vsub.f32 %v2934, %v2967
        %v2976 = vsub.f32 %v2935, %v2968
        %v2977 = vsub.f32 %v2936, %v2969
        %v2978 = vmul.f32 %v2970, %v2970
        %v2979 = vmul.f32 %v2971, %v2971
        %v2980 = vmul.f32 %v2972, %v2972
        %v2981 = vmul.f32 %v2973, %v2973
        %v2982 = vmul.f32 %v2974, %v2974
        %v2983 = vmul.f32 %v2975, %v2975
        %v2984 = vmul.f32 %v2976, %v2976
        %v2985 = vmul.f32 %v2977, %v2977
        %2986 = vadd.xlane.f32.xlu0 %v2978
        %v2987 = vpop.xlane.xlu0 %2986
        %2988 = vadd.xlane.f32.xlu0 %v2979
        %v2989 = vpop.xlane.xlu0 %2988
        %2990 = vadd.xlane.f32.xlu0 %v2980
        %v2991 = vpop.xlane.xlu0 %2990
        %2992 = vadd.xlane.f32.xlu0 %v2981
        %v2993 = vpop.xlane.xlu0 %2992
        %2994 = vadd.xlane.f32.xlu0 %v2982
        %v2995 = vpop.xlane.xlu0 %2994
        %2996 = vadd.xlane.f32.xlu0 %v2983
        %v2997 = vpop.xlane.xlu0 %2996
        %2998 = vadd.xlane.f32.xlu0 %v2984
        %v2999 = vpop.xlane.xlu0 %2998
        %3000 = vadd.xlane.f32.xlu0 %v2985
        %v3001 = vpop.xlane.xlu0 %3000
        %v3002 = vmul.f32 %v2987, %v2961
        %v3003 = vmul.f32 %v2989, %v2961
        %v3004 = vmul.f32 %v2991, %v2961
        %v3005 = vmul.f32 %v2993, %v2961
        %v3006 = vmul.f32 %v2995, %v2961
        %v3007 = vmul.f32 %v2997, %v2961
        %v3008 = vmul.f32 %v2999, %v2961
        %v3009 = vmul.f32 %v3001, %v2961
        %v3010 = vadd.f32 %v3002, 1e-05
        %v3011 = vadd.f32 %v3003, 1e-05
        %v3012 = vadd.f32 %v3004, 1e-05
        %v3013 = vadd.f32 %v3005, 1e-05
        %v3014 = vadd.f32 %v3006, 1e-05
        %v3015 = vadd.f32 %v3007, 1e-05
        %v3016 = vadd.f32 %v3008, 1e-05
        %v3017 = vadd.f32 %v3009, 1e-05
        %v3018 = vrsqrt.pop %v3010
        %v3019 = vmul.f32 %v3018, %v3010
        %v3020 = vmul.f32 %v3019, %v3018
        %v3021 = vmul.f32 0.5, %v3020
        %v3022 = vsub.f32 1.5, %v3021
        %v3023 = vmul.f32 %v3018, %v3022
        %vm3024 = vweird.f32 %v3010
        %vm3025 = vweird.f32 %v3018
        %vm3026 = vmor %vm3024, %vm3025
        %v3027 = vsel %vm3026, %v3018, %v3023
        %v3028 = vrsqrt.pop %v3011
        %v3029 = vmul.f32 %v3028, %v3011
        %v3030 = vmul.f32 %v3029, %v3028
        %v3031 = vmul.f32 0.5, %v3030
        %v3032 = vsub.f32 1.5, %v3031
        %v3033 = vmul.f32 %v3028, %v3032
        %vm3034 = vweird.f32 %v3011
        %vm3035 = vweird.f32 %v3028
        %vm3036 = vmor %vm3034, %vm3035
        %v3037 = vsel %vm3036, %v3028, %v3033
        %v3038 = vrsqrt.pop %v3012
        %v3039 = vmul.f32 %v3038, %v3012
        %v3040 = vmul.f32 %v3039, %v3038
        %v3041 = vmul.f32 0.5, %v3040
        %v3042 = vsub.f32 1.5, %v3041
        %v3043 = vmul.f32 %v3038, %v3042
        %vm3044 = vweird.f32 %v3012
        %vm3045 = vweird.f32 %v3038
        %vm3046 = vmor %vm3044, %vm3045
        %v3047 = vsel %vm3046, %v3038, %v3043
        %v3048 = vrsqrt.pop %v3013
        %v3049 = vmul.f32 %v3048, %v3013
        %v3050 = vmul.f32 %v3049, %v3048
        %v3051 = vmul.f32 0.5, %v3050
        %v3052 = vsub.f32 1.5, %v3051
        %v3053 = vmul.f32 %v3048, %v3052
        %vm3054 = vweird.f32 %v3013
        %vm3055 = vweird.f32 %v3048
        %vm3056 = vmor %vm3054, %vm3055
        %v3057 = vsel %vm3056, %v3048, %v3053
        %v3058 = vrsqrt.pop %v3014
        %v3059 = vmul.f32 %v3058, %v3014
        %v3060 = vmul.f32 %v3059, %v3058
        %v3061 = vmul.f32 0.5, %v3060
        %v3062 = vsub.f32 1.5, %v3061
        %v3063 = vmul.f32 %v3058, %v3062
        %vm3064 = vweird.f32 %v3014
        %vm3065 = vweird.f32 %v3058
        %vm3066 = vmor %vm3064, %vm3065
        %v3067 = vsel %vm3066, %v3058, %v3063
        %v3068 = vrsqrt.pop %v3015
        %v3069 = vmul.f32 %v3068, %v3015
        %v3070 = vmul.f32 %v3069, %v3068
        %v3071 = vmul.f32 0.5, %v3070
        %v3072 = vsub.f32 1.5, %v3071
        %v3073 = vmul.f32 %v3068, %v3072
        %vm3074 = vweird.f32 %v3015
        %vm3075 = vweird.f32 %v3068
        %vm3076 = vmor %vm3074, %vm3075
        %v3077 = vsel %vm3076, %v3068, %v3073
        %v3078 = vrsqrt.pop %v3016
        %v3079 = vmul.f32 %v3078, %v3016
        %v3080 = vmul.f32 %v3079, %v3078
        %v3081 = vmul.f32 0.5, %v3080
        %v3082 = vsub.f32 1.5, %v3081
        %v3083 = vmul.f32 %v3078, %v3082
        %vm3084 = vweird.f32 %v3016
        %vm3085 = vweird.f32 %v3078
        %vm3086 = vmor %vm3084, %vm3085
        %v3087 = vsel %vm3086, %v3078, %v3083
        %v3088 = vrsqrt.pop %v3017
        %v3089 = vmul.f32 %v3088, %v3017
        %v3090 = vmul.f32 %v3089, %v3088
        %v3091 = vmul.f32 0.5, %v3090
        %v3092 = vsub.f32 1.5, %v3091
        %v3093 = vmul.f32 %v3088, %v3092
        %vm3094 = vweird.f32 %v3017
        %vm3095 = vweird.f32 %v3088
        %vm3096 = vmor %vm3094, %vm3095
        %v3097 = vsel %vm3096, %v3088, %v3093
        %v3098 = vmul.f32 %v2970, %v3027
        %v3099 = vmul.f32 %v2971, %v3037
        %v3100 = vmul.f32 %v2972, %v3047
        %v3101 = vmul.f32 %v2973, %v3057
        %v3102 = vmul.f32 %v2974, %v3067
        %v3103 = vmul.f32 %v2975, %v3077
        %v3104 = vmul.f32 %v2976, %v3087
        %v3105 = vmul.f32 %v2977, %v3097
        %v3107 = vperm.slane %v2937, 0
        %v3109 = vmul.f32 %v3098, %v3107
        %v3110 = vmul.f32 %v3099, %v3107
        %v3111 = vmul.f32 %v3100, %v3107
        %v3112 = vmul.f32 %v3101, %v3107
        %v3113 = vmul.f32 %v3102, %v3107
        %v3114 = vmul.f32 %v3103, %v3107
        %v3115 = vmul.f32 %v3104, %v3107
        %v3116 = vmul.f32 %v3105, %v3107
        %v3118 = vperm.slane %v2938, 0
        %v3120 = vadd.f32 %v3109, %v3118
        %v3121 = vadd.f32 %v3110, %v3118
        %v3122 = vadd.f32 %v3111, %v3118
        %v3123 = vadd.f32 %v3112, %v3118
        %v3124 = vadd.f32 %v3113, %v3118
        %v3125 = vadd.f32 %v3114, %v3118
        %v3126 = vadd.f32 %v3115, %v3118
        %v3127 = vadd.f32 %v3116, %v3118
        %v3128 = vpack.c.bf16 %v3121, %v3120
        %v3129 = vpack.c.bf16 %v3123, %v3122
        %v3130 = vpack.c.bf16 %v3125, %v3124
        %v3131 = vpack.c.bf16 %v3127, %v3126
        %v3132 = vld [vmem:[#allocation12] sm:$0xff]
        %v3133 = vld [vmem:[#allocation12 + $0x8] sm:$0xff]
        %v3134 = vld [vmem:[#allocation12 + $0x10] sm:$0xff]
        %v3135 = vld [vmem:[#allocation12 + $0x18] sm:$0xff]
        %v3136 = vld [vmem:[#allocation12 + $0x20] sm:$0xff]
        %v3137 = vld [vmem:[#allocation12 + $0x28] sm:$0xff]
        %v3138 = vld [vmem:[#allocation12 + $0x30] sm:$0xff]
        %v3139 = vld [vmem:[#allocation12 + $0x38] sm:$0xff]
        %v3140 = vld [vmem:[#allocation12 + $0x40] sm:$0xff]
        %v3141 = vld [vmem:[#allocation12 + $0x48] sm:$0xff]
        %v3142 = vld [vmem:[#allocation12 + $0x50] sm:$0xff]
        %v3143 = vld [vmem:[#allocation12 + $0x58] sm:$0xff]
        %v3144 = vld [vmem:[#allocation12 + $0x60] sm:$0xff]
        %v3145 = vld [vmem:[#allocation12 + $0x68] sm:$0xff]
        %v3146 = vld [vmem:[#allocation12 + $0x70] sm:$0xff]
        %v3147 = vld [vmem:[#allocation12 + $0x78] sm:$0xff]
        %v3148 = vld [vmem:[%s8] sm:$0x3]
        %v3150 = vperm.slane %v3148, 0
        %v3151 = vperm.slane %v3148, 1
        %v3170 = vunpack.c.l.b16 %v3132
        %v3171 = vunpack.c.h.b16 %v3132
        %v3172 = vunpack.c.l.b16 %v3133
        %v3173 = vunpack.c.h.b16 %v3133
        %v3174 = vunpack.c.l.b16 %v3134
        %v3175 = vunpack.c.h.b16 %v3134
        %v3176 = vunpack.c.l.b16 %v3135
        %v3177 = vunpack.c.h.b16 %v3135
        %v3178 = vunpack.c.l.b16 %v3136
        %v3179 = vunpack.c.h.b16 %v3136
        %v3180 = vunpack.c.l.b16 %v3137
        %v3181 = vunpack.c.h.b16 %v3137
        %v3182 = vunpack.c.l.b16 %v3138
        %v3183 = vunpack.c.h.b16 %v3138
        %v3184 = vunpack.c.l.b16 %v3139
        %v3185 = vunpack.c.h.b16 %v3139
        %v3186 = vunpack.c.l.b16 %v3140
        %v3187 = vunpack.c.h.b16 %v3140
        %v3188 = vunpack.c.l.b16 %v3141
        %v3189 = vunpack.c.h.b16 %v3141
        %v3190 = vunpack.c.l.b16 %v3142
        %v3191 = vunpack.c.h.b16 %v3142
        %v3192 = vunpack.c.l.b16 %v3143
        %v3193 = vunpack.c.h.b16 %v3143
        %v3194 = vunpack.c.l.b16 %v3144
        %v3195 = vunpack.c.h.b16 %v3144
        %v3196 = vunpack.c.l.b16 %v3145
        %v3197 = vunpack.c.h.b16 %v3145
        %v3198 = vunpack.c.l.b16 %v3146
        %v3199 = vunpack.c.h.b16 %v3146
        %v3200 = vunpack.c.l.b16 %v3147
        %v3201 = vunpack.c.h.b16 %v3147
        %v3202 = vpack.c.b16 %v3172, %v3170
        %v3203 = vpack.c.b16 %v3173, %v3171
        %v3204 = vpack.c.b16 %v3176, %v3174
        %v3205 = vpack.c.b16 %v3177, %v3175
        %v3206 = vpack.c.b16 %v3180, %v3178
        %v3207 = vpack.c.b16 %v3181, %v3179
        %v3208 = vpack.c.b16 %v3184, %v3182
        %v3209 = vpack.c.b16 %v3185, %v3183
        %v3210 = vpack.c.b16 %v3188, %v3186
        %v3211 = vpack.c.b16 %v3189, %v3187
        %v3212 = vpack.c.b16 %v3192, %v3190
        %v3213 = vpack.c.b16 %v3193, %v3191
        %v3214 = vpack.c.b16 %v3196, %v3194
        %v3215 = vpack.c.b16 %v3197, %v3195
        %v3216 = vpack.c.b16 %v3200, %v3198
        %v3217 = vpack.c.b16 %v3201, %v3199
        %3234 = vmatpush.bf16.msra.mxu0 %v3216
        %3235 = vmatpush.bf16.msra.mxu0 %v3214
        %3236 = vmatpush.bf16.msra.mxu0 %v3212
        %3237 = vmatpush.bf16.msra.mxu0 %v3210
        %3238 = vmatpush.bf16.msra.mxu0 %v3208
        %3239 = vmatpush.bf16.msra.mxu0 %v3206
        %3240 = vmatpush.bf16.msra.mxu0 %v3204
        %3241 = vmatpush.bf16.msra.mxu0 %v3202
        %3242 = vmatmul.bf16.gmra.mxu0 %v3128
        %v3243 = vpop.f32.mrf.mxu0
        %v3244 = vadd.f32 %v3150, %v3243
        %v3245 = vpop.f32.mrf.mxu0
        %v3246 = vadd.f32 %v3150, %v3245
        %3247 = vmatmul.bf16.gmra.mxu0 %v3129
        %v3248 = vpop.f32.mrf.mxu0
        %v3249 = vadd.f32 %v3150, %v3248
        %v3250 = vpop.f32.mrf.mxu0
        %v3251 = vadd.f32 %v3150, %v3250
        %3252 = vmatmul.bf16.gmra.mxu0 %v3130
        %v3253 = vpop.f32.mrf.mxu0
        %v3254 = vadd.f32 %v3150, %v3253
        %v3255 = vpop.f32.mrf.mxu0
        %v3256 = vadd.f32 %v3150, %v3255
        %3257 = vmatmul.bf16.gmra.mxu0 %v3131
        %v3258 = vpop.f32.mrf.mxu0
        %v3259 = vadd.f32 %v3150, %v3258
        %v3260 = vpop.f32.mrf.mxu0
        %v3261 = vadd.f32 %v3150, %v3260
        %3262 = vdwg.mxu0
        %3263 = vmatpush.bf16.msra.mxu0 %v3217
        %3264 = vmatpush.bf16.msra.mxu0 %v3215
        %3265 = vmatpush.bf16.msra.mxu0 %v3213
        %3266 = vmatpush.bf16.msra.mxu0 %v3211
        %3267 = vmatpush.bf16.msra.mxu0 %v3209
        %3268 = vmatpush.bf16.msra.mxu0 %v3207
        %3269 = vmatpush.bf16.msra.mxu0 %v3205
        %3270 = vmatpush.bf16.msra.mxu0 %v3203
        %3271 = vmatmul.bf16.gmra.mxu0 %v3128
        %v3272 = vpop.f32.mrf.mxu0
        %v3273 = vadd.f32 %v3151, %v3272
        %v3274 = vpop.f32.mrf.mxu0
        %v3275 = vadd.f32 %v3151, %v3274
        %3276 = vmatmul.bf16.gmra.mxu0 %v3129
        %v3277 = vpop.f32.mrf.mxu0
        %v3278 = vadd.f32 %v3151, %v3277
        %v3279 = vpop.f32.mrf.mxu0
        %v3280 = vadd.f32 %v3151, %v3279
        %3281 = vmatmul.bf16.gmra.mxu0 %v3130
        %v3282 = vpop.f32.mrf.mxu0
        %v3283 = vadd.f32 %v3151, %v3282
        %v3284 = vpop.f32.mrf.mxu0
        %v3285 = vadd.f32 %v3151, %v3284
        %3286 = vmatmul.bf16.gmra.mxu0 %v3131
        %v3287 = vpop.f32.mrf.mxu0
        %v3288 = vadd.f32 %v3151, %v3287
        %v3289 = vpop.f32.mrf.mxu0
        %v3290 = vadd.f32 %v3151, %v3289
        %3291 = vdwg.mxu0
        %v3292 = vmax.f32 %v3244, 0.0
        %v3293 = vmax.f32 %v3273, 0.0
        %v3294 = vmax.f32 %v3246, 0.0
        %v3295 = vmax.f32 %v3275, 0.0
        %v3296 = vmax.f32 %v3249, 0.0
        %v3297 = vmax.f32 %v3278, 0.0
        %v3298 = vmax.f32 %v3251, 0.0
        %v3299 = vmax.f32 %v3280, 0.0
        %v3300 = vmax.f32 %v3254, 0.0
        %v3301 = vmax.f32 %v3283, 0.0
        %v3302 = vmax.f32 %v3256, 0.0
        %v3303 = vmax.f32 %v3285, 0.0
        %v3304 = vmax.f32 %v3259, 0.0
        %v3305 = vmax.f32 %v3288, 0.0
        %v3306 = vmax.f32 %v3261, 0.0
        %v3307 = vmax.f32 %v3290, 0.0
        %v3308 = vpack.c.bf16 %v3294, %v3292
        %v3309 = vpack.c.bf16 %v3295, %v3293
        %v3310 = vpack.c.bf16 %v3298, %v3296
        %v3311 = vpack.c.bf16 %v3299, %v3297
        %v3312 = vpack.c.bf16 %v3302, %v3300
        %v3313 = vpack.c.bf16 %v3303, %v3301
        %v3314 = vpack.c.bf16 %v3306, %v3304
        %v3315 = vpack.c.bf16 %v3307, %v3305
        %v3316 = vld [vmem:[#allocation13] sm:$0xf]
        %v3317 = vld [vmem:[#allocation13 + $0x4] sm:$0xf]
        %v3318 = vld [vmem:[#allocation13 + $0x8] sm:$0xf]
        %v3319 = vld [vmem:[#allocation13 + $0xc] sm:$0xf]
        %v3320 = vld [vmem:[#allocation13 + $0x10] sm:$0xf]
        %v3321 = vld [vmem:[#allocation13 + $0x14] sm:$0xf]
        %v3322 = vld [vmem:[#allocation13 + $0x18] sm:$0xf]
        %v3323 = vld [vmem:[#allocation13 + $0x1c] sm:$0xf]
        %v3324 = vld [vmem:[#allocation13 + $0x20] sm:$0xf]
        %v3325 = vld [vmem:[#allocation13 + $0x24] sm:$0xf]
        %v3326 = vld [vmem:[#allocation13 + $0x28] sm:$0xf]
        %v3327 = vld [vmem:[#allocation13 + $0x2c] sm:$0xf]
        %v3328 = vld [vmem:[#allocation13 + $0x30] sm:$0xf]
        %v3329 = vld [vmem:[#allocation13 + $0x34] sm:$0xf]
        %v3330 = vld [vmem:[#allocation13 + $0x38] sm:$0xf]
        %v3331 = vld [vmem:[#allocation13 + $0x3c] sm:$0xf]
        %v3332 = vld [vmem:[#allocation13 + $0x40] sm:$0xf]
        %v3333 = vld [vmem:[#allocation13 + $0x44] sm:$0xf]
        %v3334 = vld [vmem:[#allocation13 + $0x48] sm:$0xf]
        %v3335 = vld [vmem:[#allocation13 + $0x4c] sm:$0xf]
        %v3336 = vld [vmem:[#allocation13 + $0x50] sm:$0xf]
        %v3337 = vld [vmem:[#allocation13 + $0x54] sm:$0xf]
        %v3338 = vld [vmem:[#allocation13 + $0x58] sm:$0xf]
        %v3339 = vld [vmem:[#allocation13 + $0x5c] sm:$0xf]
        %v3340 = vld [vmem:[#allocation13 + $0x60] sm:$0xf]
        %v3341 = vld [vmem:[#allocation13 + $0x64] sm:$0xf]
        %v3342 = vld [vmem:[#allocation13 + $0x68] sm:$0xf]
        %v3343 = vld [vmem:[#allocation13 + $0x6c] sm:$0xf]
        %v3344 = vld [vmem:[#allocation13 + $0x70] sm:$0xf]
        %v3345 = vld [vmem:[#allocation13 + $0x74] sm:$0xf]
        %v3346 = vld [vmem:[#allocation13 + $0x78] sm:$0xf]
        %v3347 = vld [vmem:[#allocation13 + $0x7c] sm:$0xf]
        %v3348 = vld [vmem:[%s10] sm:$0x1]
        %v3350 = vperm.slane %v3348, 0
        %v3384 = vunpack.c.l.b16 %v3316
        %v3385 = vunpack.c.l.b16 %v3317
        %v3386 = vunpack.c.l.b16 %v3318
        %v3387 = vunpack.c.l.b16 %v3319
        %v3388 = vunpack.c.l.b16 %v3320
        %v3389 = vunpack.c.l.b16 %v3321
        %v3390 = vunpack.c.l.b16 %v3322
        %v3391 = vunpack.c.l.b16 %v3323
        %v3392 = vunpack.c.l.b16 %v3324
        %v3393 = vunpack.c.l.b16 %v3325
        %v3394 = vunpack.c.l.b16 %v3326
        %v3395 = vunpack.c.l.b16 %v3327
        %v3396 = vunpack.c.l.b16 %v3328
        %v3397 = vunpack.c.l.b16 %v3329
        %v3398 = vunpack.c.l.b16 %v3330
        %v3399 = vunpack.c.l.b16 %v3331
        %v3400 = vunpack.c.l.b16 %v3332
        %v3401 = vunpack.c.l.b16 %v3333
        %v3402 = vunpack.c.l.b16 %v3334
        %v3403 = vunpack.c.l.b16 %v3335
        %v3404 = vunpack.c.l.b16 %v3336
        %v3405 = vunpack.c.l.b16 %v3337
        %v3406 = vunpack.c.l.b16 %v3338
        %v3407 = vunpack.c.l.b16 %v3339
        %v3408 = vunpack.c.l.b16 %v3340
        %v3409 = vunpack.c.l.b16 %v3341
        %v3410 = vunpack.c.l.b16 %v3342
        %v3411 = vunpack.c.l.b16 %v3343
        %v3412 = vunpack.c.l.b16 %v3344
        %v3413 = vunpack.c.l.b16 %v3345
        %v3414 = vunpack.c.l.b16 %v3346
        %v3415 = vunpack.c.l.b16 %v3347
        %v3416 = vpack.c.b16 %v3385, %v3384
        %v3417 = vpack.c.b16 %v3387, %v3386
        %v3418 = vpack.c.b16 %v3389, %v3388
        %v3419 = vpack.c.b16 %v3391, %v3390
        %v3420 = vpack.c.b16 %v3393, %v3392
        %v3421 = vpack.c.b16 %v3395, %v3394
        %v3422 = vpack.c.b16 %v3397, %v3396
        %v3423 = vpack.c.b16 %v3399, %v3398
        %v3424 = vpack.c.b16 %v3401, %v3400
        %v3425 = vpack.c.b16 %v3403, %v3402
        %v3426 = vpack.c.b16 %v3405, %v3404
        %v3427 = vpack.c.b16 %v3407, %v3406
        %v3428 = vpack.c.b16 %v3409, %v3408
        %v3429 = vpack.c.b16 %v3411, %v3410
        %v3430 = vpack.c.b16 %v3413, %v3412
        %v3431 = vpack.c.b16 %v3415, %v3414
        %3448 = vmatpush.bf16.msra.mxu0 %v3423
        %3449 = vmatpush.bf16.msra.mxu0 %v3422
        %3450 = vmatpush.bf16.msra.mxu0 %v3421
        %3451 = vmatpush.bf16.msra.mxu0 %v3420
        %3452 = vmatpush.bf16.msra.mxu0 %v3419
        %3453 = vmatpush.bf16.msra.mxu0 %v3418
        %3454 = vmatpush.bf16.msra.mxu0 %v3417
        %3455 = vmatpush.bf16.msra.mxu0 %v3416
        %3456 = vmatmul.bf16.gmra.mxu0 %v3308
        %v3457 = vpop.f32.mrf.mxu0
        %v3458 = vadd.f32 %v3350, %v3457
        %v3459 = vpop.f32.mrf.mxu0
        %v3460 = vadd.f32 %v3350, %v3459
        %3461 = vmatmul.bf16.gmra.mxu0 %v3310
        %v3462 = vpop.f32.mrf.mxu0
        %v3463 = vadd.f32 %v3350, %v3462
        %v3464 = vpop.f32.mrf.mxu0
        %v3465 = vadd.f32 %v3350, %v3464
        %3466 = vmatmul.bf16.gmra.mxu0 %v3312
        %v3467 = vpop.f32.mrf.mxu0
        %v3468 = vadd.f32 %v3350, %v3467
        %v3469 = vpop.f32.mrf.mxu0
        %v3470 = vadd.f32 %v3350, %v3469
        %3471 = vmatmul.bf16.gmra.mxu0 %v3314
        %v3472 = vpop.f32.mrf.mxu0
        %v3473 = vadd.f32 %v3350, %v3472
        %v3474 = vpop.f32.mrf.mxu0
        %v3475 = vadd.f32 %v3350, %v3474
        %3476 = vdwg.mxu0
        %3477 = vmatpush.bf16.msra.mxu0 %v3431
        %3478 = vmatpush.bf16.msra.mxu0 %v3430
        %3479 = vmatpush.bf16.msra.mxu0 %v3429
        %3480 = vmatpush.bf16.msra.mxu0 %v3428
        %3481 = vmatpush.bf16.msra.mxu0 %v3427
        %3482 = vmatpush.bf16.msra.mxu0 %v3426
        %3483 = vmatpush.bf16.msra.mxu0 %v3425
        %3484 = vmatpush.bf16.msra.mxu0 %v3424
        %3485 = vmatmul.bf16.gmra.mxu0 %v3309
        %v3486 = vpop.f32.mrf.mxu0
        %v3487 = vadd.f32 %v3458, %v3486
        %v3488 = vpop.f32.mrf.mxu0
        %v3489 = vadd.f32 %v3460, %v3488
        %3490 = vmatmul.bf16.gmra.mxu0 %v3311
        %v3491 = vpop.f32.mrf.mxu0
        %v3492 = vadd.f32 %v3463, %v3491
        %v3493 = vpop.f32.mrf.mxu0
        %v3494 = vadd.f32 %v3465, %v3493
        %3495 = vmatmul.bf16.gmra.mxu0 %v3313
        %v3496 = vpop.f32.mrf.mxu0
        %v3497 = vadd.f32 %v3468, %v3496
        %v3498 = vpop.f32.mrf.mxu0
        %v3499 = vadd.f32 %v3470, %v3498
        %3500 = vmatmul.bf16.gmra.mxu0 %v3315
        %v3501 = vpop.f32.mrf.mxu0
        %v3502 = vadd.f32 %v3473, %v3501
        %v3503 = vpop.f32.mrf.mxu0
        %v3504 = vadd.f32 %v3475, %v3503
        %3505 = vdwg.mxu0
        %v3506 = vadd.f32 %v3487, %v1216
        %v3507 = vadd.f32 %v3489, %v1217
        %v3508 = vadd.f32 %v3492, %v1218
        %v3509 = vadd.f32 %v3494, %v1219
        %v3510 = vadd.f32 %v3497, %v1220
        %v3511 = vadd.f32 %v3499, %v1221
        %v3512 = vadd.f32 %v3502, %v1222
        %v3513 = vadd.f32 %v3504, %v1223
        %v3514 = vld [vmem:[%s11] sm:$0x1]
        %v3515 = vld [vmem:[%s12] sm:$0x1]
        %3516 = vadd.xlane.f32.xlu0 %v3506
        %v3517 = vpop.xlane.xlu0 %3516
        %3518 = vadd.xlane.f32.xlu0 %v3507
        %v3519 = vpop.xlane.xlu0 %3518
        %3520 = vadd.xlane.f32.xlu0 %v3508
        %v3521 = vpop.xlane.xlu0 %3520
        %3522 = vadd.xlane.f32.xlu0 %v3509
        %v3523 = vpop.xlane.xlu0 %3522
        %3524 = vadd.xlane.f32.xlu0 %v3510
        %v3525 = vpop.xlane.xlu0 %3524
        %3526 = vadd.xlane.f32.xlu0 %v3511
        %v3527 = vpop.xlane.xlu0 %3526
        %3528 = vadd.xlane.f32.xlu0 %v3512
        %v3529 = vpop.xlane.xlu0 %3528
        %3530 = vadd.xlane.f32.xlu0 %v3513
        %v3531 = vpop.xlane.xlu0 %3530
        %v3532 = vmul.f32 %v3517, %v2961
        %v3533 = vmul.f32 %v3519, %v2961
        %v3534 = vmul.f32 %v3521, %v2961
        %v3535 = vmul.f32 %v3523, %v2961
        %v3536 = vmul.f32 %v3525, %v2961
        %v3537 = vmul.f32 %v3527, %v2961
        %v3538 = vmul.f32 %v3529, %v2961
        %v3539 = vmul.f32 %v3531, %v2961
        %v3540 = vsub.f32 %v3506, %v3532
        %v3541 = vsub.f32 %v3507, %v3533
        %v3542 = vsub.f32 %v3508, %v3534
        %v3543 = vsub.f32 %v3509, %v3535
        %v3544 = vsub.f32 %v3510, %v3536
        %v3545 = vsub.f32 %v3511, %v3537
        %v3546 = vsub.f32 %v3512, %v3538
        %v3547 = vsub.f32 %v3513, %v3539
        %v3548 = vmul.f32 %v3540, %v3540
        %v3549 = vmul.f32 %v3541, %v3541
        %v3550 = vmul.f32 %v3542, %v3542
        %v3551 = vmul.f32 %v3543, %v3543
        %v3552 = vmul.f32 %v3544, %v3544
        %v3553 = vmul.f32 %v3545, %v3545
        %v3554 = vmul.f32 %v3546, %v3546
        %v3555 = vmul.f32 %v3547, %v3547
        %3556 = vadd.xlane.f32.xlu0 %v3548
        %v3557 = vpop.xlane.xlu0 %3556
        %3558 = vadd.xlane.f32.xlu0 %v3549
        %v3559 = vpop.xlane.xlu0 %3558
        %3560 = vadd.xlane.f32.xlu0 %v3550
        %v3561 = vpop.xlane.xlu0 %3560
        %3562 = vadd.xlane.f32.xlu0 %v3551
        %v3563 = vpop.xlane.xlu0 %3562
        %3564 = vadd.xlane.f32.xlu0 %v3552
        %v3565 = vpop.xlane.xlu0 %3564
        %3566 = vadd.xlane.f32.xlu0 %v3553
        %v3567 = vpop.xlane.xlu0 %3566
        %3568 = vadd.xlane.f32.xlu0 %v3554
        %v3569 = vpop.xlane.xlu0 %3568
        %3570 = vadd.xlane.f32.xlu0 %v3555
        %v3571 = vpop.xlane.xlu0 %3570
        %v3572 = vmul.f32 %v3557, %v2961
        %v3573 = vmul.f32 %v3559, %v2961
        %v3574 = vmul.f32 %v3561, %v2961
        %v3575 = vmul.f32 %v3563, %v2961
        %v3576 = vmul.f32 %v3565, %v2961
        %v3577 = vmul.f32 %v3567, %v2961
        %v3578 = vmul.f32 %v3569, %v2961
        %v3579 = vmul.f32 %v3571, %v2961
        %v3580 = vadd.f32 %v3572, 1e-05
        %v3581 = vadd.f32 %v3573, 1e-05
        %v3582 = vadd.f32 %v3574, 1e-05
        %v3583 = vadd.f32 %v3575, 1e-05
        %v3584 = vadd.f32 %v3576, 1e-05
        %v3585 = vadd.f32 %v3577, 1e-05
        %v3586 = vadd.f32 %v3578, 1e-05
        %v3587 = vadd.f32 %v3579, 1e-05
        %v3588 = vrsqrt.pop %v3580
        %v3589 = vmul.f32 %v3588, %v3580
        %v3590 = vmul.f32 %v3589, %v3588
        %v3591 = vmul.f32 0.5, %v3590
        %v3592 = vsub.f32 1.5, %v3591
        %v3593 = vmul.f32 %v3588, %v3592
        %vm3594 = vweird.f32 %v3580
        %vm3595 = vweird.f32 %v3588
        %vm3596 = vmor %vm3594, %vm3595
        %v3597 = vsel %vm3596, %v3588, %v3593
        %v3598 = vrsqrt.pop %v3581
        %v3599 = vmul.f32 %v3598, %v3581
        %v3600 = vmul.f32 %v3599, %v3598
        %v3601 = vmul.f32 0.5, %v3600
        %v3602 = vsub.f32 1.5, %v3601
        %v3603 = vmul.f32 %v3598, %v3602
        %vm3604 = vweird.f32 %v3581
        %vm3605 = vweird.f32 %v3598
        %vm3606 = vmor %vm3604, %vm3605
        %v3607 = vsel %vm3606, %v3598, %v3603
        %v3608 = vrsqrt.pop %v3582
        %v3609 = vmul.f32 %v3608, %v3582
        %v3610 = vmul.f32 %v3609, %v3608
        %v3611 = vmul.f32 0.5, %v3610
        %v3612 = vsub.f32 1.5, %v3611
        %v3613 = vmul.f32 %v3608, %v3612
        %vm3614 = vweird.f32 %v3582
        %vm3615 = vweird.f32 %v3608
        %vm3616 = vmor %vm3614, %vm3615
        %v3617 = vsel %vm3616, %v3608, %v3613
        %v3618 = vrsqrt.pop %v3583
        %v3619 = vmul.f32 %v3618, %v3583
        %v3620 = vmul.f32 %v3619, %v3618
        %v3621 = vmul.f32 0.5, %v3620
        %v3622 = vsub.f32 1.5, %v3621
        %v3623 = vmul.f32 %v3618, %v3622
        %vm3624 = vweird.f32 %v3583
        %vm3625 = vweird.f32 %v3618
        %vm3626 = vmor %vm3624, %vm3625
        %v3627 = vsel %vm3626, %v3618, %v3623
        %v3628 = vrsqrt.pop %v3584
        %v3629 = vmul.f32 %v3628, %v3584
        %v3630 = vmul.f32 %v3629, %v3628
        %v3631 = vmul.f32 0.5, %v3630
        %v3632 = vsub.f32 1.5, %v3631
        %v3633 = vmul.f32 %v3628, %v3632
        %vm3634 = vweird.f32 %v3584
        %vm3635 = vweird.f32 %v3628
        %vm3636 = vmor %vm3634, %vm3635
        %v3637 = vsel %vm3636, %v3628, %v3633
        %v3638 = vrsqrt.pop %v3585
        %v3639 = vmul.f32 %v3638, %v3585
        %v3640 = vmul.f32 %v3639, %v3638
        %v3641 = vmul.f32 0.5, %v3640
        %v3642 = vsub.f32 1.5, %v3641
        %v3643 = vmul.f32 %v3638, %v3642
        %vm3644 = vweird.f32 %v3585
        %vm3645 = vweird.f32 %v3638
        %vm3646 = vmor %vm3644, %vm3645
        %v3647 = vsel %vm3646, %v3638, %v3643
        %v3648 = vrsqrt.pop %v3586
        %v3649 = vmul.f32 %v3648, %v3586
        %v3650 = vmul.f32 %v3649, %v3648
        %v3651 = vmul.f32 0.5, %v3650
        %v3652 = vsub.f32 1.5, %v3651
        %v3653 = vmul.f32 %v3648, %v3652
        %vm3654 = vweird.f32 %v3586
        %vm3655 = vweird.f32 %v3648
        %vm3656 = vmor %vm3654, %vm3655
        %v3657 = vsel %vm3656, %v3648, %v3653
        %v3658 = vrsqrt.pop %v3587
        %v3659 = vmul.f32 %v3658, %v3587
        %v3660 = vmul.f32 %v3659, %v3658
        %v3661 = vmul.f32 0.5, %v3660
        %v3662 = vsub.f32 1.5, %v3661
        %v3663 = vmul.f32 %v3658, %v3662
        %vm3664 = vweird.f32 %v3587
        %vm3665 = vweird.f32 %v3658
        %vm3666 = vmor %vm3664, %vm3665
        %v3667 = vsel %vm3666, %v3658, %v3663
        %v3668 = vmul.f32 %v3540, %v3597
        %v3669 = vmul.f32 %v3541, %v3607
        %v3670 = vmul.f32 %v3542, %v3617
        %v3671 = vmul.f32 %v3543, %v3627
        %v3672 = vmul.f32 %v3544, %v3637
        %v3673 = vmul.f32 %v3545, %v3647
        %v3674 = vmul.f32 %v3546, %v3657
        %v3675 = vmul.f32 %v3547, %v3667
        %v3677 = vperm.slane %v3514, 0
        %v3679 = vmul.f32 %v3668, %v3677
        %v3680 = vmul.f32 %v3669, %v3677
        %v3681 = vmul.f32 %v3670, %v3677
        %v3682 = vmul.f32 %v3671, %v3677
        %v3683 = vmul.f32 %v3672, %v3677
        %v3684 = vmul.f32 %v3673, %v3677
        %v3685 = vmul.f32 %v3674, %v3677
        %v3686 = vmul.f32 %v3675, %v3677
        %v3688 = vperm.slane %v3515, 0
        %v3690 = vadd.f32 %v3679, %v3688
        %v3691 = vadd.f32 %v3680, %v3688
        %v3692 = vadd.f32 %v3681, %v3688
        %v3693 = vadd.f32 %v3682, %v3688
        %v3694 = vadd.f32 %v3683, %v3688
        %v3695 = vadd.f32 %v3684, %v3688
        %v3696 = vadd.f32 %v3685, %v3688
        %v3697 = vadd.f32 %v3686, %v3688
        %3698 = vst [vmem:[%s557] sm:$0xff] %v3690
        %3699 = vst [vmem:[%s557 + $0x8] sm:$0xff] %v3691
        %3700 = vst [vmem:[%s557 + $0x10] sm:$0xff] %v3692
        %3701 = vst [vmem:[%s557 + $0x18] sm:$0xff] %v3693
        %3702 = vst [vmem:[%s557 + $0x20] sm:$0xff] %v3694
        %3703 = vst [vmem:[%s557 + $0x28] sm:$0xff] %v3695
        %3704 = vst [vmem:[%s557 + $0x30] sm:$0xff] %v3696
        %3705 = vst [vmem:[%s557 + $0x38] sm:$0xff] %v3697
        %s3706 = sand.u32 %s333, 1
        %s3707 = scalar_lea.sflag [#allocation6], %s3706
        %s3708 = sand.u32 %s333, 1
        %s3709 = smul.addr %s3708, 64
        %s3710 = scalar_lea.vmem [#allocation15], %s3709
        // Predicated region
        $region101: #{tpu_custom_call.1} parent=71 // pred_check
          %p3711 = pneg %p343
        $region102: #{tpu_custom_call.1} parent=71 // pred_check_branch
          %3713 = sbr.rel (%p3711) target = $region104
        $region103: #{tpu_custom_call.1} parent=71 // pred_region
          %s3714 = smul.u32 8, %s38
          %3716 = vsyncadd %s3707, 0
          %s3717 = smul.addr %s37, 16
          %s3718 = sadd.s32 %s3714, %s3717
          %s3719 = smul.addr %s3718, 8
          %s3720 = scalar_lea.hbm %s13, %s3719
          %s3721 = sshll.u32 %s3710, 4
          %s3722 = int_to_ptr.vmem [resolvable:$true] %s3721
          %s3723 = sshll.u32 %s3720, 4
          %s3724 = int_to_ptr.hbm [resolvable:$true] %s3723
          %3729 = dma.vmem_to_hbm [thread:$0]  %s3722, 1024, %s3724, %s3707, 128, 128, 8
        $region104: #{tpu_custom_call.1} parent=71 // pred_fallthru
          _
      $region72: #{tpu_custom_call.1} parent=5 // pred_fallthru
        _
      %p3730 = scmp.le.s32.totalorder 2, %s28
      // Predicated region
      $region105: #{tpu_custom_call.1} parent=5 // pred_check
        %p3731 = pneg %p3730
      $region106: #{tpu_custom_call.1} parent=5 // pred_check_branch
        %3733 = sbr.rel (%p3731) target = $region108
      $region107: #{tpu_custom_call.1} parent=5 // pred_region
        %s3734 = ssub.s32 %s28, 2
        // Predicated region
        $region109: #{tpu_custom_call.1} parent=107 // pred_check
          %p3735 = pneg %p349
        $region110: #{tpu_custom_call.1} parent=107 // pred_check_branch
          %3737 = sbr.rel (%p3735) target = $region112
        $region111: #{tpu_custom_call.1} parent=107 // pred_region
          %s3738 = sand.u32 %s334, 1
          %s3739 = scalar_lea.sflag [#allocation6], %s3738
          %s3740 = sand.u32 %s334, 1
          %s3741 = smul.addr %s3740, 64
          %s3742 = scalar_lea.vmem [#allocation15], %s3741
          %3744 = dma.done %s3739, 1024
        $region112: #{tpu_custom_call.1} parent=107 // pred_fallthru
          _
      $region108: #{tpu_custom_call.1} parent=5 // pred_fallthru
        _
    $region6: #{tpu_custom_call.1} parent=1 // loop_footer
      %s32 = sadd.s32 1, %s28
    $region7: #{tpu_custom_call.1} parent=1 // loop_footer_branch
      %27 = sbr.rel target = $region3
    $region8: #{tpu_custom_call.1} parent=1 // loop_exit
      _
    %3745 = vsyncpa [#allocation5], 1
    %s3746 = scalar_lea.sflag [#allocation5], 1
    %3747 = vsyncpa %s3746, 1
    %3748 = vsyncpa [#allocation8], 1
    %3749 = vsyncpa [#allocation11], 1
    %3750 = vsyncpa [#allocation14], 1
    %3751 = vsyncpa [#allocation6], 1
    %s3752 = scalar_lea.sflag [#allocation6], 1
    %3753 = vsyncpa %s3752, 1

</llo_original>
